<compile_context>
chip_gen: v7x
topology: tpu7x:2x2x1
jax: 0.10.0
libtpu: 0.0.40
codegen_flags: <defaults>
</compile_context>

<pallas_src>
import functools

import jax
import jax.numpy as jnp
from jax import lax
from jax.experimental import pallas as pl
from jax.experimental.pallas import tpu as pltpu


# ------------------------------ kernel body ---------------------------------

def _pool_rows(a, groups, bb):
    """MaxPool2d row direction in y-major/batch-minor layout.

    `a` has rows indexed y*bb + b.  Pooled row r*bb + b = max over rows
    (2r)*bb + b and (2r+1)*bb + b, i.e. a VPU max of two adjacent, 8-aligned
    bb-row tiles, then a sublane-direction concat.  No matmuls, no masks.
    """
    parts = [
        jnp.maximum(a[(2 * r) * bb:(2 * r + 1) * bb, :],
                    a[(2 * r + 1) * bb:(2 * r + 2) * bb, :])
        for r in range(groups)
    ]
    return jnp.concatenate(parts, axis=0)


def _pool_cols_relu(rm, shift):
    """MaxPool2d column direction + ReLU.

    `shift` is a precomputed 0/1 matrix with shift[j+1, j] = 1, so
    (rm @ shift)[:, j] = rm[:, j+1].  Pooled values land on even in-channel
    columns; odd columns hold junk that the next layer's structured weights
    zero out.  relu(max(a, b)) == max(relu(a), relu(b)) so ReLU can follow.
    """
    cn = jnp.dot(rm, shift, preferred_element_type=jnp.float32)
    return jnp.maximum(jnp.maximum(rm, cn), 0.0)


def _cnn_kernel(x_ref, m1_ref, b1_ref, shift1_ref, m2_ref, b2_ref, shift2_ref,
                mfc_ref, bfc_ref, o_ref, *, bb):
    # x_ref: (1, 28*bb, 28), row index yin*bb + b (y-major, batch-minor).
    X = x_ref[0]                                               # (28*bb, 28)

    # conv1: 5 row-shifted matmuls -> (24*bb, 240), col = co*24 + x.
    a1 = jnp.dot(X[0:24 * bb, :], m1_ref[0],
                 preferred_element_type=jnp.float32) + b1_ref[...]
    for kh in range(1, 5):
        a1 = a1 + jnp.dot(X[kh * bb:(kh + 24) * bb, :], m1_ref[kh],
                          preferred_element_type=jnp.float32)

    # pool1 + relu -> (12*bb, 240); valid values on even in-channel columns.
    h1 = _pool_cols_relu(_pool_rows(a1, 12, bb), shift1_ref[...])

    # conv2: 5 row-shifted matmuls -> (8*bb, 160), col = co*8 + x.
    a2 = jnp.dot(h1[0:8 * bb, :], m2_ref[0],
                 preferred_element_type=jnp.float32) + b2_ref[...]
    for kh in range(1, 5):
        a2 = a2 + jnp.dot(h1[kh * bb:(kh + 8) * bb, :], m2_ref[kh],
                          preferred_element_type=jnp.float32)

    # pool2 + relu -> (4*bb, 160).
    p2 = _pool_cols_relu(_pool_rows(a2, 4, bb), shift2_ref[...])

    # fc: out[b] = bias + sum_y p2[y*bb + b] @ mfc[y]   (torch flatten order).
    out = jnp.dot(p2[0:bb, :], mfc_ref[0],
                  preferred_element_type=jnp.float32) + bfc_ref[...]
    for y in range(1, 4):
        out = out + jnp.dot(p2[y * bb:(y + 1) * bb, :], mfc_ref[y],
                            preferred_element_type=jnp.float32)
    o_ref[...] = out                                           # (bb, 10)


# ----------------------- structured-weight preparation ----------------------
# Wrapper-side, tiny tensors; computed once per call (constant index maps).

def _prep_conv1(w1, b1):
    """w1: (10,1,5,5) OIHW -> M1: (5, 28, 240), bias row (1, 240).

    M1[kh][xin, co*24 + xout] = w1[co, 0, kh, xin - xout]  (0 <= xin-xout < 5).
    """
    K, Wi, Wo, Co = 5, 28, 24, 10
    w1k = w1[:, 0, :, :]
    xin = jnp.arange(Wi)[:, None]
    xout = jnp.arange(Wo)[None, :]
    kw = xin - xout
    valid = (kw >= 0) & (kw < K)
    kwc = jnp.clip(kw, 0, K - 1)
    g = w1k[:, :, kwc] * valid[None, None].astype(w1.dtype)     # (Co, K, Wi, Wo)
    m1 = jnp.transpose(g, (1, 2, 0, 3)).reshape(K, Wi, Co * Wo)
    return m1, jnp.repeat(b1, Wo)[None, :]


def _prep_conv2(w2, b2):
    """w2: (20,10,5,5) -> M2: (5, 240, 160), bias row (1, 160).

    Pool1 output columns: ci*24 + 2*xp valid, odd columns junk -> zero rows.
    """
    K, Ci, Co, Wraw, Wo = 5, 10, 20, 24, 8
    xin = jnp.arange(Wraw)[:, None]
    xout = jnp.arange(Wo)[None, :]
    kw = xin // 2 - xout
    valid = ((xin % 2) == 0) & (kw >= 0) & (kw < K)
    kwc = jnp.clip(kw, 0, K - 1)
    g = w2[:, :, :, kwc] * valid[None, None, None].astype(w2.dtype)
    m2 = jnp.transpose(g, (2, 1, 3, 0, 4)).reshape(K, Ci * Wraw, Co * Wo)
    return m2, jnp.repeat(b2, Wo)[None, :]


def _prep_fc(fc_w, fc_b):
    """fc_w: (320, 10) -> Mfc: (4, 160, 10), zero rows at odd (junk) columns."""
    w4 = fc_w.reshape(20, 4, 4, 10)                             # (co, y, x, n)
    mfc = jnp.zeros((4, 20, 8, 10), fc_w.dtype)
    mfc = mfc.at[:, :, 0::2, :].set(jnp.transpose(w4, (1, 0, 2, 3)))
    return mfc.reshape(4, 160, 10), fc_b[None, :]


def _shift_matrix(width, dtype):
    """S[i, j] = 1 iff i == j + 1, so (a @ S)[:, j] = a[:, j + 1]."""
    i = jnp.arange(width)[:, None]
    j = jnp.arange(width)[None, :]
    return (i == j + 1).astype(dtype)


# --------------------------------- forward ----------------------------------

def cnn_forward(x_nchw, params, *, block_batch=8):
    """Exact equivalent of CNN.forward (PyTorch reference), one fused kernel."""
    bb = block_batch
    assert bb % 8 == 0, "block_batch must be a multiple of 8 (sublane tile)"
    B = x_nchw.shape[0]
    x2d = x_nchw.reshape(B, 28, 28).astype(jnp.float32)         # Ci == 1

    pad_b = pl.cdiv(B, bb) * bb
    if pad_b != B:
        x2d = jnp.pad(x2d, ((0, pad_b - B), (0, 0), (0, 0)))
    n_steps = pad_b // bb
    # y-major / batch-minor input slab: xg[g, yin*bb + b, :] = image (g*bb+b).
    xg = x2d.reshape(n_steps, bb, 28, 28).transpose(0, 2, 1, 3)
    xg = xg.reshape(n_steps, 28 * bb, 28)

    m1, b1row = _prep_conv1(params["conv1_w"], params["conv1_b"])
    m2, b2row = _prep_conv2(params["conv2_w"], params["conv2_b"])
    mfc, bfcrow = _prep_fc(params["fc_w"], params["fc_b"])
    s1 = _shift_matrix(240, jnp.float32)
    s2 = _shift_matrix(160, jnp.float32)

    flops_per_img = 2 * (5 * 24 * 28 * 240 + 12 * 240 * 240
                         + 5 * 8 * 240 * 160 + 4 * 160 * 160 + 4 * 160 * 10)
    weight_bytes = 4 * (5 * 28 * 240 + 240 + 240 * 240 + 5 * 240 * 160 + 160
                        + 160 * 160 + 4 * 160 * 10 + 10)
    cost = pl.CostEstimate(
        flops=flops_per_img * pad_b,
        transcendentals=0,
        bytes_accessed=pad_b * (28 * 28 + 10) * 4 + weight_bytes)

    out = pl.pallas_call(
        functools.partial(_cnn_kernel, bb=bb),
        out_shape=jax.ShapeDtypeStruct((pad_b, 10), jnp.float32),
        grid=(n_steps,),
        in_specs=[
            pl.BlockSpec((1, 28 * bb, 28), lambda i: (i, 0, 0)),    # images
            pl.BlockSpec((5, 28, 240), lambda i: (0, 0, 0)),        # conv1 W
            pl.BlockSpec((1, 240), lambda i: (0, 0)),               # conv1 bias
            pl.BlockSpec((240, 240), lambda i: (0, 0)),             # pool1 shift
            pl.BlockSpec((5, 240, 160), lambda i: (0, 0, 0)),       # conv2 W
            pl.BlockSpec((1, 160), lambda i: (0, 0)),               # conv2 bias
            pl.BlockSpec((160, 160), lambda i: (0, 0)),             # pool2 shift
            pl.BlockSpec((4, 160, 10), lambda i: (0, 0, 0)),        # fc W
            pl.BlockSpec((1, 10), lambda i: (0, 0)),                # fc bias
        ],
        out_specs=pl.BlockSpec((bb, 10), lambda i: (i, 0)),
        compiler_params=pltpu.CompilerParams(
            dimension_semantics=("parallel",)),
        cost_estimate=cost,
    )(xg, m1, b1row, s1, m2, b2row, s2, mfc, bfcrow)
    return out[:B]


# --------------------------- pure-JAX reference ------------------------------

def ref_forward(x, params):
    def conv(x, w, b):
        y = lax.conv_general_dilated(
            x, w, (1, 1), "VALID",
            dimension_numbers=("NCHW", "OIHW", "NCHW"))
        return y + b[None, :, None, None]

    def pool(x):
        return lax.reduce_window(
            x, -jnp.inf, lax.max, (1, 1, 2, 2), (1, 1, 2, 2), "VALID")

    h = jax.nn.relu(pool(conv(x, params["conv1_w"], params["conv1_b"])))
    h = jax.nn.relu(pool(conv(h, params["conv2_w"], params["conv2_b"])))
    h = h.reshape(x.shape[0], -1)
    return h @ params["fc_w"] + params["fc_b"]


# ----------------------------------- main ------------------------------------

if __name__ == "__main__":
    key = jax.random.PRNGKey(0)
    k_x, k1, k2, k3, k4, k5, k6 = jax.random.split(key, 7)

    B = 16  # 2 grid steps at block_batch=8 (even, >=2 -> both TCs on v7x)
    # 28x28 single-channel input (MNIST); required so the flatten gives 320.
    x = jax.random.normal(k_x, (B, 1, 28, 28), dtype=jnp.float32)

    params = {
        "conv1_w": 0.1 * jax.random.normal(k1, (10, 1, 5, 5), dtype=jnp.float32),
        "conv1_b": 0.1 * jax.random.normal(k2, (10,), dtype=jnp.float32),
        "conv2_w": 0.1 * jax.random.normal(k3, (20, 10, 5, 5), dtype=jnp.float32),
        "conv2_b": 0.1 * jax.random.normal(k4, (20,), dtype=jnp.float32),
        "fc_w":    0.1 * jax.random.normal(k5, (320, 10), dtype=jnp.float32),
        "fc_b":    0.1 * jax.random.normal(k6, (10,), dtype=jnp.float32),
    }

    out = jax.block_until_ready(jax.jit(cnn_forward)(x, params))
    ref = jax.block_until_ready(ref_forward(x, params))

    assert out.shape == (B, 10), out.shape
    err = jnp.max(jnp.abs(out - ref))
    assert jnp.allclose(out, ref, atol=1e-4, rtol=1e-4), f"max abs err {err}"

    print("KERNEL_OK")
</pallas_src>

<mosaic_0001>
module attributes {stable_mosaic.version = 11 : i64} {
  func.func @_cnn_kernel(%arg0: i32, %arg1: memref<1x224x28xf32, #tpu.memory_space<vmem>>, %arg2: memref<5x28x240xf32, #tpu.memory_space<vmem>>, %arg3: memref<1x240xf32, #tpu.memory_space<vmem>>, %arg4: memref<240x240xf32, #tpu.memory_space<vmem>>, %arg5: memref<5x240x160xf32, #tpu.memory_space<vmem>>, %arg6: memref<1x160xf32, #tpu.memory_space<vmem>>, %arg7: memref<160x160xf32, #tpu.memory_space<vmem>>, %arg8: memref<4x160x10xf32, #tpu.memory_space<vmem>>, %arg9: memref<1x10xf32, #tpu.memory_space<vmem>>, %arg10: memref<8x10xf32, #tpu.memory_space<vmem>>) attributes {dimension_semantics = [#tpu.dimension_semantics<parallel>], iteration_bounds = array<i64: 2>, scalar_prefetch = 0 : i64, scratch_operands = 0 : i64, tpu.core_type = #tpu.core_type<tc>, window_params = [{transform_indices = @transform_0, window_bounds = array<i64: 1, 224, 28>}, {pipeline_mode = #tpu.pipeline_mode<synchronous>, transform_indices = @transform_1, window_bounds = array<i64: 5, 28, 240>}, {pipeline_mode = #tpu.pipeline_mode<synchronous>, transform_indices = @transform_2, window_bounds = array<i64: 1, 240>}, {pipeline_mode = #tpu.pipeline_mode<synchronous>, transform_indices = @transform_3, window_bounds = array<i64: 240, 240>}, {pipeline_mode = #tpu.pipeline_mode<synchronous>, transform_indices = @transform_4, window_bounds = array<i64: 5, 240, 160>}, {pipeline_mode = #tpu.pipeline_mode<synchronous>, transform_indices = @transform_5, window_bounds = array<i64: 1, 160>}, {pipeline_mode = #tpu.pipeline_mode<synchronous>, transform_indices = @transform_6, window_bounds = array<i64: 160, 160>}, {pipeline_mode = #tpu.pipeline_mode<synchronous>, transform_indices = @transform_7, window_bounds = array<i64: 4, 160, 10>}, {pipeline_mode = #tpu.pipeline_mode<synchronous>, transform_indices = @transform_8, window_bounds = array<i64: 1, 10>}, {transform_indices = @transform_9, window_bounds = array<i64: 8, 10>}]} {
    %c0 = arith.constant 0 : index
    %c0_0 = arith.constant 0 : index
    %c0_1 = arith.constant 0 : index
    %0 = vector.load %arg1[%c0, %c0_0, %c0_1] : memref<1x224x28xf32, #tpu.memory_space<vmem>>, vector<1x224x28xf32>
    %1 = vector.shape_cast %0 : vector<1x224x28xf32> to vector<224x28xf32>
    %2 = vector.extract_strided_slice %1 {offsets = [0, 0], sizes = [192, 28], strides = [1, 1]} : vector<224x28xf32> to vector<192x28xf32>
    %c0_2 = arith.constant 0 : index
    %c0_3 = arith.constant 0 : index
    %c0_4 = arith.constant 0 : index
    %3 = vector.load %arg2[%c0_2, %c0_3, %c0_4] : memref<5x28x240xf32, #tpu.memory_space<vmem>>, vector<1x28x240xf32>
    %4 = vector.shape_cast %3 : vector<1x28x240xf32> to vector<28x240xf32>
    %cst = arith.constant dense<0.000000e+00> : vector<192x240xf32>
    %5 = tpu.matmul %2, %4, %cst {dimension_numbers = #tpu.dot_dimension_numbers<[1], [0], [0], [1], [0, 0, 1, 1], [], []>} : vector<192x28xf32>, vector<28x240xf32>, vector<192x240xf32> -> vector<192x240xf32>
    %c0_5 = arith.constant 0 : index
    %c0_6 = arith.constant 0 : index
    %6 = vector.load %arg3[%c0_5, %c0_6] : memref<1x240xf32, #tpu.memory_space<vmem>>, vector<1x240xf32>
    %7 = vector.broadcast %6 : vector<1x240xf32> to vector<192x240xf32>
    %8 = arith.addf %5, %7 : vector<192x240xf32>
    %9 = vector.extract_strided_slice %1 {offsets = [8, 0], sizes = [192, 28], strides = [1, 1]} : vector<224x28xf32> to vector<192x28xf32>
    %c1 = arith.constant 1 : index
    %c0_7 = arith.constant 0 : index
    %c0_8 = arith.constant 0 : index
    %10 = vector.load %arg2[%c1, %c0_7, %c0_8] : memref<5x28x240xf32, #tpu.memory_space<vmem>>, vector<1x28x240xf32>
    %11 = vector.shape_cast %10 : vector<1x28x240xf32> to vector<28x240xf32>
    %cst_9 = arith.constant dense<0.000000e+00> : vector<192x240xf32>
    %12 = tpu.matmul %9, %11, %cst_9 {dimension_numbers = #tpu.dot_dimension_numbers<[1], [0], [0], [1], [0, 0, 1, 1], [], []>} : vector<192x28xf32>, vector<28x240xf32>, vector<192x240xf32> -> vector<192x240xf32>
    %13 = arith.addf %8, %12 : vector<192x240xf32>
    %14 = vector.extract_strided_slice %1 {offsets = [16, 0], sizes = [192, 28], strides = [1, 1]} : vector<224x28xf32> to vector<192x28xf32>
    %c2 = arith.constant 2 : index
    %c0_10 = arith.constant 0 : index
    %c0_11 = arith.constant 0 : index
    %15 = vector.load %arg2[%c2, %c0_10, %c0_11] : memref<5x28x240xf32, #tpu.memory_space<vmem>>, vector<1x28x240xf32>
    %16 = vector.shape_cast %15 : vector<1x28x240xf32> to vector<28x240xf32>
    %cst_12 = arith.constant dense<0.000000e+00> : vector<192x240xf32>
    %17 = tpu.matmul %14, %16, %cst_12 {dimension_numbers = #tpu.dot_dimension_numbers<[1], [0], [0], [1], [0, 0, 1, 1], [], []>} : vector<192x28xf32>, vector<28x240xf32>, vector<192x240xf32> -> vector<192x240xf32>
    %18 = arith.addf %13, %17 : vector<192x240xf32>
    %19 = vector.extract_strided_slice %1 {offsets = [24, 0], sizes = [192, 28], strides = [1, 1]} : vector<224x28xf32> to vector<192x28xf32>
    %c3 = arith.constant 3 : index
    %c0_13 = arith.constant 0 : index
    %c0_14 = arith.constant 0 : index
    %20 = vector.load %arg2[%c3, %c0_13, %c0_14] : memref<5x28x240xf32, #tpu.memory_space<vmem>>, vector<1x28x240xf32>
    %21 = vector.shape_cast %20 : vector<1x28x240xf32> to vector<28x240xf32>
    %cst_15 = arith.constant dense<0.000000e+00> : vector<192x240xf32>
    %22 = tpu.matmul %19, %21, %cst_15 {dimension_numbers = #tpu.dot_dimension_numbers<[1], [0], [0], [1], [0, 0, 1, 1], [], []>} : vector<192x28xf32>, vector<28x240xf32>, vector<192x240xf32> -> vector<192x240xf32>
    %23 = arith.addf %18, %22 : vector<192x240xf32>
    %24 = vector.extract_strided_slice %1 {offsets = [32, 0], sizes = [192, 28], strides = [1, 1]} : vector<224x28xf32> to vector<192x28xf32>
    %c4 = arith.constant 4 : index
    %c0_16 = arith.constant 0 : index
    %c0_17 = arith.constant 0 : index
    %25 = vector.load %arg2[%c4, %c0_16, %c0_17] : memref<5x28x240xf32, #tpu.memory_space<vmem>>, vector<1x28x240xf32>
    %26 = vector.shape_cast %25 : vector<1x28x240xf32> to vector<28x240xf32>
    %cst_18 = arith.constant dense<0.000000e+00> : vector<192x240xf32>
    %27 = tpu.matmul %24, %26, %cst_18 {dimension_numbers = #tpu.dot_dimension_numbers<[1], [0], [0], [1], [0, 0, 1, 1], [], []>} : vector<192x28xf32>, vector<28x240xf32>, vector<192x240xf32> -> vector<192x240xf32>
    %28 = arith.addf %23, %27 : vector<192x240xf32>
    %29 = vector.extract_strided_slice %28 {offsets = [0, 0], sizes = [8, 240], strides = [1, 1]} : vector<192x240xf32> to vector<8x240xf32>
    %30 = vector.extract_strided_slice %28 {offsets = [8, 0], sizes = [8, 240], strides = [1, 1]} : vector<192x240xf32> to vector<8x240xf32>
    %31 = arith.maximumf %29, %30 : vector<8x240xf32>
    %32 = vector.extract_strided_slice %28 {offsets = [16, 0], sizes = [8, 240], strides = [1, 1]} : vector<192x240xf32> to vector<8x240xf32>
    %33 = vector.extract_strided_slice %28 {offsets = [24, 0], sizes = [8, 240], strides = [1, 1]} : vector<192x240xf32> to vector<8x240xf32>
    %34 = arith.maximumf %32, %33 : vector<8x240xf32>
    %35 = vector.extract_strided_slice %28 {offsets = [32, 0], sizes = [8, 240], strides = [1, 1]} : vector<192x240xf32> to vector<8x240xf32>
    %36 = vector.extract_strided_slice %28 {offsets = [40, 0], sizes = [8, 240], strides = [1, 1]} : vector<192x240xf32> to vector<8x240xf32>
    %37 = arith.maximumf %35, %36 : vector<8x240xf32>
    %38 = vector.extract_strided_slice %28 {offsets = [48, 0], sizes = [8, 240], strides = [1, 1]} : vector<192x240xf32> to vector<8x240xf32>
    %39 = vector.extract_strided_slice %28 {offsets = [56, 0], sizes = [8, 240], strides = [1, 1]} : vector<192x240xf32> to vector<8x240xf32>
    %40 = arith.maximumf %38, %39 : vector<8x240xf32>
    %41 = vector.extract_strided_slice %28 {offsets = [64, 0], sizes = [8, 240], strides = [1, 1]} : vector<192x240xf32> to vector<8x240xf32>
    %42 = vector.extract_strided_slice %28 {offsets = [72, 0], sizes = [8, 240], strides = [1, 1]} : vector<192x240xf32> to vector<8x240xf32>
    %43 = arith.maximumf %41, %42 : vector<8x240xf32>
    %44 = vector.extract_strided_slice %28 {offsets = [80, 0], sizes = [8, 240], strides = [1, 1]} : vector<192x240xf32> to vector<8x240xf32>
    %45 = vector.extract_strided_slice %28 {offsets = [88, 0], sizes = [8, 240], strides = [1, 1]} : vector<192x240xf32> to vector<8x240xf32>
    %46 = arith.maximumf %44, %45 : vector<8x240xf32>
    %47 = vector.extract_strided_slice %28 {offsets = [96, 0], sizes = [8, 240], strides = [1, 1]} : vector<192x240xf32> to vector<8x240xf32>
    %48 = vector.extract_strided_slice %28 {offsets = [104, 0], sizes = [8, 240], strides = [1, 1]} : vector<192x240xf32> to vector<8x240xf32>
    %49 = arith.maximumf %47, %48 : vector<8x240xf32>
    %50 = vector.extract_strided_slice %28 {offsets = [112, 0], sizes = [8, 240], strides = [1, 1]} : vector<192x240xf32> to vector<8x240xf32>
    %51 = vector.extract_strided_slice %28 {offsets = [120, 0], sizes = [8, 240], strides = [1, 1]} : vector<192x240xf32> to vector<8x240xf32>
    %52 = arith.maximumf %50, %51 : vector<8x240xf32>
    %53 = vector.extract_strided_slice %28 {offsets = [128, 0], sizes = [8, 240], strides = [1, 1]} : vector<192x240xf32> to vector<8x240xf32>
    %54 = vector.extract_strided_slice %28 {offsets = [136, 0], sizes = [8, 240], strides = [1, 1]} : vector<192x240xf32> to vector<8x240xf32>
    %55 = arith.maximumf %53, %54 : vector<8x240xf32>
    %56 = vector.extract_strided_slice %28 {offsets = [144, 0], sizes = [8, 240], strides = [1, 1]} : vector<192x240xf32> to vector<8x240xf32>
    %57 = vector.extract_strided_slice %28 {offsets = [152, 0], sizes = [8, 240], strides = [1, 1]} : vector<192x240xf32> to vector<8x240xf32>
    %58 = arith.maximumf %56, %57 : vector<8x240xf32>
    %59 = vector.extract_strided_slice %28 {offsets = [160, 0], sizes = [8, 240], strides = [1, 1]} : vector<192x240xf32> to vector<8x240xf32>
    %60 = vector.extract_strided_slice %28 {offsets = [168, 0], sizes = [8, 240], strides = [1, 1]} : vector<192x240xf32> to vector<8x240xf32>
    %61 = arith.maximumf %59, %60 : vector<8x240xf32>
    %62 = vector.extract_strided_slice %28 {offsets = [176, 0], sizes = [8, 240], strides = [1, 1]} : vector<192x240xf32> to vector<8x240xf32>
    %63 = vector.extract_strided_slice %28 {offsets = [184, 0], sizes = [8, 240], strides = [1, 1]} : vector<192x240xf32> to vector<8x240xf32>
    %64 = arith.maximumf %62, %63 : vector<8x240xf32>
    %65 = tpu.concatenate %31, %34, %37, %40, %43, %46, %49, %52, %55, %58, %61, %64 in 0 : vector<8x240xf32>, vector<8x240xf32>, vector<8x240xf32>, vector<8x240xf32>, vector<8x240xf32>, vector<8x240xf32>, vector<8x240xf32>, vector<8x240xf32>, vector<8x240xf32>, vector<8x240xf32>, vector<8x240xf32>, vector<8x240xf32> -> vector<96x240xf32>
    %c0_19 = arith.constant 0 : index
    %c0_20 = arith.constant 0 : index
    %66 = vector.load %arg4[%c0_19, %c0_20] : memref<240x240xf32, #tpu.memory_space<vmem>>, vector<240x240xf32>
    %cst_21 = arith.constant dense<0.000000e+00> : vector<96x240xf32>
    %67 = tpu.matmul %65, %66, %cst_21 {dimension_numbers = #tpu.dot_dimension_numbers<[1], [0], [0], [1], [0, 0, 1, 1], [], []>} : vector<96x240xf32>, vector<240x240xf32>, vector<96x240xf32> -> vector<96x240xf32>
    %68 = arith.maximumf %65, %67 : vector<96x240xf32>
    %cst_22 = arith.constant 0.000000e+00 : f32
    %69 = vector.broadcast %cst_22 : f32 to vector<96x240xf32>
    %70 = arith.maximumf %68, %69 : vector<96x240xf32>
    %71 = vector.extract_strided_slice %70 {offsets = [0, 0], sizes = [64, 240], strides = [1, 1]} : vector<96x240xf32> to vector<64x240xf32>
    %c0_23 = arith.constant 0 : index
    %c0_24 = arith.constant 0 : index
    %c0_25 = arith.constant 0 : index
    %72 = vector.load %arg5[%c0_23, %c0_24, %c0_25] : memref<5x240x160xf32, #tpu.memory_space<vmem>>, vector<1x240x160xf32>
    %73 = vector.shape_cast %72 : vector<1x240x160xf32> to vector<240x160xf32>
    %cst_26 = arith.constant dense<0.000000e+00> : vector<64x160xf32>
    %74 = tpu.matmul %71, %73, %cst_26 {dimension_numbers = #tpu.dot_dimension_numbers<[1], [0], [0], [1], [0, 0, 1, 1], [], []>} : vector<64x240xf32>, vector<240x160xf32>, vector<64x160xf32> -> vector<64x160xf32>
    %c0_27 = arith.constant 0 : index
    %c0_28 = arith.constant 0 : index
    %75 = vector.load %arg6[%c0_27, %c0_28] : memref<1x160xf32, #tpu.memory_space<vmem>>, vector<1x160xf32>
    %76 = vector.broadcast %75 : vector<1x160xf32> to vector<64x160xf32>
    %77 = arith.addf %74, %76 : vector<64x160xf32>
    %78 = vector.extract_strided_slice %70 {offsets = [8, 0], sizes = [64, 240], strides = [1, 1]} : vector<96x240xf32> to vector<64x240xf32>
    %c1_29 = arith.constant 1 : index
    %c0_30 = arith.constant 0 : index
    %c0_31 = arith.constant 0 : index
    %79 = vector.load %arg5[%c1_29, %c0_30, %c0_31] : memref<5x240x160xf32, #tpu.memory_space<vmem>>, vector<1x240x160xf32>
    %80 = vector.shape_cast %79 : vector<1x240x160xf32> to vector<240x160xf32>
    %cst_32 = arith.constant dense<0.000000e+00> : vector<64x160xf32>
    %81 = tpu.matmul %78, %80, %cst_32 {dimension_numbers = #tpu.dot_dimension_numbers<[1], [0], [0], [1], [0, 0, 1, 1], [], []>} : vector<64x240xf32>, vector<240x160xf32>, vector<64x160xf32> -> vector<64x160xf32>
    %82 = arith.addf %77, %81 : vector<64x160xf32>
    %83 = vector.extract_strided_slice %70 {offsets = [16, 0], sizes = [64, 240], strides = [1, 1]} : vector<96x240xf32> to vector<64x240xf32>
    %c2_33 = arith.constant 2 : index
    %c0_34 = arith.constant 0 : index
    %c0_35 = arith.constant 0 : index
    %84 = vector.load %arg5[%c2_33, %c0_34, %c0_35] : memref<5x240x160xf32, #tpu.memory_space<vmem>>, vector<1x240x160xf32>
    %85 = vector.shape_cast %84 : vector<1x240x160xf32> to vector<240x160xf32>
    %cst_36 = arith.constant dense<0.000000e+00> : vector<64x160xf32>
    %86 = tpu.matmul %83, %85, %cst_36 {dimension_numbers = #tpu.dot_dimension_numbers<[1], [0], [0], [1], [0, 0, 1, 1], [], []>} : vector<64x240xf32>, vector<240x160xf32>, vector<64x160xf32> -> vector<64x160xf32>
    %87 = arith.addf %82, %86 : vector<64x160xf32>
    %88 = vector.extract_strided_slice %70 {offsets = [24, 0], sizes = [64, 240], strides = [1, 1]} : vector<96x240xf32> to vector<64x240xf32>
    %c3_37 = arith.constant 3 : index
    %c0_38 = arith.constant 0 : index
    %c0_39 = arith.constant 0 : index
    %89 = vector.load %arg5[%c3_37, %c0_38, %c0_39] : memref<5x240x160xf32, #tpu.memory_space<vmem>>, vector<1x240x160xf32>
    %90 = vector.shape_cast %89 : vector<1x240x160xf32> to vector<240x160xf32>
    %cst_40 = arith.constant dense<0.000000e+00> : vector<64x160xf32>
    %91 = tpu.matmul %88, %90, %cst_40 {dimension_numbers = #tpu.dot_dimension_numbers<[1], [0], [0], [1], [0, 0, 1, 1], [], []>} : vector<64x240xf32>, vector<240x160xf32>, vector<64x160xf32> -> vector<64x160xf32>
    %92 = arith.addf %87, %91 : vector<64x160xf32>
    %93 = vector.extract_strided_slice %70 {offsets = [32, 0], sizes = [64, 240], strides = [1, 1]} : vector<96x240xf32> to vector<64x240xf32>
    %c4_41 = arith.constant 4 : index
    %c0_42 = arith.constant 0 : index
    %c0_43 = arith.constant 0 : index
    %94 = vector.load %arg5[%c4_41, %c0_42, %c0_43] : memref<5x240x160xf32, #tpu.memory_space<vmem>>, vector<1x240x160xf32>
    %95 = vector.shape_cast %94 : vector<1x240x160xf32> to vector<240x160xf32>
    %cst_44 = arith.constant dense<0.000000e+00> : vector<64x160xf32>
    %96 = tpu.matmul %93, %95, %cst_44 {dimension_numbers = #tpu.dot_dimension_numbers<[1], [0], [0], [1], [0, 0, 1, 1], [], []>} : vector<64x240xf32>, vector<240x160xf32>, vector<64x160xf32> -> vector<64x160xf32>
    %97 = arith.addf %92, %96 : vector<64x160xf32>
    %98 = vector.extract_strided_slice %97 {offsets = [0, 0], sizes = [8, 160], strides = [1, 1]} : vector<64x160xf32> to vector<8x160xf32>
    %99 = vector.extract_strided_slice %97 {offsets = [8, 0], sizes = [8, 160], strides = [1, 1]} : vector<64x160xf32> to vector<8x160xf32>
    %100 = arith.maximumf %98, %99 : vector<8x160xf32>
    %101 = vector.extract_strided_slice %97 {offsets = [16, 0], sizes = [8, 160], strides = [1, 1]} : vector<64x160xf32> to vector<8x160xf32>
    %102 = vector.extract_strided_slice %97 {offsets = [24, 0], sizes = [8, 160], strides = [1, 1]} : vector<64x160xf32> to vector<8x160xf32>
    %103 = arith.maximumf %101, %102 : vector<8x160xf32>
    %104 = vector.extract_strided_slice %97 {offsets = [32, 0], sizes = [8, 160], strides = [1, 1]} : vector<64x160xf32> to vector<8x160xf32>
    %105 = vector.extract_strided_slice %97 {offsets = [40, 0], sizes = [8, 160], strides = [1, 1]} : vector<64x160xf32> to vector<8x160xf32>
    %106 = arith.maximumf %104, %105 : vector<8x160xf32>
    %107 = vector.extract_strided_slice %97 {offsets = [48, 0], sizes = [8, 160], strides = [1, 1]} : vector<64x160xf32> to vector<8x160xf32>
    %108 = vector.extract_strided_slice %97 {offsets = [56, 0], sizes = [8, 160], strides = [1, 1]} : vector<64x160xf32> to vector<8x160xf32>
    %109 = arith.maximumf %107, %108 : vector<8x160xf32>
    %110 = tpu.concatenate %100, %103, %106, %109 in 0 : vector<8x160xf32>, vector<8x160xf32>, vector<8x160xf32>, vector<8x160xf32> -> vector<32x160xf32>
    %c0_45 = arith.constant 0 : index
    %c0_46 = arith.constant 0 : index
    %111 = vector.load %arg7[%c0_45, %c0_46] : memref<160x160xf32, #tpu.memory_space<vmem>>, vector<160x160xf32>
    %cst_47 = arith.constant dense<0.000000e+00> : vector<32x160xf32>
    %112 = tpu.matmul %110, %111, %cst_47 {dimension_numbers = #tpu.dot_dimension_numbers<[1], [0], [0], [1], [0, 0, 1, 1], [], []>} : vector<32x160xf32>, vector<160x160xf32>, vector<32x160xf32> -> vector<32x160xf32>
    %113 = arith.maximumf %110, %112 : vector<32x160xf32>
    %cst_48 = arith.constant 0.000000e+00 : f32
    %114 = vector.broadcast %cst_48 : f32 to vector<32x160xf32>
    %115 = arith.maximumf %113, %114 : vector<32x160xf32>
    %116 = vector.extract_strided_slice %115 {offsets = [0, 0], sizes = [8, 160], strides = [1, 1]} : vector<32x160xf32> to vector<8x160xf32>
    %c0_49 = arith.constant 0 : index
    %c0_50 = arith.constant 0 : index
    %c0_51 = arith.constant 0 : index
    %117 = vector.load %arg8[%c0_49, %c0_50, %c0_51] : memref<4x160x10xf32, #tpu.memory_space<vmem>>, vector<1x160x10xf32>
    %118 = vector.shape_cast %117 : vector<1x160x10xf32> to vector<160x10xf32>
    %cst_52 = arith.constant dense<0.000000e+00> : vector<8x10xf32>
    %119 = tpu.matmul %116, %118, %cst_52 {dimension_numbers = #tpu.dot_dimension_numbers<[1], [0], [0], [1], [0, 0, 1, 1], [], []>} : vector<8x160xf32>, vector<160x10xf32>, vector<8x10xf32> -> vector<8x10xf32>
    %c0_53 = arith.constant 0 : index
    %c0_54 = arith.constant 0 : index
    %120 = vector.load %arg9[%c0_53, %c0_54] : memref<1x10xf32, #tpu.memory_space<vmem>>, vector<1x10xf32>
    %121 = vector.broadcast %120 : vector<1x10xf32> to vector<8x10xf32>
    %122 = arith.addf %119, %121 : vector<8x10xf32>
    %123 = vector.extract_strided_slice %115 {offsets = [8, 0], sizes = [8, 160], strides = [1, 1]} : vector<32x160xf32> to vector<8x160xf32>
    %c1_55 = arith.constant 1 : index
    %c0_56 = arith.constant 0 : index
    %c0_57 = arith.constant 0 : index
    %124 = vector.load %arg8[%c1_55, %c0_56, %c0_57] : memref<4x160x10xf32, #tpu.memory_space<vmem>>, vector<1x160x10xf32>
    %125 = vector.shape_cast %124 : vector<1x160x10xf32> to vector<160x10xf32>
    %cst_58 = arith.constant dense<0.000000e+00> : vector<8x10xf32>
    %126 = tpu.matmul %123, %125, %cst_58 {dimension_numbers = #tpu.dot_dimension_numbers<[1], [0], [0], [1], [0, 0, 1, 1], [], []>} : vector<8x160xf32>, vector<160x10xf32>, vector<8x10xf32> -> vector<8x10xf32>
    %127 = arith.addf %122, %126 : vector<8x10xf32>
    %128 = vector.extract_strided_slice %115 {offsets = [16, 0], sizes = [8, 160], strides = [1, 1]} : vector<32x160xf32> to vector<8x160xf32>
    %c2_59 = arith.constant 2 : index
    %c0_60 = arith.constant 0 : index
    %c0_61 = arith.constant 0 : index
    %129 = vector.load %arg8[%c2_59, %c0_60, %c0_61] : memref<4x160x10xf32, #tpu.memory_space<vmem>>, vector<1x160x10xf32>
    %130 = vector.shape_cast %129 : vector<1x160x10xf32> to vector<160x10xf32>
    %cst_62 = arith.constant dense<0.000000e+00> : vector<8x10xf32>
    %131 = tpu.matmul %128, %130, %cst_62 {dimension_numbers = #tpu.dot_dimension_numbers<[1], [0], [0], [1], [0, 0, 1, 1], [], []>} : vector<8x160xf32>, vector<160x10xf32>, vector<8x10xf32> -> vector<8x10xf32>
    %132 = arith.addf %127, %131 : vector<8x10xf32>
    %133 = vector.extract_strided_slice %115 {offsets = [24, 0], sizes = [8, 160], strides = [1, 1]} : vector<32x160xf32> to vector<8x160xf32>
    %c3_63 = arith.constant 3 : index
    %c0_64 = arith.constant 0 : index
    %c0_65 = arith.constant 0 : index
    %134 = vector.load %arg8[%c3_63, %c0_64, %c0_65] : memref<4x160x10xf32, #tpu.memory_space<vmem>>, vector<1x160x10xf32>
    %135 = vector.shape_cast %134 : vector<1x160x10xf32> to vector<160x10xf32>
    %cst_66 = arith.constant dense<0.000000e+00> : vector<8x10xf32>
    %136 = tpu.matmul %133, %135, %cst_66 {dimension_numbers = #tpu.dot_dimension_numbers<[1], [0], [0], [1], [0, 0, 1, 1], [], []>} : vector<8x160xf32>, vector<160x10xf32>, vector<8x10xf32> -> vector<8x10xf32>
    %137 = arith.addf %132, %136 : vector<8x10xf32>
    %c0_67 = arith.constant 0 : index
    %c0_68 = arith.constant 0 : index
    %138 = vector.load %arg10[%c0_67, %c0_68] : memref<8x10xf32, #tpu.memory_space<vmem>>, vector<8x10xf32>
    tpu.vector_store %arg10[%c0_67, %c0_68], %137 {strides = array<i32>} : memref<8x10xf32, #tpu.memory_space<vmem>>, vector<8x10xf32>,
    return
  }
  func.func @transform_0(%arg0: i32) -> (i32, i32, i32) {
    %c0_i32 = arith.constant 0 : i32
    %c0_i32_0 = arith.constant 0 : i32
    %c0_i32_1 = arith.constant 0 : i32
    return %arg0, %c0_i32, %c0_i32_0 : i32, i32, i32
  }
  func.func @transform_1(%arg0: i32) -> (i32, i32, i32) {
    %c0_i32 = arith.constant 0 : i32
    %c0_i32_0 = arith.constant 0 : i32
    %c0_i32_1 = arith.constant 0 : i32
    %c0_i32_2 = arith.constant 0 : i32
    return %c0_i32, %c0_i32_0, %c0_i32_1 : i32, i32, i32
  }
  func.func @transform_2(%arg0: i32) -> (i32, i32) {
    %c0_i32 = arith.constant 0 : i32
    %c0_i32_0 = arith.constant 0 : i32
    %c0_i32_1 = arith.constant 0 : i32
    return %c0_i32, %c0_i32_0 : i32, i32
  }
  func.func @transform_3(%arg0: i32) -> (i32, i32) {
    %c0_i32 = arith.constant 0 : i32
    %c0_i32_0 = arith.constant 0 : i32
    %c0_i32_1 = arith.constant 0 : i32
    return %c0_i32, %c0_i32_0 : i32, i32
  }
  func.func @transform_4(%arg0: i32) -> (i32, i32, i32) {
    %c0_i32 = arith.constant 0 : i32
    %c0_i32_0 = arith.constant 0 : i32
    %c0_i32_1 = arith.constant 0 : i32
    %c0_i32_2 = arith.constant 0 : i32
    return %c0_i32, %c0_i32_0, %c0_i32_1 : i32, i32, i32
  }
  func.func @transform_5(%arg0: i32) -> (i32, i32) {
    %c0_i32 = arith.constant 0 : i32
    %c0_i32_0 = arith.constant 0 : i32
    %c0_i32_1 = arith.constant 0 : i32
    return %c0_i32, %c0_i32_0 : i32, i32
  }
  func.func @transform_6(%arg0: i32) -> (i32, i32) {
    %c0_i32 = arith.constant 0 : i32
    %c0_i32_0 = arith.constant 0 : i32
    %c0_i32_1 = arith.constant 0 : i32
    return %c0_i32, %c0_i32_0 : i32, i32
  }
  func.func @transform_7(%arg0: i32) -> (i32, i32, i32) {
    %c0_i32 = arith.constant 0 : i32
    %c0_i32_0 = arith.constant 0 : i32
    %c0_i32_1 = arith.constant 0 : i32
    %c0_i32_2 = arith.constant 0 : i32
    return %c0_i32, %c0_i32_0, %c0_i32_1 : i32, i32, i32
  }
  func.func @transform_8(%arg0: i32) -> (i32, i32) {
    %c0_i32 = arith.constant 0 : i32
    %c0_i32_0 = arith.constant 0 : i32
    %c0_i32_1 = arith.constant 0 : i32
    return %c0_i32, %c0_i32_0 : i32, i32
  }
  func.func @transform_9(%arg0: i32) -> (i32, i32) {
    %c0_i32 = arith.constant 0 : i32
    %c0_i32_0 = arith.constant 0 : i32
    return %arg0, %c0_i32 : i32, i32
  }
}

</mosaic_0001>

<llo_original>
// kernel: cnn_forward.1
$region0: #{cnn_forward.1}
  #allocation0 [shape = 'u32[]', space=smem, size = 0x4, offset = 0x4, fixed_abs, tag = 'smem constant byte address 0x4 - core index']
  #allocation1 [shape = 'u32[144,128]{1,0:T(1,128)}', space=vmem, size = 0x12000, scoped, tag = 'internal scratch']
  %s0 = inlined_call_operand.vmem [shape: f32[2,224,28], index: 0, kind: input, shape index: {}]
  %s1 = inlined_call_operand.vmem [shape: f32[5,28,240], index: 1, kind: input, shape index: {}]
  %s2 = inlined_call_operand.vmem [shape: f32[1,240], index: 2, kind: input, shape index: {}]
  %s3 = inlined_call_operand.vmem [shape: f32[240,240], index: 3, kind: input, shape index: {}]
  %s4 = inlined_call_operand.vmem [shape: f32[5,240,160], index: 4, kind: input, shape index: {}]
  %s5 = inlined_call_operand.vmem [shape: f32[1,160], index: 5, kind: input, shape index: {}]
  %s6 = inlined_call_operand.vmem [shape: f32[160,160], index: 6, kind: input, shape index: {}]
  %s7 = inlined_call_operand.vmem [shape: f32[4,160,10], index: 7, kind: input, shape index: {}]
  %s8 = inlined_call_operand.vmem [shape: f32[1,10], index: 8, kind: input, shape index: {}]
  %s9 = inlined_call_operand.hbm [shape: f32[16,10], index: 9, kind: output, shape index: {}]
  %s10 = sld [smem:[#allocation0]]
  $region69: #{cnn_forward.1} parent=0
    _
  %s12 = ssub.s32 1, %s10
  %s13 = scalar_select 0, %s12, %s10
  $region1: #{cnn_forward.1} parent=0
    #allocation2 [shape = 'u8[8192]{0}', space=vmem, size = 0x2000, scoped, tag = 'output window, operand 0']
    #allocation3 [shape = 's32[2]{0}', space=sflag, size = 0x8, scoped, tag = 'scoped memory for cnn_forward.1']
    %14 = vsyncpa [#allocation3], 0
    %s15 = scalar_lea.sflag [#allocation3], 1
    %16 = vsyncpa %s15, 0
    loop: start=0, step=1, limit=4
    $region2: #{cnn_forward.1} parent=1 // loop_pre_header
      _
    $region3: #{cnn_forward.1} parent=1 // loop_header
      %s18 = sphi 0, %s22
      %p19 = scmp.ge.s32.totalorder %s18, 4
      %s28 = sphi 0, %s30
      %s31 = sphi 0, %s28
      %s32 = sphi 0, %s31
      %s48 = sphi 0, %s32
      %s52 = sphi 0, %s52
      %s54 = sphi 0, %s52
      %s55 = sphi 0, %s54
      %s69 = sphi 0, %s55
      %s73 = sphi 0, %s73
      %s75 = sphi 0, %s73
      %s76 = sphi 0, %s75
      %s90 = sphi 0, %s76
      %s94 = sphi 0, %s94
      %s96 = sphi 0, %s94
      %s97 = sphi 0, %s96
      %s111 = sphi 0, %s97
      %s115 = sphi 0, %s115
      %s117 = sphi 0, %s115
      %s118 = sphi 0, %s117
      %s132 = sphi 0, %s118
      %s136 = sphi 0, %s136
      %s138 = sphi 0, %s136
      %s139 = sphi 0, %s138
      %s153 = sphi 0, %s139
      %s157 = sphi 0, %s157
      %s159 = sphi 0, %s157
      %s160 = sphi 0, %s159
      %s174 = sphi 0, %s160
      %s178 = sphi 0, %s178
      %s180 = sphi 0, %s178
      %s181 = sphi 0, %s180
      %s195 = sphi 0, %s181
      %s199 = sphi 0, %s199
      %s201 = sphi 0, %s199
      %s202 = sphi 0, %s201
      %s216 = sphi 0, %s202
      %s222 = sphi 0, %s224
      %s225 = sphi 0, %s222
      %s226 = sphi 0, %s225
      %s242 = sphi 0, %s226
    $region4: #{cnn_forward.1} parent=1 // loop_header_branch
      %21 = sbr.rel (%p19) target = $region8
    $region5: #{cnn_forward.1} parent=1 // loop_body
      %s23 = ssub.s32 %s18, 1
      %s24 = ssub.s32 %s18, 2
      %s25 = sadd.s32 %s18, 1
      %s26 = ssub.s32 %s18, %s25
      %p27 = scmp.eq.s32.totalorder %s26, 0
      %s29 = sadd.s32 %s28, 1
      %s30 = scalar_select %p27, %s28, %s29
      %p33 = pneg %p27
      %p34 = scmp.eq.s32.totalorder %s18, 1
      %p35 = por %p33, %p34
      %p36 = scmp.ne.s32.totalorder %s28, %s31
      %p37 = scmp.eq.s32.totalorder %s18, 0
      %p38 = por %p36, %p37
      %p39 = scmp.ne.s32.totalorder %s28, %s31
      %p40 = scmp.eq.s32.totalorder %s23, 1
      %p41 = por %p39, %p40
      %p42 = scmp.ne.s32.totalorder %s31, %s32
      %p43 = scmp.eq.s32.totalorder %s23, 0
      %p44 = por %p42, %p43
      %p45 = scmp.ne.s32.totalorder %s31, %s32
      %p46 = scmp.eq.s32.totalorder %s24, 1
      %p47 = por %p45, %p46
      %p49 = scmp.ne.s32.totalorder %s32, %s48
      %p50 = scmp.eq.s32.totalorder %s24, 0
      %p51 = por %p49, %p50
      %s53 = sadd.s32 %s52, 1
      %p56 = scmp.eq.s32.totalorder %s18, 1
      %p57 = scmp.ne.s32.totalorder %s52, %s54
      %p58 = scmp.eq.s32.totalorder %s18, 0
      %p59 = por %p57, %p58
      %p60 = scmp.ne.s32.totalorder %s52, %s54
      %p61 = scmp.eq.s32.totalorder %s23, 1
      %p62 = por %p60, %p61
      %p63 = scmp.ne.s32.totalorder %s54, %s55
      %p64 = scmp.eq.s32.totalorder %s23, 0
      %p65 = por %p63, %p64
      %p66 = scmp.ne.s32.totalorder %s54, %s55
      %p67 = scmp.eq.s32.totalorder %s24, 1
      %p68 = por %p66, %p67
      %p70 = scmp.ne.s32.totalorder %s55, %s69
      %p71 = scmp.eq.s32.totalorder %s24, 0
      %p72 = por %p70, %p71
      %s74 = sadd.s32 %s73, 1
      %p77 = scmp.eq.s32.totalorder %s18, 1
      %p78 = scmp.ne.s32.totalorder %s73, %s75
      %p79 = scmp.eq.s32.totalorder %s18, 0
      %p80 = por %p78, %p79
      %p81 = scmp.ne.s32.totalorder %s73, %s75
      %p82 = scmp.eq.s32.totalorder %s23, 1
      %p83 = por %p81, %p82
      %p84 = scmp.ne.s32.totalorder %s75, %s76
      %p85 = scmp.eq.s32.totalorder %s23, 0
      %p86 = por %p84, %p85
      %p87 = scmp.ne.s32.totalorder %s75, %s76
      %p88 = scmp.eq.s32.totalorder %s24, 1
      %p89 = por %p87, %p88
      %p91 = scmp.ne.s32.totalorder %s76, %s90
      %p92 = scmp.eq.s32.totalorder %s24, 0
      %p93 = por %p91, %p92
      %s95 = sadd.s32 %s94, 1
      %p98 = scmp.eq.s32.totalorder %s18, 1
      %p99 = scmp.ne.s32.totalorder %s94, %s96
      %p100 = scmp.eq.s32.totalorder %s18, 0
      %p101 = por %p99, %p100
      %p102 = scmp.ne.s32.totalorder %s94, %s96
      %p103 = scmp.eq.s32.totalorder %s23, 1
      %p104 = por %p102, %p103
      %p105 = scmp.ne.s32.totalorder %s96, %s97
      %p106 = scmp.eq.s32.totalorder %s23, 0
      %p107 = por %p105, %p106
      %p108 = scmp.ne.s32.totalorder %s96, %s97
      %p109 = scmp.eq.s32.totalorder %s24, 1
      %p110 = por %p108, %p109
      %p112 = scmp.ne.s32.totalorder %s97, %s111
      %p113 = scmp.eq.s32.totalorder %s24, 0
      %p114 = por %p112, %p113
      %s116 = sadd.s32 %s115, 1
      %p119 = scmp.eq.s32.totalorder %s18, 1
      %p120 = scmp.ne.s32.totalorder %s115, %s117
      %p121 = scmp.eq.s32.totalorder %s18, 0
      %p122 = por %p120, %p121
      %p123 = scmp.ne.s32.totalorder %s115, %s117
      %p124 = scmp.eq.s32.totalorder %s23, 1
      %p125 = por %p123, %p124
      %p126 = scmp.ne.s32.totalorder %s117, %s118
      %p127 = scmp.eq.s32.totalorder %s23, 0
      %p128 = por %p126, %p127
      %p129 = scmp.ne.s32.totalorder %s117, %s118
      %p130 = scmp.eq.s32.totalorder %s24, 1
      %p131 = por %p129, %p130
      %p133 = scmp.ne.s32.totalorder %s118, %s132
      %p134 = scmp.eq.s32.totalorder %s24, 0
      %p135 = por %p133, %p134
      %s137 = sadd.s32 %s136, 1
      %p140 = scmp.eq.s32.totalorder %s18, 1
      %p141 = scmp.ne.s32.totalorder %s136, %s138
      %p142 = scmp.eq.s32.totalorder %s18, 0
      %p143 = por %p141, %p142
      %p144 = scmp.ne.s32.totalorder %s136, %s138
      %p145 = scmp.eq.s32.totalorder %s23, 1
      %p146 = por %p144, %p145
      %p147 = scmp.ne.s32.totalorder %s138, %s139
      %p148 = scmp.eq.s32.totalorder %s23, 0
      %p149 = por %p147, %p148
      %p150 = scmp.ne.s32.totalorder %s138, %s139
      %p151 = scmp.eq.s32.totalorder %s24, 1
      %p152 = por %p150, %p151
      %p154 = scmp.ne.s32.totalorder %s139, %s153
      %p155 = scmp.eq.s32.totalorder %s24, 0
      %p156 = por %p154, %p155
      %s158 = sadd.s32 %s157, 1
      %p161 = scmp.eq.s32.totalorder %s18, 1
      %p162 = scmp.ne.s32.totalorder %s157, %s159
      %p163 = scmp.eq.s32.totalorder %s18, 0
      %p164 = por %p162, %p163
      %p165 = scmp.ne.s32.totalorder %s157, %s159
      %p166 = scmp.eq.s32.totalorder %s23, 1
      %p167 = por %p165, %p166
      %p168 = scmp.ne.s32.totalorder %s159, %s160
      %p169 = scmp.eq.s32.totalorder %s23, 0
      %p170 = por %p168, %p169
      %p171 = scmp.ne.s32.totalorder %s159, %s160
      %p172 = scmp.eq.s32.totalorder %s24, 1
      %p173 = por %p171, %p172
      %p175 = scmp.ne.s32.totalorder %s160, %s174
      %p176 = scmp.eq.s32.totalorder %s24, 0
      %p177 = por %p175, %p176
      %s179 = sadd.s32 %s178, 1
      %p182 = scmp.eq.s32.totalorder %s18, 1
      %p183 = scmp.ne.s32.totalorder %s178, %s180
      %p184 = scmp.eq.s32.totalorder %s18, 0
      %p185 = por %p183, %p184
      %p186 = scmp.ne.s32.totalorder %s178, %s180
      %p187 = scmp.eq.s32.totalorder %s23, 1
      %p188 = por %p186, %p187
      %p189 = scmp.ne.s32.totalorder %s180, %s181
      %p190 = scmp.eq.s32.totalorder %s23, 0
      %p191 = por %p189, %p190
      %p192 = scmp.ne.s32.totalorder %s180, %s181
      %p193 = scmp.eq.s32.totalorder %s24, 1
      %p194 = por %p192, %p193
      %p196 = scmp.ne.s32.totalorder %s181, %s195
      %p197 = scmp.eq.s32.totalorder %s24, 0
      %p198 = por %p196, %p197
      %s200 = sadd.s32 %s199, 1
      %p203 = scmp.eq.s32.totalorder %s18, 1
      %p204 = scmp.ne.s32.totalorder %s199, %s201
      %p205 = scmp.eq.s32.totalorder %s18, 0
      %p206 = por %p204, %p205
      %p207 = scmp.ne.s32.totalorder %s199, %s201
      %p208 = scmp.eq.s32.totalorder %s23, 1
      %p209 = por %p207, %p208
      %p210 = scmp.ne.s32.totalorder %s201, %s202
      %p211 = scmp.eq.s32.totalorder %s23, 0
      %p212 = por %p210, %p211
      %p213 = scmp.ne.s32.totalorder %s201, %s202
      %p214 = scmp.eq.s32.totalorder %s24, 1
      %p215 = por %p213, %p214
      %p217 = scmp.ne.s32.totalorder %s202, %s216
      %p218 = scmp.eq.s32.totalorder %s24, 0
      %p219 = por %p217, %p218
      %s220 = ssub.s32 %s18, %s25
      %p221 = scmp.eq.s32.totalorder %s220, 0
      %s223 = sadd.s32 %s222, 1
      %s224 = scalar_select %p221, %s222, %s223
      %p227 = pneg %p221
      %p228 = scmp.eq.s32.totalorder %s18, 1
      %p229 = por %p227, %p228
      %p230 = scmp.ne.s32.totalorder %s222, %s225
      %p231 = scmp.eq.s32.totalorder %s18, 0
      %p232 = por %p230, %p231
      %p233 = scmp.ne.s32.totalorder %s222, %s225
      %p234 = scmp.eq.s32.totalorder %s23, 1
      %p235 = por %p233, %p234
      %p236 = scmp.ne.s32.totalorder %s225, %s226
      %p237 = scmp.eq.s32.totalorder %s23, 0
      %p238 = por %p236, %p237
      %p239 = scmp.ne.s32.totalorder %s225, %s226
      %p240 = scmp.eq.s32.totalorder %s24, 1
      %p241 = por %p239, %p240
      %p243 = scmp.ne.s32.totalorder %s226, %s242
      %p244 = scmp.eq.s32.totalorder %s24, 0
      %p245 = por %p243, %p244
      %p246 = scmp.le.s32.totalorder 1, %s18
      %p247 = scmp.lt.s32.totalorder %s18, 3
      %p248 = pnand %p246, %p247
      %p249 = pneg %p248
      // Predicated region
      $region9: #{cnn_forward.1} parent=5 // pred_check
        _
      $region10: #{cnn_forward.1} parent=5 // pred_check_branch
        %251 = sbr.rel (%p248) target = $region12
      $region11: #{cnn_forward.1} parent=5 // pred_region
        %s252 = ssub.s32 %s18, 1
        // Predicated region
        $region13: #{cnn_forward.1} parent=11 // pred_check
          %p253 = pneg %p65
        $region14: #{cnn_forward.1} parent=11 // pred_check_branch
          %255 = sbr.rel (%p253) target = $region16
        $region15: #{cnn_forward.1} parent=11 // pred_region
          _
        $region16: #{cnn_forward.1} parent=11 // pred_fallthru
          _
        // Predicated region
        $region17: #{cnn_forward.1} parent=11 // pred_check
          %p256 = pneg %p86
        $region18: #{cnn_forward.1} parent=11 // pred_check_branch
          %258 = sbr.rel (%p256) target = $region20
        $region19: #{cnn_forward.1} parent=11 // pred_region
          _
        $region20: #{cnn_forward.1} parent=11 // pred_fallthru
          _
        // Predicated region
        $region21: #{cnn_forward.1} parent=11 // pred_check
          %p259 = pneg %p107
        $region22: #{cnn_forward.1} parent=11 // pred_check_branch
          %261 = sbr.rel (%p259) target = $region24
        $region23: #{cnn_forward.1} parent=11 // pred_region
          _
        $region24: #{cnn_forward.1} parent=11 // pred_fallthru
          _
        // Predicated region
        $region25: #{cnn_forward.1} parent=11 // pred_check
          %p262 = pneg %p128
        $region26: #{cnn_forward.1} parent=11 // pred_check_branch
          %264 = sbr.rel (%p262) target = $region28
        $region27: #{cnn_forward.1} parent=11 // pred_region
          _
        $region28: #{cnn_forward.1} parent=11 // pred_fallthru
          _
        // Predicated region
        $region29: #{cnn_forward.1} parent=11 // pred_check
          %p265 = pneg %p149
        $region30: #{cnn_forward.1} parent=11 // pred_check_branch
          %267 = sbr.rel (%p265) target = $region32
        $region31: #{cnn_forward.1} parent=11 // pred_region
          _
        $region32: #{cnn_forward.1} parent=11 // pred_fallthru
          _
        // Predicated region
        $region33: #{cnn_forward.1} parent=11 // pred_check
          %p268 = pneg %p170
        $region34: #{cnn_forward.1} parent=11 // pred_check_branch
          %270 = sbr.rel (%p268) target = $region36
        $region35: #{cnn_forward.1} parent=11 // pred_region
          _
        $region36: #{cnn_forward.1} parent=11 // pred_fallthru
          _
        // Predicated region
        $region37: #{cnn_forward.1} parent=11 // pred_check
          %p271 = pneg %p191
        $region38: #{cnn_forward.1} parent=11 // pred_check_branch
          %273 = sbr.rel (%p271) target = $region40
        $region39: #{cnn_forward.1} parent=11 // pred_region
          _
        $region40: #{cnn_forward.1} parent=11 // pred_fallthru
          _
        // Predicated region
        $region41: #{cnn_forward.1} parent=11 // pred_check
          %p274 = pneg %p212
        $region42: #{cnn_forward.1} parent=11 // pred_check_branch
          %276 = sbr.rel (%p274) target = $region44
        $region43: #{cnn_forward.1} parent=11 // pred_region
          _
        $region44: #{cnn_forward.1} parent=11 // pred_fallthru
          _
      $region12: #{cnn_forward.1} parent=5 // pred_fallthru
        _
      %p277 = scmp.lt.s32.totalorder %s18, 2
      // Predicated region
      $region45: #{cnn_forward.1} parent=5 // pred_check
        %p278 = pneg %p277
      $region46: #{cnn_forward.1} parent=5 // pred_check_branch
        %280 = sbr.rel (%p278) target = $region48
      $region47: #{cnn_forward.1} parent=5 // pred_region
        // Predicated region
        $region49: #{cnn_forward.1} parent=47 // pred_check
          %p281 = pneg %p38
        $region50: #{cnn_forward.1} parent=47 // pred_check_branch
          %283 = sbr.rel (%p281) target = $region52
        $region51: #{cnn_forward.1} parent=47 // pred_region
          %p284 = scmp.lt.s32.totalorder %s18, 1
          %s285 = scalar_select %p284, %s18, 1
          %s286 = smul.addr %s285, 28
          %s287 = smul.addr %s286, 8
          %s288 = scalar_lea.vmem %s0, %s287
        $region52: #{cnn_forward.1} parent=47 // pred_fallthru
          _
      $region48: #{cnn_forward.1} parent=5 // pred_fallthru
        _
      %p289 = scmp.le.s32.totalorder 1, %s18
      %p290 = scmp.lt.s32.totalorder %s18, 3
      %p291 = pnand %p289, %p290
      %p292 = pneg %p291
      // Predicated region
      $region53: #{cnn_forward.1} parent=5 // pred_check
        _
      $region54: #{cnn_forward.1} parent=5 // pred_check_branch
        %294 = sbr.rel (%p291) target = $region56
      $region55: #{cnn_forward.1} parent=5 // pred_region
        %s295 = ssub.s32 %s18, 1
        %p296 = scmp.lt.s32.totalorder %s23, 1
        %s297 = scalar_select %p296, %s23, 1
        %s298 = smul.addr %s297, 28
        %s299 = smul.addr %s298, 8
        %s300 = scalar_lea.vmem %s0, %s299
        %p301 = pneg %p44
        %p302 = pneg %p41
        %p303 = pneg %p65
        %p304 = pneg %p62
        %p305 = pneg %p86
        %p306 = pneg %p83
        %p307 = pneg %p107
        %p308 = pneg %p104
        %p309 = pneg %p128
        %p310 = pneg %p125
        %p311 = pneg %p149
        %p312 = pneg %p146
        %p313 = pneg %p170
        %p314 = pneg %p167
        %p315 = pneg %p191
        %p316 = pneg %p188
        %p317 = pneg %p212
        %p318 = pneg %p209
        %p319 = pneg %p238
        %p320 = pneg %p235
        %s321 = sand.u32 %s225, 1
        %s322 = scalar_lea.sflag [#allocation3], %s321
        %s323 = sand.u32 %s225, 1
        %s324 = smul.addr %s323, 8
        %s325 = scalar_lea.vmem [#allocation2], %s324
        %p326 = scmp.lt.s32.totalorder %s23, 1
        %s327 = scalar_select %p326, %s23, 1
        %s328 = smul.addr %s327, 28
        %s329 = smul.addr %s328, 8
        %s330 = scalar_lea.vmem %s0, %s329
        %v331 = vld [vmem:[%s330] sm:$0xff]
        %v332 = vld [vmem:[%s330 + $0x8] sm:$0xff]
        %v333 = vld [vmem:[%s330 + $0x10] sm:$0xff]
        %v334 = vld [vmem:[%s330 + $0x18] sm:$0xff]
        %v335 = vld [vmem:[%s330 + $0x20] sm:$0xff]
        %v336 = vld [vmem:[%s330 + $0x28] sm:$0xff]
        %v337 = vld [vmem:[%s330 + $0x30] sm:$0xff]
        %v338 = vld [vmem:[%s330 + $0x38] sm:$0xff]
        %v339 = vld [vmem:[%s330 + $0x40] sm:$0xff]
        %v340 = vld [vmem:[%s330 + $0x48] sm:$0xff]
        %v341 = vld [vmem:[%s330 + $0x50] sm:$0xff]
        %v342 = vld [vmem:[%s330 + $0x58] sm:$0xff]
        %v343 = vld [vmem:[%s330 + $0x60] sm:$0xff]
        %v344 = vld [vmem:[%s330 + $0x68] sm:$0xff]
        %v345 = vld [vmem:[%s330 + $0x70] sm:$0xff]
        %v346 = vld [vmem:[%s330 + $0x78] sm:$0xff]
        %v347 = vld [vmem:[%s330 + $0x80] sm:$0xff]
        %v348 = vld [vmem:[%s330 + $0x88] sm:$0xff]
        %v349 = vld [vmem:[%s330 + $0x90] sm:$0xff]
        %v350 = vld [vmem:[%s330 + $0x98] sm:$0xff]
        %v351 = vld [vmem:[%s330 + $0xa0] sm:$0xff]
        %v352 = vld [vmem:[%s330 + $0xa8] sm:$0xff]
        %v353 = vld [vmem:[%s330 + $0xb0] sm:$0xff]
        %v354 = vld [vmem:[%s330 + $0xb8] sm:$0xff]
        %v355 = vld [vmem:[%s330 + $0xc0] sm:$0xff]
        %v356 = vld [vmem:[%s330 + $0xc8] sm:$0xff]
        %v357 = vld [vmem:[%s330 + $0xd0] sm:$0xff]
        %v358 = vld [vmem:[%s330 + $0xd8] sm:$0xff]
        %v359 = vld [vmem:[%s1] sm:$0xff]
        %v360 = vld [vmem:[%s1 + $0x8] sm:$0xff]
        %v361 = vld [vmem:[%s1 + $0x10] sm:$0xff]
        %v362 = vld [vmem:[%s1 + $0x18] sm:$0xff]
        %v363 = vld [vmem:[%s1 + $0x20] sm:$0xff]
        %v364 = vld [vmem:[%s1 + $0x28] sm:$0xff]
        %v365 = vld [vmem:[%s1 + $0x30] sm:$0xf]
        %v366 = vld [vmem:[%s1 + $0x38] sm:$0xf]
        %v367 = vld [vmem:[%s2] sm:$0x3]
        %v369 = vlaneseq
        %v370 = vshrl.u32 %v369, 7
        %v371 = vsub.s32 0, %v370
        %v372 = vrot.slane %v367, %v371
        %v373 = vlaneseq
        %v374 = vshrl.u32 %v373, 7
        %v375 = vsub.s32 1, %v374
        %v376 = vrot.slane %v367, %v375
        %vm379 = vcmask 228352
        %v381 = vsel %vm379, %v331, 0
        %v384 = vsel %vm379, %v332, 0
        %v387 = vsel %vm379, %v333, 0
        %v390 = vsel %vm379, %v334, 0
        %v393 = vsel %vm379, %v335, 0
        %v396 = vsel %vm379, %v336, 0
        %v399 = vsel %vm379, %v337, 0
        %v402 = vsel %vm379, %v338, 0
        %v405 = vsel %vm379, %v339, 0
        %v408 = vsel %vm379, %v340, 0
        %v411 = vsel %vm379, %v341, 0
        %v414 = vsel %vm379, %v342, 0
        %v417 = vsel %vm379, %v343, 0
        %v420 = vsel %vm379, %v344, 0
        %v423 = vsel %vm379, %v345, 0
        %v426 = vsel %vm379, %v346, 0
        %v429 = vsel %vm379, %v347, 0
        %v432 = vsel %vm379, %v348, 0
        %v435 = vsel %vm379, %v349, 0
        %v438 = vsel %vm379, %v350, 0
        %v441 = vsel %vm379, %v351, 0
        %v444 = vsel %vm379, %v352, 0
        %v447 = vsel %vm379, %v353, 0
        %v450 = vsel %vm379, %v354, 0
        %vm452 = vcmask 1043456
        %v454 = vsel %vm452, %v365, 0
        %v457 = vsel %vm452, %v366, 0
        %459 = vmatprep.subr.mxu0 %v360
        %460 = vmatpush1.msra.mxu0 %v359
        %461 = vmatprep.subr.mxu0 %v362
        %462 = vmatpush1.msra.mxu0 %v361
        %463 = vmatprep.subr.mxu0 %v364
        %464 = vmatpush1.msra.mxu0 %v363
        %465 = vmatprep.subr.mxu0 %v457
        %466 = vmatpush1.msra.mxu0 %v454
        %467 = vmatprep.subr.mxu0 0.0
        %468 = vmatpush1.msra.mxu0 0.0
        %469 = vmatprep.subr.mxu0 0.0
        %470 = vmatpush1.msra.mxu0 0.0
        %471 = vmatprep.subr.mxu0 0.0
        %472 = vmatpush1.msra.mxu0 0.0
        %473 = vmatprep.subr.mxu0 0.0
        %474 = vmatpush1.msra.mxu0 0.0
        %475 = vmatprep.subr.mxu0 0.0
        %476 = vmatpush1.msra.mxu0 0.0
        %477 = vmatprep.subr.mxu0 0.0
        %478 = vmatpush1.msra.mxu0 0.0
        %479 = vmatprep.subr.mxu0 0.0
        %480 = vmatpush1.msra.mxu0 0.0
        %481 = vmatprep.subr.mxu0 0.0
        %482 = vmatpush1.msra.mxu0 0.0
        %483 = vmatprep.subr.mxu0 0.0
        %484 = vmatpush1.msra.mxu0 0.0
        %485 = vmatprep.subr.mxu0 0.0
        %486 = vmatpush1.msra.mxu0 0.0
        %487 = vmatprep.subr.mxu0 0.0
        %488 = vmatpush1.msra.mxu0 0.0
        %489 = vmatprep.subr.mxu0 0.0
        %490 = vmatpush1.msra.mxu0 0.0
        %491 = vmatprep.subr.mxu0 0.0
        %492 = vmatpush1.msra.mxu0 0.0
        %493 = vmatprep.subr.mxu0 0.0
        %494 = vmatpush1.msra.mxu0 0.0
        %495 = vmatprep.subr.mxu0 0.0
        %496 = vmatpush1.msra.mxu0 0.0
        %497 = vmatprep.subr.mxu0 0.0
        %498 = vmatpush1.msra.mxu0 0.0
        %499 = vmatprep.subr.mxu0 0.0
        %500 = vmatpush1.msra.mxu0 0.0
        %501 = vmatprep.subr.mxu0 0.0
        %502 = vmatpush1.msra.mxu0 0.0
        %503 = vmatprep.subr.mxu0 0.0
        %504 = vmatpush1.msra.mxu0 0.0
        %505 = vmatprep.subr.mxu0 0.0
        %506 = vmatpush1.msra.mxu0 0.0
        %507 = vmatprep.subr.mxu0 0.0
        %508 = vmatpush1.msra.mxu0 0.0
        %509 = vmatprep.subr.mxu0 0.0
        %510 = vmatpush1.msra.mxu0 0.0
        %511 = vmatprep.subr.mxu0 0.0
        %512 = vmatpush1.msra.mxu0 0.0
        %513 = vmatprep.subr.mxu0 0.0
        %514 = vmatpush1.msra.mxu0 0.0
        %515 = vmatprep.subr.mxu0 0.0
        %516 = vmatpush1.msra.mxu0 0.0
        %517 = vmatprep.subr.mxu0 0.0
        %518 = vmatpush1.msra.mxu0 0.0
        %519 = vmatprep.subr.mxu0 0.0
        %520 = vmatpush1.msra.mxu0 0.0
        %521 = vmatprep.subr.mxu0 0.0
        %522 = vmatpush1.msra.mxu0 0.0
        %523 = vmatprep.mubr.f32.mxu0 0.0
        %524 = vmatmul.mubr.f32.gmra.mrb[0].mxu0 %v381
        %v525 = vpop.f32.mrb[0].mxu0
        %v526 = vadd.f32 %v372, %v525
        %v527 = vpop.f32.mrb[0].mxu0
        %v528 = vadd.f32 %v376, %v527
        %529 = vmatprep.mubr.f32.mxu0 0.0
        %530 = vmatmul.mubr.f32.gmra.mrb[0].mxu0 %v384
        %v531 = vpop.f32.mrb[0].mxu0
        %v532 = vadd.f32 %v372, %v531
        %v533 = vpop.f32.mrb[0].mxu0
        %v534 = vadd.f32 %v376, %v533
        %535 = vmatprep.mubr.f32.mxu0 0.0
        %536 = vmatmul.mubr.f32.gmra.mrb[0].mxu0 %v387
        %v537 = vpop.f32.mrb[0].mxu0
        %v538 = vadd.f32 %v372, %v537
        %v539 = vpop.f32.mrb[0].mxu0
        %v540 = vadd.f32 %v376, %v539
        %541 = vmatprep.mubr.f32.mxu0 0.0
        %542 = vmatmul.mubr.f32.gmra.mrb[0].mxu0 %v390
        %v543 = vpop.f32.mrb[0].mxu0
        %v544 = vadd.f32 %v372, %v543
        %v545 = vpop.f32.mrb[0].mxu0
        %v546 = vadd.f32 %v376, %v545
        %547 = vmatprep.mubr.f32.mxu0 0.0
        %548 = vmatmul.mubr.f32.gmra.mrb[0].mxu0 %v393
        %v549 = vpop.f32.mrb[0].mxu0
        %v550 = vadd.f32 %v372, %v549
        %v551 = vpop.f32.mrb[0].mxu0
        %v552 = vadd.f32 %v376, %v551
        %553 = vmatprep.mubr.f32.mxu0 0.0
        %554 = vmatmul.mubr.f32.gmra.mrb[0].mxu0 %v396
        %v555 = vpop.f32.mrb[0].mxu0
        %v556 = vadd.f32 %v372, %v555
        %v557 = vpop.f32.mrb[0].mxu0
        %v558 = vadd.f32 %v376, %v557
        %559 = vmatprep.mubr.f32.mxu0 0.0
        %560 = vmatmul.mubr.f32.gmra.mrb[0].mxu0 %v399
        %v561 = vpop.f32.mrb[0].mxu0
        %v562 = vadd.f32 %v372, %v561
        %v563 = vpop.f32.mrb[0].mxu0
        %v564 = vadd.f32 %v376, %v563
        %565 = vmatprep.mubr.f32.mxu0 0.0
        %566 = vmatmul.mubr.f32.gmra.mrb[0].mxu0 %v402
        %v567 = vpop.f32.mrb[0].mxu0
        %v568 = vadd.f32 %v372, %v567
        %v569 = vpop.f32.mrb[0].mxu0
        %v570 = vadd.f32 %v376, %v569
        %571 = vmatprep.mubr.f32.mxu0 0.0
        %572 = vmatmul.mubr.f32.gmra.mrb[0].mxu0 %v405
        %v573 = vpop.f32.mrb[0].mxu0
        %v574 = vadd.f32 %v372, %v573
        %v575 = vpop.f32.mrb[0].mxu0
        %v576 = vadd.f32 %v376, %v575
        %577 = vmatprep.mubr.f32.mxu0 0.0
        %578 = vmatmul.mubr.f32.gmra.mrb[0].mxu0 %v408
        %v579 = vpop.f32.mrb[0].mxu0
        %v580 = vadd.f32 %v372, %v579
        %v581 = vpop.f32.mrb[0].mxu0
        %v582 = vadd.f32 %v376, %v581
        %583 = vmatprep.mubr.f32.mxu0 0.0
        %584 = vmatmul.mubr.f32.gmra.mrb[0].mxu0 %v411
        %v585 = vpop.f32.mrb[0].mxu0
        %v586 = vadd.f32 %v372, %v585
        %v587 = vpop.f32.mrb[0].mxu0
        %v588 = vadd.f32 %v376, %v587
        %589 = vmatprep.mubr.f32.mxu0 0.0
        %590 = vmatmul.mubr.f32.gmra.mrb[0].mxu0 %v414
        %v591 = vpop.f32.mrb[0].mxu0
        %v592 = vadd.f32 %v372, %v591
        %v593 = vpop.f32.mrb[0].mxu0
        %v594 = vadd.f32 %v376, %v593
        %595 = vmatprep.mubr.f32.mxu0 0.0
        %596 = vmatmul.mubr.f32.gmra.mrb[0].mxu0 %v417
        %v597 = vpop.f32.mrb[0].mxu0
        %v598 = vadd.f32 %v372, %v597
        %v599 = vpop.f32.mrb[0].mxu0
        %v600 = vadd.f32 %v376, %v599
        %601 = vmatprep.mubr.f32.mxu0 0.0
        %602 = vmatmul.mubr.f32.gmra.mrb[0].mxu0 %v420
        %v603 = vpop.f32.mrb[0].mxu0
        %v604 = vadd.f32 %v372, %v603
        %v605 = vpop.f32.mrb[0].mxu0
        %v606 = vadd.f32 %v376, %v605
        %607 = vmatprep.mubr.f32.mxu0 0.0
        %608 = vmatmul.mubr.f32.gmra.mrb[0].mxu0 %v423
        %v609 = vpop.f32.mrb[0].mxu0
        %v610 = vadd.f32 %v372, %v609
        %v611 = vpop.f32.mrb[0].mxu0
        %v612 = vadd.f32 %v376, %v611
        %613 = vmatprep.mubr.f32.mxu0 0.0
        %614 = vmatmul.mubr.f32.gmra.mrb[0].mxu0 %v426
        %v615 = vpop.f32.mrb[0].mxu0
        %v616 = vadd.f32 %v372, %v615
        %v617 = vpop.f32.mrb[0].mxu0
        %v618 = vadd.f32 %v376, %v617
        %619 = vmatprep.mubr.f32.mxu0 0.0
        %620 = vmatmul.mubr.f32.gmra.mrb[0].mxu0 %v429
        %v621 = vpop.f32.mrb[0].mxu0
        %v622 = vadd.f32 %v372, %v621
        %v623 = vpop.f32.mrb[0].mxu0
        %v624 = vadd.f32 %v376, %v623
        %625 = vmatprep.mubr.f32.mxu0 0.0
        %626 = vmatmul.mubr.f32.gmra.mrb[0].mxu0 %v432
        %v627 = vpop.f32.mrb[0].mxu0
        %v628 = vadd.f32 %v372, %v627
        %v629 = vpop.f32.mrb[0].mxu0
        %v630 = vadd.f32 %v376, %v629
        %631 = vmatprep.mubr.f32.mxu0 0.0
        %632 = vmatmul.mubr.f32.gmra.mrb[0].mxu0 %v435
        %v633 = vpop.f32.mrb[0].mxu0
        %v634 = vadd.f32 %v372, %v633
        %v635 = vpop.f32.mrb[0].mxu0
        %v636 = vadd.f32 %v376, %v635
        %637 = vmatprep.mubr.f32.mxu0 0.0
        %638 = vmatmul.mubr.f32.gmra.mrb[0].mxu0 %v438
        %v639 = vpop.f32.mrb[0].mxu0
        %v640 = vadd.f32 %v372, %v639
        %v641 = vpop.f32.mrb[0].mxu0
        %v642 = vadd.f32 %v376, %v641
        %643 = vmatprep.mubr.f32.mxu0 0.0
        %644 = vmatmul.mubr.f32.gmra.mrb[0].mxu0 %v441
        %v645 = vpop.f32.mrb[0].mxu0
        %v646 = vadd.f32 %v372, %v645
        %v647 = vpop.f32.mrb[0].mxu0
        %v648 = vadd.f32 %v376, %v647
        %649 = vmatprep.mubr.f32.mxu0 0.0
        %650 = vmatmul.mubr.f32.gmra.mrb[0].mxu0 %v444
        %v651 = vpop.f32.mrb[0].mxu0
        %v652 = vadd.f32 %v372, %v651
        %v653 = vpop.f32.mrb[0].mxu0
        %v654 = vadd.f32 %v376, %v653
        %655 = vmatprep.mubr.f32.mxu0 0.0
        %656 = vmatmul.mubr.f32.gmra.mrb[0].mxu0 %v447
        %v657 = vpop.f32.mrb[0].mxu0
        %v658 = vadd.f32 %v372, %v657
        %v659 = vpop.f32.mrb[0].mxu0
        %v660 = vadd.f32 %v376, %v659
        %661 = vmatprep.mubr.f32.mxu0 0.0
        %662 = vmatmul.mubr.f32.gmra.mrb[0].mxu0 %v450
        %v663 = vpop.f32.mrb[0].mxu0
        %v664 = vadd.f32 %v372, %v663
        %v665 = vpop.f32.mrb[0].mxu0
        %v666 = vadd.f32 %v376, %v665
        %667 = vdwg.mxu0
        %s668 = scalar_lea.vmem %s1, 64
        %v669 = vld [vmem:[%s668] sm:$0xff]
        %v670 = vld [vmem:[%s668 + $0x8] sm:$0xff]
        %v671 = vld [vmem:[%s668 + $0x10] sm:$0xff]
        %v672 = vld [vmem:[%s668 + $0x18] sm:$0xff]
        %v673 = vld [vmem:[%s668 + $0x20] sm:$0xff]
        %v674 = vld [vmem:[%s668 + $0x28] sm:$0xff]
        %v675 = vld [vmem:[%s668 + $0x30] sm:$0xf]
        %v676 = vld [vmem:[%s668 + $0x38] sm:$0xf]
        %v678 = vsel %vm379, %v355, 0
        %v681 = vsel %vm452, %v675, 0
        %v684 = vsel %vm452, %v676, 0
        %686 = vmatprep.subr.mxu0 %v670
        %687 = vmatpush1.msra.mxu0 %v669
        %688 = vmatprep.subr.mxu0 %v672
        %689 = vmatpush1.msra.mxu0 %v671
        %690 = vmatprep.subr.mxu0 %v674
        %691 = vmatpush1.msra.mxu0 %v673
        %692 = vmatprep.subr.mxu0 %v684
        %693 = vmatpush1.msra.mxu0 %v681
        %694 = vmatprep.subr.mxu0 0.0
        %695 = vmatpush1.msra.mxu0 0.0
        %696 = vmatprep.subr.mxu0 0.0
        %697 = vmatpush1.msra.mxu0 0.0
        %698 = vmatprep.subr.mxu0 0.0
        %699 = vmatpush1.msra.mxu0 0.0
        %700 = vmatprep.subr.mxu0 0.0
        %701 = vmatpush1.msra.mxu0 0.0
        %702 = vmatprep.subr.mxu0 0.0
        %703 = vmatpush1.msra.mxu0 0.0
        %704 = vmatprep.subr.mxu0 0.0
        %705 = vmatpush1.msra.mxu0 0.0
        %706 = vmatprep.subr.mxu0 0.0
        %707 = vmatpush1.msra.mxu0 0.0
        %708 = vmatprep.subr.mxu0 0.0
        %709 = vmatpush1.msra.mxu0 0.0
        %710 = vmatprep.subr.mxu0 0.0
        %711 = vmatpush1.msra.mxu0 0.0
        %712 = vmatprep.subr.mxu0 0.0
        %713 = vmatpush1.msra.mxu0 0.0
        %714 = vmatprep.subr.mxu0 0.0
        %715 = vmatpush1.msra.mxu0 0.0
        %716 = vmatprep.subr.mxu0 0.0
        %717 = vmatpush1.msra.mxu0 0.0
        %718 = vmatprep.subr.mxu0 0.0
        %719 = vmatpush1.msra.mxu0 0.0
        %720 = vmatprep.subr.mxu0 0.0
        %721 = vmatpush1.msra.mxu0 0.0
        %722 = vmatprep.subr.mxu0 0.0
        %723 = vmatpush1.msra.mxu0 0.0
        %724 = vmatprep.subr.mxu0 0.0
        %725 = vmatpush1.msra.mxu0 0.0
        %726 = vmatprep.subr.mxu0 0.0
        %727 = vmatpush1.msra.mxu0 0.0
        %728 = vmatprep.subr.mxu0 0.0
        %729 = vmatpush1.msra.mxu0 0.0
        %730 = vmatprep.subr.mxu0 0.0
        %731 = vmatpush1.msra.mxu0 0.0
        %732 = vmatprep.subr.mxu0 0.0
        %733 = vmatpush1.msra.mxu0 0.0
        %734 = vmatprep.subr.mxu0 0.0
        %735 = vmatpush1.msra.mxu0 0.0
        %736 = vmatprep.subr.mxu0 0.0
        %737 = vmatpush1.msra.mxu0 0.0
        %738 = vmatprep.subr.mxu0 0.0
        %739 = vmatpush1.msra.mxu0 0.0
        %740 = vmatprep.subr.mxu0 0.0
        %741 = vmatpush1.msra.mxu0 0.0
        %742 = vmatprep.subr.mxu0 0.0
        %743 = vmatpush1.msra.mxu0 0.0
        %744 = vmatprep.subr.mxu0 0.0
        %745 = vmatpush1.msra.mxu0 0.0
        %746 = vmatprep.subr.mxu0 0.0
        %747 = vmatpush1.msra.mxu0 0.0
        %748 = vmatprep.subr.mxu0 0.0
        %749 = vmatpush1.msra.mxu0 0.0
        %750 = vmatprep.mubr.f32.mxu0 0.0
        %751 = vmatmul.mubr.f32.gmra.mrb[0].mxu0 %v384
        %v752 = vpop.f32.mrb[0].mxu0
        %v753 = vadd.f32 0.0, %v752
        %v754 = vpop.f32.mrb[0].mxu0
        %v755 = vadd.f32 0.0, %v754
        %756 = vmatprep.mubr.f32.mxu0 0.0
        %757 = vmatmul.mubr.f32.gmra.mrb[0].mxu0 %v387
        %v758 = vpop.f32.mrb[0].mxu0
        %v759 = vadd.f32 0.0, %v758
        %v760 = vpop.f32.mrb[0].mxu0
        %v761 = vadd.f32 0.0, %v760
        %762 = vmatprep.mubr.f32.mxu0 0.0
        %763 = vmatmul.mubr.f32.gmra.mrb[0].mxu0 %v390
        %v764 = vpop.f32.mrb[0].mxu0
        %v765 = vadd.f32 0.0, %v764
        %v766 = vpop.f32.mrb[0].mxu0
        %v767 = vadd.f32 0.0, %v766
        %768 = vmatprep.mubr.f32.mxu0 0.0
        %769 = vmatmul.mubr.f32.gmra.mrb[0].mxu0 %v393
        %v770 = vpop.f32.mrb[0].mxu0
        %v771 = vadd.f32 0.0, %v770
        %v772 = vpop.f32.mrb[0].mxu0
        %v773 = vadd.f32 0.0, %v772
        %774 = vmatprep.mubr.f32.mxu0 0.0
        %775 = vmatmul.mubr.f32.gmra.mrb[0].mxu0 %v396
        %v776 = vpop.f32.mrb[0].mxu0
        %v777 = vadd.f32 0.0, %v776
        %v778 = vpop.f32.mrb[0].mxu0
        %v779 = vadd.f32 0.0, %v778
        %780 = vmatprep.mubr.f32.mxu0 0.0
        %781 = vmatmul.mubr.f32.gmra.mrb[0].mxu0 %v399
        %v782 = vpop.f32.mrb[0].mxu0
        %v783 = vadd.f32 0.0, %v782
        %v784 = vpop.f32.mrb[0].mxu0
        %v785 = vadd.f32 0.0, %v784
        %786 = vmatprep.mubr.f32.mxu0 0.0
        %787 = vmatmul.mubr.f32.gmra.mrb[0].mxu0 %v402
        %v788 = vpop.f32.mrb[0].mxu0
        %v789 = vadd.f32 0.0, %v788
        %v790 = vpop.f32.mrb[0].mxu0
        %v791 = vadd.f32 0.0, %v790
        %792 = vmatprep.mubr.f32.mxu0 0.0
        %793 = vmatmul.mubr.f32.gmra.mrb[0].mxu0 %v405
        %v794 = vpop.f32.mrb[0].mxu0
        %v795 = vadd.f32 0.0, %v794
        %v796 = vpop.f32.mrb[0].mxu0
        %v797 = vadd.f32 0.0, %v796
        %798 = vmatprep.mubr.f32.mxu0 0.0
        %799 = vmatmul.mubr.f32.gmra.mrb[0].mxu0 %v408
        %v800 = vpop.f32.mrb[0].mxu0
        %v801 = vadd.f32 0.0, %v800
        %v802 = vpop.f32.mrb[0].mxu0
        %v803 = vadd.f32 0.0, %v802
        %804 = vmatprep.mubr.f32.mxu0 0.0
        %805 = vmatmul.mubr.f32.gmra.mrb[0].mxu0 %v411
        %v806 = vpop.f32.mrb[0].mxu0
        %v807 = vadd.f32 0.0, %v806
        %v808 = vpop.f32.mrb[0].mxu0
        %v809 = vadd.f32 0.0, %v808
        %810 = vmatprep.mubr.f32.mxu0 0.0
        %811 = vmatmul.mubr.f32.gmra.mrb[0].mxu0 %v414
        %v812 = vpop.f32.mrb[0].mxu0
        %v813 = vadd.f32 0.0, %v812
        %v814 = vpop.f32.mrb[0].mxu0
        %v815 = vadd.f32 0.0, %v814
        %816 = vmatprep.mubr.f32.mxu0 0.0
        %817 = vmatmul.mubr.f32.gmra.mrb[0].mxu0 %v417
        %v818 = vpop.f32.mrb[0].mxu0
        %v819 = vadd.f32 0.0, %v818
        %v820 = vpop.f32.mrb[0].mxu0
        %v821 = vadd.f32 0.0, %v820
        %822 = vmatprep.mubr.f32.mxu0 0.0
        %823 = vmatmul.mubr.f32.gmra.mrb[0].mxu0 %v420
        %v824 = vpop.f32.mrb[0].mxu0
        %v825 = vadd.f32 0.0, %v824
        %v826 = vpop.f32.mrb[0].mxu0
        %v827 = vadd.f32 0.0, %v826
        %828 = vmatprep.mubr.f32.mxu0 0.0
        %829 = vmatmul.mubr.f32.gmra.mrb[0].mxu0 %v423
        %v830 = vpop.f32.mrb[0].mxu0
        %v831 = vadd.f32 0.0, %v830
        %v832 = vpop.f32.mrb[0].mxu0
        %v833 = vadd.f32 0.0, %v832
        %834 = vmatprep.mubr.f32.mxu0 0.0
        %835 = vmatmul.mubr.f32.gmra.mrb[0].mxu0 %v426
        %v836 = vpop.f32.mrb[0].mxu0
        %v837 = vadd.f32 0.0, %v836
        %v838 = vpop.f32.mrb[0].mxu0
        %v839 = vadd.f32 0.0, %v838
        %840 = vmatprep.mubr.f32.mxu0 0.0
        %841 = vmatmul.mubr.f32.gmra.mrb[0].mxu0 %v429
        %v842 = vpop.f32.mrb[0].mxu0
        %v843 = vadd.f32 0.0, %v842
        %v844 = vpop.f32.mrb[0].mxu0
        %v845 = vadd.f32 0.0, %v844
        %846 = vmatprep.mubr.f32.mxu0 0.0
        %847 = vmatmul.mubr.f32.gmra.mrb[0].mxu0 %v432
        %v848 = vpop.f32.mrb[0].mxu0
        %v849 = vadd.f32 0.0, %v848
        %v850 = vpop.f32.mrb[0].mxu0
        %v851 = vadd.f32 0.0, %v850
        %852 = vmatprep.mubr.f32.mxu0 0.0
        %853 = vmatmul.mubr.f32.gmra.mrb[0].mxu0 %v435
        %v854 = vpop.f32.mrb[0].mxu0
        %v855 = vadd.f32 0.0, %v854
        %v856 = vpop.f32.mrb[0].mxu0
        %v857 = vadd.f32 0.0, %v856
        %858 = vmatprep.mubr.f32.mxu0 0.0
        %859 = vmatmul.mubr.f32.gmra.mrb[0].mxu0 %v438
        %v860 = vpop.f32.mrb[0].mxu0
        %v861 = vadd.f32 0.0, %v860
        %v862 = vpop.f32.mrb[0].mxu0
        %v863 = vadd.f32 0.0, %v862
        %864 = vmatprep.mubr.f32.mxu0 0.0
        %865 = vmatmul.mubr.f32.gmra.mrb[0].mxu0 %v441
        %v866 = vpop.f32.mrb[0].mxu0
        %v867 = vadd.f32 0.0, %v866
        %v868 = vpop.f32.mrb[0].mxu0
        %v869 = vadd.f32 0.0, %v868
        %870 = vmatprep.mubr.f32.mxu0 0.0
        %871 = vmatmul.mubr.f32.gmra.mrb[0].mxu0 %v444
        %v872 = vpop.f32.mrb[0].mxu0
        %v873 = vadd.f32 0.0, %v872
        %v874 = vpop.f32.mrb[0].mxu0
        %v875 = vadd.f32 0.0, %v874
        %876 = vmatprep.mubr.f32.mxu0 0.0
        %877 = vmatmul.mubr.f32.gmra.mrb[0].mxu0 %v447
        %v878 = vpop.f32.mrb[0].mxu0
        %v879 = vadd.f32 0.0, %v878
        %v880 = vpop.f32.mrb[0].mxu0
        %v881 = vadd.f32 0.0, %v880
        %882 = vmatprep.mubr.f32.mxu0 0.0
        %883 = vmatmul.mubr.f32.gmra.mrb[0].mxu0 %v450
        %v884 = vpop.f32.mrb[0].mxu0
        %v885 = vadd.f32 0.0, %v884
        %v886 = vpop.f32.mrb[0].mxu0
        %v887 = vadd.f32 0.0, %v886
        %888 = vmatprep.mubr.f32.mxu0 0.0
        %889 = vmatmul.mubr.f32.gmra.mrb[0].mxu0 %v678
        %v890 = vpop.f32.mrb[0].mxu0
        %v891 = vadd.f32 0.0, %v890
        %v892 = vpop.f32.mrb[0].mxu0
        %v893 = vadd.f32 0.0, %v892
        %894 = vdwg.mxu0
        %v895 = vadd.f32 %v526, %v753
        %v896 = vadd.f32 %v528, %v755
        %v897 = vadd.f32 %v532, %v759
        %v898 = vadd.f32 %v534, %v761
        %v899 = vadd.f32 %v538, %v765
        %v900 = vadd.f32 %v540, %v767
        %v901 = vadd.f32 %v544, %v771
        %v902 = vadd.f32 %v546, %v773
        %v903 = vadd.f32 %v550, %v777
        %v904 = vadd.f32 %v552, %v779
        %v905 = vadd.f32 %v556, %v783
        %v906 = vadd.f32 %v558, %v785
        %v907 = vadd.f32 %v562, %v789
        %v908 = vadd.f32 %v564, %v791
        %v909 = vadd.f32 %v568, %v795
        %v910 = vadd.f32 %v570, %v797
        %v911 = vadd.f32 %v574, %v801
        %v912 = vadd.f32 %v576, %v803
        %v913 = vadd.f32 %v580, %v807
        %v914 = vadd.f32 %v582, %v809
        %v915 = vadd.f32 %v586, %v813
        %v916 = vadd.f32 %v588, %v815
        %v917 = vadd.f32 %v592, %v819
        %v918 = vadd.f32 %v594, %v821
        %v919 = vadd.f32 %v598, %v825
        %v920 = vadd.f32 %v600, %v827
        %v921 = vadd.f32 %v604, %v831
        %v922 = vadd.f32 %v606, %v833
        %v923 = vadd.f32 %v610, %v837
        %v924 = vadd.f32 %v612, %v839
        %v925 = vadd.f32 %v616, %v843
        %v926 = vadd.f32 %v618, %v845
        %v927 = vadd.f32 %v622, %v849
        %v928 = vadd.f32 %v624, %v851
        %v929 = vadd.f32 %v628, %v855
        %v930 = vadd.f32 %v630, %v857
        %v931 = vadd.f32 %v634, %v861
        %v932 = vadd.f32 %v636, %v863
        %v933 = vadd.f32 %v640, %v867
        %v934 = vadd.f32 %v642, %v869
        %v935 = vadd.f32 %v646, %v873
        %v936 = vadd.f32 %v648, %v875
        %v937 = vadd.f32 %v652, %v879
        %v938 = vadd.f32 %v654, %v881
        %v939 = vadd.f32 %v658, %v885
        %v940 = vadd.f32 %v660, %v887
        %v941 = vadd.f32 %v664, %v891
        %v942 = vadd.f32 %v666, %v893
        %s943 = scalar_lea.vmem %s1, 128
        %v944 = vld [vmem:[%s943] sm:$0xff]
        %v945 = vld [vmem:[%s943 + $0x8] sm:$0xff]
        %v946 = vld [vmem:[%s943 + $0x10] sm:$0xff]
        %v947 = vld [vmem:[%s943 + $0x18] sm:$0xff]
        %v948 = vld [vmem:[%s943 + $0x20] sm:$0xff]
        %v949 = vld [vmem:[%s943 + $0x28] sm:$0xff]
        %v950 = vld [vmem:[%s943 + $0x30] sm:$0xf]
        %v951 = vld [vmem:[%s943 + $0x38] sm:$0xf]
        %v953 = vsel %vm379, %v356, 0
        %v956 = vsel %vm452, %v950, 0
        %v959 = vsel %vm452, %v951, 0
        %961 = vmatprep.subr.mxu0 %v945
        %962 = vmatpush1.msra.mxu0 %v944
        %963 = vmatprep.subr.mxu0 %v947
        %964 = vmatpush1.msra.mxu0 %v946
        %965 = vmatprep.subr.mxu0 %v949
        %966 = vmatpush1.msra.mxu0 %v948
        %967 = vmatprep.subr.mxu0 %v959
        %968 = vmatpush1.msra.mxu0 %v956
        %969 = vmatprep.subr.mxu0 0.0
        %970 = vmatpush1.msra.mxu0 0.0
        %971 = vmatprep.subr.mxu0 0.0
        %972 = vmatpush1.msra.mxu0 0.0
        %973 = vmatprep.subr.mxu0 0.0
        %974 = vmatpush1.msra.mxu0 0.0
        %975 = vmatprep.subr.mxu0 0.0
        %976 = vmatpush1.msra.mxu0 0.0
        %977 = vmatprep.subr.mxu0 0.0
        %978 = vmatpush1.msra.mxu0 0.0
        %979 = vmatprep.subr.mxu0 0.0
        %980 = vmatpush1.msra.mxu0 0.0
        %981 = vmatprep.subr.mxu0 0.0
        %982 = vmatpush1.msra.mxu0 0.0
        %983 = vmatprep.subr.mxu0 0.0
        %984 = vmatpush1.msra.mxu0 0.0
        %985 = vmatprep.subr.mxu0 0.0
        %986 = vmatpush1.msra.mxu0 0.0
        %987 = vmatprep.subr.mxu0 0.0
        %988 = vmatpush1.msra.mxu0 0.0
        %989 = vmatprep.subr.mxu0 0.0
        %990 = vmatpush1.msra.mxu0 0.0
        %991 = vmatprep.subr.mxu0 0.0
        %992 = vmatpush1.msra.mxu0 0.0
        %993 = vmatprep.subr.mxu0 0.0
        %994 = vmatpush1.msra.mxu0 0.0
        %995 = vmatprep.subr.mxu0 0.0
        %996 = vmatpush1.msra.mxu0 0.0
        %997 = vmatprep.subr.mxu0 0.0
        %998 = vmatpush1.msra.mxu0 0.0
        %999 = vmatprep.subr.mxu0 0.0
        %1000 = vmatpush1.msra.mxu0 0.0
        %1001 = vmatprep.subr.mxu0 0.0
        %1002 = vmatpush1.msra.mxu0 0.0
        %1003 = vmatprep.subr.mxu0 0.0
        %1004 = vmatpush1.msra.mxu0 0.0
        %1005 = vmatprep.subr.mxu0 0.0
        %1006 = vmatpush1.msra.mxu0 0.0
        %1007 = vmatprep.subr.mxu0 0.0
        %1008 = vmatpush1.msra.mxu0 0.0
        %1009 = vmatprep.subr.mxu0 0.0
        %1010 = vmatpush1.msra.mxu0 0.0
        %1011 = vmatprep.subr.mxu0 0.0
        %1012 = vmatpush1.msra.mxu0 0.0
        %1013 = vmatprep.subr.mxu0 0.0
        %1014 = vmatpush1.msra.mxu0 0.0
        %1015 = vmatprep.subr.mxu0 0.0
        %1016 = vmatpush1.msra.mxu0 0.0
        %1017 = vmatprep.subr.mxu0 0.0
        %1018 = vmatpush1.msra.mxu0 0.0
        %1019 = vmatprep.subr.mxu0 0.0
        %1020 = vmatpush1.msra.mxu0 0.0
        %1021 = vmatprep.subr.mxu0 0.0
        %1022 = vmatpush1.msra.mxu0 0.0
        %1023 = vmatprep.subr.mxu0 0.0
        %1024 = vmatpush1.msra.mxu0 0.0
        %1025 = vmatprep.mubr.f32.mxu0 0.0
        %1026 = vmatmul.mubr.f32.gmra.mrb[0].mxu0 %v387
        %v1027 = vpop.f32.mrb[0].mxu0
        %v1028 = vadd.f32 0.0, %v1027
        %v1029 = vpop.f32.mrb[0].mxu0
        %v1030 = vadd.f32 0.0, %v1029
        %1031 = vmatprep.mubr.f32.mxu0 0.0
        %1032 = vmatmul.mubr.f32.gmra.mrb[0].mxu0 %v390
        %v1033 = vpop.f32.mrb[0].mxu0
        %v1034 = vadd.f32 0.0, %v1033
        %v1035 = vpop.f32.mrb[0].mxu0
        %v1036 = vadd.f32 0.0, %v1035
        %1037 = vmatprep.mubr.f32.mxu0 0.0
        %1038 = vmatmul.mubr.f32.gmra.mrb[0].mxu0 %v393
        %v1039 = vpop.f32.mrb[0].mxu0
        %v1040 = vadd.f32 0.0, %v1039
        %v1041 = vpop.f32.mrb[0].mxu0
        %v1042 = vadd.f32 0.0, %v1041
        %1043 = vmatprep.mubr.f32.mxu0 0.0
        %1044 = vmatmul.mubr.f32.gmra.mrb[0].mxu0 %v396
        %v1045 = vpop.f32.mrb[0].mxu0
        %v1046 = vadd.f32 0.0, %v1045
        %v1047 = vpop.f32.mrb[0].mxu0
        %v1048 = vadd.f32 0.0, %v1047
        %1049 = vmatprep.mubr.f32.mxu0 0.0
        %1050 = vmatmul.mubr.f32.gmra.mrb[0].mxu0 %v399
        %v1051 = vpop.f32.mrb[0].mxu0
        %v1052 = vadd.f32 0.0, %v1051
        %v1053 = vpop.f32.mrb[0].mxu0
        %v1054 = vadd.f32 0.0, %v1053
        %1055 = vmatprep.mubr.f32.mxu0 0.0
        %1056 = vmatmul.mubr.f32.gmra.mrb[0].mxu0 %v402
        %v1057 = vpop.f32.mrb[0].mxu0
        %v1058 = vadd.f32 0.0, %v1057
        %v1059 = vpop.f32.mrb[0].mxu0
        %v1060 = vadd.f32 0.0, %v1059
        %1061 = vmatprep.mubr.f32.mxu0 0.0
        %1062 = vmatmul.mubr.f32.gmra.mrb[0].mxu0 %v405
        %v1063 = vpop.f32.mrb[0].mxu0
        %v1064 = vadd.f32 0.0, %v1063
        %v1065 = vpop.f32.mrb[0].mxu0
        %v1066 = vadd.f32 0.0, %v1065
        %1067 = vmatprep.mubr.f32.mxu0 0.0
        %1068 = vmatmul.mubr.f32.gmra.mrb[0].mxu0 %v408
        %v1069 = vpop.f32.mrb[0].mxu0
        %v1070 = vadd.f32 0.0, %v1069
        %v1071 = vpop.f32.mrb[0].mxu0
        %v1072 = vadd.f32 0.0, %v1071
        %1073 = vmatprep.mubr.f32.mxu0 0.0
        %1074 = vmatmul.mubr.f32.gmra.mrb[0].mxu0 %v411
        %v1075 = vpop.f32.mrb[0].mxu0
        %v1076 = vadd.f32 0.0, %v1075
        %v1077 = vpop.f32.mrb[0].mxu0
        %v1078 = vadd.f32 0.0, %v1077
        %1079 = vmatprep.mubr.f32.mxu0 0.0
        %1080 = vmatmul.mubr.f32.gmra.mrb[0].mxu0 %v414
        %v1081 = vpop.f32.mrb[0].mxu0
        %v1082 = vadd.f32 0.0, %v1081
        %v1083 = vpop.f32.mrb[0].mxu0
        %v1084 = vadd.f32 0.0, %v1083
        %1085 = vmatprep.mubr.f32.mxu0 0.0
        %1086 = vmatmul.mubr.f32.gmra.mrb[0].mxu0 %v417
        %v1087 = vpop.f32.mrb[0].mxu0
        %v1088 = vadd.f32 0.0, %v1087
        %v1089 = vpop.f32.mrb[0].mxu0
        %v1090 = vadd.f32 0.0, %v1089
        %1091 = vmatprep.mubr.f32.mxu0 0.0
        %1092 = vmatmul.mubr.f32.gmra.mrb[0].mxu0 %v420
        %v1093 = vpop.f32.mrb[0].mxu0
        %v1094 = vadd.f32 0.0, %v1093
        %v1095 = vpop.f32.mrb[0].mxu0
        %v1096 = vadd.f32 0.0, %v1095
        %1097 = vmatprep.mubr.f32.mxu0 0.0
        %1098 = vmatmul.mubr.f32.gmra.mrb[0].mxu0 %v423
        %v1099 = vpop.f32.mrb[0].mxu0
        %v1100 = vadd.f32 0.0, %v1099
        %v1101 = vpop.f32.mrb[0].mxu0
        %v1102 = vadd.f32 0.0, %v1101
        %1103 = vmatprep.mubr.f32.mxu0 0.0
        %1104 = vmatmul.mubr.f32.gmra.mrb[0].mxu0 %v426
        %v1105 = vpop.f32.mrb[0].mxu0
        %v1106 = vadd.f32 0.0, %v1105
        %v1107 = vpop.f32.mrb[0].mxu0
        %v1108 = vadd.f32 0.0, %v1107
        %1109 = vmatprep.mubr.f32.mxu0 0.0
        %1110 = vmatmul.mubr.f32.gmra.mrb[0].mxu0 %v429
        %v1111 = vpop.f32.mrb[0].mxu0
        %v1112 = vadd.f32 0.0, %v1111
        %v1113 = vpop.f32.mrb[0].mxu0
        %v1114 = vadd.f32 0.0, %v1113
        %1115 = vmatprep.mubr.f32.mxu0 0.0
        %1116 = vmatmul.mubr.f32.gmra.mrb[0].mxu0 %v432
        %v1117 = vpop.f32.mrb[0].mxu0
        %v1118 = vadd.f32 0.0, %v1117
        %v1119 = vpop.f32.mrb[0].mxu0
        %v1120 = vadd.f32 0.0, %v1119
        %1121 = vmatprep.mubr.f32.mxu0 0.0
        %1122 = vmatmul.mubr.f32.gmra.mrb[0].mxu0 %v435
        %v1123 = vpop.f32.mrb[0].mxu0
        %v1124 = vadd.f32 0.0, %v1123
        %v1125 = vpop.f32.mrb[0].mxu0
        %v1126 = vadd.f32 0.0, %v1125
        %1127 = vmatprep.mubr.f32.mxu0 0.0
        %1128 = vmatmul.mubr.f32.gmra.mrb[0].mxu0 %v438
        %v1129 = vpop.f32.mrb[0].mxu0
        %v1130 = vadd.f32 0.0, %v1129
        %v1131 = vpop.f32.mrb[0].mxu0
        %v1132 = vadd.f32 0.0, %v1131
        %1133 = vmatprep.mubr.f32.mxu0 0.0
        %1134 = vmatmul.mubr.f32.gmra.mrb[0].mxu0 %v441
        %v1135 = vpop.f32.mrb[0].mxu0
        %v1136 = vadd.f32 0.0, %v1135
        %v1137 = vpop.f32.mrb[0].mxu0
        %v1138 = vadd.f32 0.0, %v1137
        %1139 = vmatprep.mubr.f32.mxu0 0.0
        %1140 = vmatmul.mubr.f32.gmra.mrb[0].mxu0 %v444
        %v1141 = vpop.f32.mrb[0].mxu0
        %v1142 = vadd.f32 0.0, %v1141
        %v1143 = vpop.f32.mrb[0].mxu0
        %v1144 = vadd.f32 0.0, %v1143
        %1145 = vmatprep.mubr.f32.mxu0 0.0
        %1146 = vmatmul.mubr.f32.gmra.mrb[0].mxu0 %v447
        %v1147 = vpop.f32.mrb[0].mxu0
        %v1148 = vadd.f32 0.0, %v1147
        %v1149 = vpop.f32.mrb[0].mxu0
        %v1150 = vadd.f32 0.0, %v1149
        %1151 = vmatprep.mubr.f32.mxu0 0.0
        %1152 = vmatmul.mubr.f32.gmra.mrb[0].mxu0 %v450
        %v1153 = vpop.f32.mrb[0].mxu0
        %v1154 = vadd.f32 0.0, %v1153
        %v1155 = vpop.f32.mrb[0].mxu0
        %v1156 = vadd.f32 0.0, %v1155
        %1157 = vmatprep.mubr.f32.mxu0 0.0
        %1158 = vmatmul.mubr.f32.gmra.mrb[0].mxu0 %v678
        %v1159 = vpop.f32.mrb[0].mxu0
        %v1160 = vadd.f32 0.0, %v1159
        %v1161 = vpop.f32.mrb[0].mxu0
        %v1162 = vadd.f32 0.0, %v1161
        %1163 = vmatprep.mubr.f32.mxu0 0.0
        %1164 = vmatmul.mubr.f32.gmra.mrb[0].mxu0 %v953
        %v1165 = vpop.f32.mrb[0].mxu0
        %v1166 = vadd.f32 0.0, %v1165
        %v1167 = vpop.f32.mrb[0].mxu0
        %v1168 = vadd.f32 0.0, %v1167
        %1169 = vdwg.mxu0
        %v1170 = vadd.f32 %v895, %v1028
        %v1171 = vadd.f32 %v896, %v1030
        %v1172 = vadd.f32 %v897, %v1034
        %v1173 = vadd.f32 %v898, %v1036
        %v1174 = vadd.f32 %v899, %v1040
        %v1175 = vadd.f32 %v900, %v1042
        %v1176 = vadd.f32 %v901, %v1046
        %v1177 = vadd.f32 %v902, %v1048
        %v1178 = vadd.f32 %v903, %v1052
        %v1179 = vadd.f32 %v904, %v1054
        %v1180 = vadd.f32 %v905, %v1058
        %v1181 = vadd.f32 %v906, %v1060
        %v1182 = vadd.f32 %v907, %v1064
        %v1183 = vadd.f32 %v908, %v1066
        %v1184 = vadd.f32 %v909, %v1070
        %v1185 = vadd.f32 %v910, %v1072
        %v1186 = vadd.f32 %v911, %v1076
        %v1187 = vadd.f32 %v912, %v1078
        %v1188 = vadd.f32 %v913, %v1082
        %v1189 = vadd.f32 %v914, %v1084
        %v1190 = vadd.f32 %v915, %v1088
        %v1191 = vadd.f32 %v916, %v1090
        %v1192 = vadd.f32 %v917, %v1094
        %v1193 = vadd.f32 %v918, %v1096
        %v1194 = vadd.f32 %v919, %v1100
        %v1195 = vadd.f32 %v920, %v1102
        %v1196 = vadd.f32 %v921, %v1106
        %v1197 = vadd.f32 %v922, %v1108
        %v1198 = vadd.f32 %v923, %v1112
        %v1199 = vadd.f32 %v924, %v1114
        %v1200 = vadd.f32 %v925, %v1118
        %v1201 = vadd.f32 %v926, %v1120
        %v1202 = vadd.f32 %v927, %v1124
        %v1203 = vadd.f32 %v928, %v1126
        %v1204 = vadd.f32 %v929, %v1130
        %v1205 = vadd.f32 %v930, %v1132
        %v1206 = vadd.f32 %v931, %v1136
        %v1207 = vadd.f32 %v932, %v1138
        %v1208 = vadd.f32 %v933, %v1142
        %v1209 = vadd.f32 %v934, %v1144
        %v1210 = vadd.f32 %v935, %v1148
        %v1211 = vadd.f32 %v936, %v1150
        %v1212 = vadd.f32 %v937, %v1154
        %v1213 = vadd.f32 %v938, %v1156
        %v1214 = vadd.f32 %v939, %v1160
        %v1215 = vadd.f32 %v940, %v1162
        %v1216 = vadd.f32 %v941, %v1166
        %v1217 = vadd.f32 %v942, %v1168
        %s1218 = scalar_lea.vmem %s1, 192
        %v1219 = vld [vmem:[%s1218] sm:$0xff]
        %v1220 = vld [vmem:[%s1218 + $0x8] sm:$0xff]
        %v1221 = vld [vmem:[%s1218 + $0x10] sm:$0xff]
        %v1222 = vld [vmem:[%s1218 + $0x18] sm:$0xff]
        %v1223 = vld [vmem:[%s1218 + $0x20] sm:$0xff]
        %v1224 = vld [vmem:[%s1218 + $0x28] sm:$0xff]
        %v1225 = vld [vmem:[%s1218 + $0x30] sm:$0xf]
        %v1226 = vld [vmem:[%s1218 + $0x38] sm:$0xf]
        %v1228 = vsel %vm379, %v357, 0
        %v1231 = vsel %vm452, %v1225, 0
        %v1234 = vsel %vm452, %v1226, 0
        %1236 = vmatprep.subr.mxu0 %v1220
        %1237 = vmatpush1.msra.mxu0 %v1219
        %1238 = vmatprep.subr.mxu0 %v1222
        %1239 = vmatpush1.msra.mxu0 %v1221
        %1240 = vmatprep.subr.mxu0 %v1224
        %1241 = vmatpush1.msra.mxu0 %v1223
        %1242 = vmatprep.subr.mxu0 %v1234
        %1243 = vmatpush1.msra.mxu0 %v1231
        %1244 = vmatprep.subr.mxu0 0.0
        %1245 = vmatpush1.msra.mxu0 0.0
        %1246 = vmatprep.subr.mxu0 0.0
        %1247 = vmatpush1.msra.mxu0 0.0
        %1248 = vmatprep.subr.mxu0 0.0
        %1249 = vmatpush1.msra.mxu0 0.0
        %1250 = vmatprep.subr.mxu0 0.0
        %1251 = vmatpush1.msra.mxu0 0.0
        %1252 = vmatprep.subr.mxu0 0.0
        %1253 = vmatpush1.msra.mxu0 0.0
        %1254 = vmatprep.subr.mxu0 0.0
        %1255 = vmatpush1.msra.mxu0 0.0
        %1256 = vmatprep.subr.mxu0 0.0
        %1257 = vmatpush1.msra.mxu0 0.0
        %1258 = vmatprep.subr.mxu0 0.0
        %1259 = vmatpush1.msra.mxu0 0.0
        %1260 = vmatprep.subr.mxu0 0.0
        %1261 = vmatpush1.msra.mxu0 0.0
        %1262 = vmatprep.subr.mxu0 0.0
        %1263 = vmatpush1.msra.mxu0 0.0
        %1264 = vmatprep.subr.mxu0 0.0
        %1265 = vmatpush1.msra.mxu0 0.0
        %1266 = vmatprep.subr.mxu0 0.0
        %1267 = vmatpush1.msra.mxu0 0.0
        %1268 = vmatprep.subr.mxu0 0.0
        %1269 = vmatpush1.msra.mxu0 0.0
        %1270 = vmatprep.subr.mxu0 0.0
        %1271 = vmatpush1.msra.mxu0 0.0
        %1272 = vmatprep.subr.mxu0 0.0
        %1273 = vmatpush1.msra.mxu0 0.0
        %1274 = vmatprep.subr.mxu0 0.0
        %1275 = vmatpush1.msra.mxu0 0.0
        %1276 = vmatprep.subr.mxu0 0.0
        %1277 = vmatpush1.msra.mxu0 0.0
        %1278 = vmatprep.subr.mxu0 0.0
        %1279 = vmatpush1.msra.mxu0 0.0
        %1280 = vmatprep.subr.mxu0 0.0
        %1281 = vmatpush1.msra.mxu0 0.0
        %1282 = vmatprep.subr.mxu0 0.0
        %1283 = vmatpush1.msra.mxu0 0.0
        %1284 = vmatprep.subr.mxu0 0.0
        %1285 = vmatpush1.msra.mxu0 0.0
        %1286 = vmatprep.subr.mxu0 0.0
        %1287 = vmatpush1.msra.mxu0 0.0
        %1288 = vmatprep.subr.mxu0 0.0
        %1289 = vmatpush1.msra.mxu0 0.0
        %1290 = vmatprep.subr.mxu0 0.0
        %1291 = vmatpush1.msra.mxu0 0.0
        %1292 = vmatprep.subr.mxu0 0.0
        %1293 = vmatpush1.msra.mxu0 0.0
        %1294 = vmatprep.subr.mxu0 0.0
        %1295 = vmatpush1.msra.mxu0 0.0
        %1296 = vmatprep.subr.mxu0 0.0
        %1297 = vmatpush1.msra.mxu0 0.0
        %1298 = vmatprep.subr.mxu0 0.0
        %1299 = vmatpush1.msra.mxu0 0.0
        %1300 = vmatprep.mubr.f32.mxu0 0.0
        %1301 = vmatmul.mubr.f32.gmra.mrb[0].mxu0 %v390
        %v1302 = vpop.f32.mrb[0].mxu0
        %v1303 = vadd.f32 0.0, %v1302
        %v1304 = vpop.f32.mrb[0].mxu0
        %v1305 = vadd.f32 0.0, %v1304
        %1306 = vmatprep.mubr.f32.mxu0 0.0
        %1307 = vmatmul.mubr.f32.gmra.mrb[0].mxu0 %v393
        %v1308 = vpop.f32.mrb[0].mxu0
        %v1309 = vadd.f32 0.0, %v1308
        %v1310 = vpop.f32.mrb[0].mxu0
        %v1311 = vadd.f32 0.0, %v1310
        %1312 = vmatprep.mubr.f32.mxu0 0.0
        %1313 = vmatmul.mubr.f32.gmra.mrb[0].mxu0 %v396
        %v1314 = vpop.f32.mrb[0].mxu0
        %v1315 = vadd.f32 0.0, %v1314
        %v1316 = vpop.f32.mrb[0].mxu0
        %v1317 = vadd.f32 0.0, %v1316
        %1318 = vmatprep.mubr.f32.mxu0 0.0
        %1319 = vmatmul.mubr.f32.gmra.mrb[0].mxu0 %v399
        %v1320 = vpop.f32.mrb[0].mxu0
        %v1321 = vadd.f32 0.0, %v1320
        %v1322 = vpop.f32.mrb[0].mxu0
        %v1323 = vadd.f32 0.0, %v1322
        %1324 = vmatprep.mubr.f32.mxu0 0.0
        %1325 = vmatmul.mubr.f32.gmra.mrb[0].mxu0 %v402
        %v1326 = vpop.f32.mrb[0].mxu0
        %v1327 = vadd.f32 0.0, %v1326
        %v1328 = vpop.f32.mrb[0].mxu0
        %v1329 = vadd.f32 0.0, %v1328
        %1330 = vmatprep.mubr.f32.mxu0 0.0
        %1331 = vmatmul.mubr.f32.gmra.mrb[0].mxu0 %v405
        %v1332 = vpop.f32.mrb[0].mxu0
        %v1333 = vadd.f32 0.0, %v1332
        %v1334 = vpop.f32.mrb[0].mxu0
        %v1335 = vadd.f32 0.0, %v1334
        %1336 = vmatprep.mubr.f32.mxu0 0.0
        %1337 = vmatmul.mubr.f32.gmra.mrb[0].mxu0 %v408
        %v1338 = vpop.f32.mrb[0].mxu0
        %v1339 = vadd.f32 0.0, %v1338
        %v1340 = vpop.f32.mrb[0].mxu0
        %v1341 = vadd.f32 0.0, %v1340
        %1342 = vmatprep.mubr.f32.mxu0 0.0
        %1343 = vmatmul.mubr.f32.gmra.mrb[0].mxu0 %v411
        %v1344 = vpop.f32.mrb[0].mxu0
        %v1345 = vadd.f32 0.0, %v1344
        %v1346 = vpop.f32.mrb[0].mxu0
        %v1347 = vadd.f32 0.0, %v1346
        %1348 = vmatprep.mubr.f32.mxu0 0.0
        %1349 = vmatmul.mubr.f32.gmra.mrb[0].mxu0 %v414
        %v1350 = vpop.f32.mrb[0].mxu0
        %v1351 = vadd.f32 0.0, %v1350
        %v1352 = vpop.f32.mrb[0].mxu0
        %v1353 = vadd.f32 0.0, %v1352
        %1354 = vmatprep.mubr.f32.mxu0 0.0
        %1355 = vmatmul.mubr.f32.gmra.mrb[0].mxu0 %v417
        %v1356 = vpop.f32.mrb[0].mxu0
        %v1357 = vadd.f32 0.0, %v1356
        %v1358 = vpop.f32.mrb[0].mxu0
        %v1359 = vadd.f32 0.0, %v1358
        %1360 = vmatprep.mubr.f32.mxu0 0.0
        %1361 = vmatmul.mubr.f32.gmra.mrb[0].mxu0 %v420
        %v1362 = vpop.f32.mrb[0].mxu0
        %v1363 = vadd.f32 0.0, %v1362
        %v1364 = vpop.f32.mrb[0].mxu0
        %v1365 = vadd.f32 0.0, %v1364
        %1366 = vmatprep.mubr.f32.mxu0 0.0
        %1367 = vmatmul.mubr.f32.gmra.mrb[0].mxu0 %v423
        %v1368 = vpop.f32.mrb[0].mxu0
        %v1369 = vadd.f32 0.0, %v1368
        %v1370 = vpop.f32.mrb[0].mxu0
        %v1371 = vadd.f32 0.0, %v1370
        %1372 = vmatprep.mubr.f32.mxu0 0.0
        %1373 = vmatmul.mubr.f32.gmra.mrb[0].mxu0 %v426
        %v1374 = vpop.f32.mrb[0].mxu0
        %v1375 = vadd.f32 0.0, %v1374
        %v1376 = vpop.f32.mrb[0].mxu0
        %v1377 = vadd.f32 0.0, %v1376
        %1378 = vmatprep.mubr.f32.mxu0 0.0
        %1379 = vmatmul.mubr.f32.gmra.mrb[0].mxu0 %v429
        %v1380 = vpop.f32.mrb[0].mxu0
        %v1381 = vadd.f32 0.0, %v1380
        %v1382 = vpop.f32.mrb[0].mxu0
        %v1383 = vadd.f32 0.0, %v1382
        %1384 = vmatprep.mubr.f32.mxu0 0.0
        %1385 = vmatmul.mubr.f32.gmra.mrb[0].mxu0 %v432
        %v1386 = vpop.f32.mrb[0].mxu0
        %v1387 = vadd.f32 0.0, %v1386
        %v1388 = vpop.f32.mrb[0].mxu0
        %v1389 = vadd.f32 0.0, %v1388
        %1390 = vmatprep.mubr.f32.mxu0 0.0
        %1391 = vmatmul.mubr.f32.gmra.mrb[0].mxu0 %v435
        %v1392 = vpop.f32.mrb[0].mxu0
        %v1393 = vadd.f32 0.0, %v1392
        %v1394 = vpop.f32.mrb[0].mxu0
        %v1395 = vadd.f32 0.0, %v1394
        %1396 = vmatprep.mubr.f32.mxu0 0.0
        %1397 = vmatmul.mubr.f32.gmra.mrb[0].mxu0 %v438
        %v1398 = vpop.f32.mrb[0].mxu0
        %v1399 = vadd.f32 0.0, %v1398
        %v1400 = vpop.f32.mrb[0].mxu0
        %v1401 = vadd.f32 0.0, %v1400
        %1402 = vmatprep.mubr.f32.mxu0 0.0
        %1403 = vmatmul.mubr.f32.gmra.mrb[0].mxu0 %v441
        %v1404 = vpop.f32.mrb[0].mxu0
        %v1405 = vadd.f32 0.0, %v1404
        %v1406 = vpop.f32.mrb[0].mxu0
        %v1407 = vadd.f32 0.0, %v1406
        %1408 = vmatprep.mubr.f32.mxu0 0.0
        %1409 = vmatmul.mubr.f32.gmra.mrb[0].mxu0 %v444
        %v1410 = vpop.f32.mrb[0].mxu0
        %v1411 = vadd.f32 0.0, %v1410
        %v1412 = vpop.f32.mrb[0].mxu0
        %v1413 = vadd.f32 0.0, %v1412
        %1414 = vmatprep.mubr.f32.mxu0 0.0
        %1415 = vmatmul.mubr.f32.gmra.mrb[0].mxu0 %v447
        %v1416 = vpop.f32.mrb[0].mxu0
        %v1417 = vadd.f32 0.0, %v1416
        %v1418 = vpop.f32.mrb[0].mxu0
        %v1419 = vadd.f32 0.0, %v1418
        %1420 = vmatprep.mubr.f32.mxu0 0.0
        %1421 = vmatmul.mubr.f32.gmra.mrb[0].mxu0 %v450
        %v1422 = vpop.f32.mrb[0].mxu0
        %v1423 = vadd.f32 0.0, %v1422
        %v1424 = vpop.f32.mrb[0].mxu0
        %v1425 = vadd.f32 0.0, %v1424
        %1426 = vmatprep.mubr.f32.mxu0 0.0
        %1427 = vmatmul.mubr.f32.gmra.mrb[0].mxu0 %v678
        %v1428 = vpop.f32.mrb[0].mxu0
        %v1429 = vadd.f32 0.0, %v1428
        %v1430 = vpop.f32.mrb[0].mxu0
        %v1431 = vadd.f32 0.0, %v1430
        %1432 = vmatprep.mubr.f32.mxu0 0.0
        %1433 = vmatmul.mubr.f32.gmra.mrb[0].mxu0 %v953
        %v1434 = vpop.f32.mrb[0].mxu0
        %v1435 = vadd.f32 0.0, %v1434
        %v1436 = vpop.f32.mrb[0].mxu0
        %v1437 = vadd.f32 0.0, %v1436
        %1438 = vmatprep.mubr.f32.mxu0 0.0
        %1439 = vmatmul.mubr.f32.gmra.mrb[0].mxu0 %v1228
        %v1440 = vpop.f32.mrb[0].mxu0
        %v1441 = vadd.f32 0.0, %v1440
        %v1442 = vpop.f32.mrb[0].mxu0
        %v1443 = vadd.f32 0.0, %v1442
        %1444 = vdwg.mxu0
        %v1445 = vadd.f32 %v1170, %v1303
        %v1446 = vadd.f32 %v1171, %v1305
        %v1447 = vadd.f32 %v1172, %v1309
        %v1448 = vadd.f32 %v1173, %v1311
        %v1449 = vadd.f32 %v1174, %v1315
        %v1450 = vadd.f32 %v1175, %v1317
        %v1451 = vadd.f32 %v1176, %v1321
        %v1452 = vadd.f32 %v1177, %v1323
        %v1453 = vadd.f32 %v1178, %v1327
        %v1454 = vadd.f32 %v1179, %v1329
        %v1455 = vadd.f32 %v1180, %v1333
        %v1456 = vadd.f32 %v1181, %v1335
        %v1457 = vadd.f32 %v1182, %v1339
        %v1458 = vadd.f32 %v1183, %v1341
        %v1459 = vadd.f32 %v1184, %v1345
        %v1460 = vadd.f32 %v1185, %v1347
        %v1461 = vadd.f32 %v1186, %v1351
        %v1462 = vadd.f32 %v1187, %v1353
        %v1463 = vadd.f32 %v1188, %v1357
        %v1464 = vadd.f32 %v1189, %v1359
        %v1465 = vadd.f32 %v1190, %v1363
        %v1466 = vadd.f32 %v1191, %v1365
        %v1467 = vadd.f32 %v1192, %v1369
        %v1468 = vadd.f32 %v1193, %v1371
        %v1469 = vadd.f32 %v1194, %v1375
        %v1470 = vadd.f32 %v1195, %v1377
        %v1471 = vadd.f32 %v1196, %v1381
        %v1472 = vadd.f32 %v1197, %v1383
        %v1473 = vadd.f32 %v1198, %v1387
        %v1474 = vadd.f32 %v1199, %v1389
        %v1475 = vadd.f32 %v1200, %v1393
        %v1476 = vadd.f32 %v1201, %v1395
        %v1477 = vadd.f32 %v1202, %v1399
        %v1478 = vadd.f32 %v1203, %v1401
        %v1479 = vadd.f32 %v1204, %v1405
        %v1480 = vadd.f32 %v1205, %v1407
        %v1481 = vadd.f32 %v1206, %v1411
        %v1482 = vadd.f32 %v1207, %v1413
        %v1483 = vadd.f32 %v1208, %v1417
        %v1484 = vadd.f32 %v1209, %v1419
        %v1485 = vadd.f32 %v1210, %v1423
        %v1486 = vadd.f32 %v1211, %v1425
        %v1487 = vadd.f32 %v1212, %v1429
        %v1488 = vadd.f32 %v1213, %v1431
        %v1489 = vadd.f32 %v1214, %v1435
        %v1490 = vadd.f32 %v1215, %v1437
        %v1491 = vadd.f32 %v1216, %v1441
        %v1492 = vadd.f32 %v1217, %v1443
        %s1493 = scalar_lea.vmem %s1, 256
        %v1494 = vld [vmem:[%s1493] sm:$0xff]
        %v1495 = vld [vmem:[%s1493 + $0x8] sm:$0xff]
        %v1496 = vld [vmem:[%s1493 + $0x10] sm:$0xff]
        %v1497 = vld [vmem:[%s1493 + $0x18] sm:$0xff]
        %v1498 = vld [vmem:[%s1493 + $0x20] sm:$0xff]
        %v1499 = vld [vmem:[%s1493 + $0x28] sm:$0xff]
        %v1500 = vld [vmem:[%s1493 + $0x30] sm:$0xf]
        %v1501 = vld [vmem:[%s1493 + $0x38] sm:$0xf]
        %v1503 = vsel %vm379, %v358, 0
        %v1506 = vsel %vm452, %v1500, 0
        %v1509 = vsel %vm452, %v1501, 0
        %1511 = vmatprep.subr.mxu0 %v1495
        %1512 = vmatpush1.msra.mxu0 %v1494
        %1513 = vmatprep.subr.mxu0 %v1497
        %1514 = vmatpush1.msra.mxu0 %v1496
        %1515 = vmatprep.subr.mxu0 %v1499
        %1516 = vmatpush1.msra.mxu0 %v1498
        %1517 = vmatprep.subr.mxu0 %v1509
        %1518 = vmatpush1.msra.mxu0 %v1506
        %1519 = vmatprep.subr.mxu0 0.0
        %1520 = vmatpush1.msra.mxu0 0.0
        %1521 = vmatprep.subr.mxu0 0.0
        %1522 = vmatpush1.msra.mxu0 0.0
        %1523 = vmatprep.subr.mxu0 0.0
        %1524 = vmatpush1.msra.mxu0 0.0
        %1525 = vmatprep.subr.mxu0 0.0
        %1526 = vmatpush1.msra.mxu0 0.0
        %1527 = vmatprep.subr.mxu0 0.0
        %1528 = vmatpush1.msra.mxu0 0.0
        %1529 = vmatprep.subr.mxu0 0.0
        %1530 = vmatpush1.msra.mxu0 0.0
        %1531 = vmatprep.subr.mxu0 0.0
        %1532 = vmatpush1.msra.mxu0 0.0
        %1533 = vmatprep.subr.mxu0 0.0
        %1534 = vmatpush1.msra.mxu0 0.0
        %1535 = vmatprep.subr.mxu0 0.0
        %1536 = vmatpush1.msra.mxu0 0.0
        %1537 = vmatprep.subr.mxu0 0.0
        %1538 = vmatpush1.msra.mxu0 0.0
        %1539 = vmatprep.subr.mxu0 0.0
        %1540 = vmatpush1.msra.mxu0 0.0
        %1541 = vmatprep.subr.mxu0 0.0
        %1542 = vmatpush1.msra.mxu0 0.0
        %1543 = vmatprep.subr.mxu0 0.0
        %1544 = vmatpush1.msra.mxu0 0.0
        %1545 = vmatprep.subr.mxu0 0.0
        %1546 = vmatpush1.msra.mxu0 0.0
        %1547 = vmatprep.subr.mxu0 0.0
        %1548 = vmatpush1.msra.mxu0 0.0
        %1549 = vmatprep.subr.mxu0 0.0
        %1550 = vmatpush1.msra.mxu0 0.0
        %1551 = vmatprep.subr.mxu0 0.0
        %1552 = vmatpush1.msra.mxu0 0.0
        %1553 = vmatprep.subr.mxu0 0.0
        %1554 = vmatpush1.msra.mxu0 0.0
        %1555 = vmatprep.subr.mxu0 0.0
        %1556 = vmatpush1.msra.mxu0 0.0
        %1557 = vmatprep.subr.mxu0 0.0
        %1558 = vmatpush1.msra.mxu0 0.0
        %1559 = vmatprep.subr.mxu0 0.0
        %1560 = vmatpush1.msra.mxu0 0.0
        %1561 = vmatprep.subr.mxu0 0.0
        %1562 = vmatpush1.msra.mxu0 0.0
        %1563 = vmatprep.subr.mxu0 0.0
        %1564 = vmatpush1.msra.mxu0 0.0
        %1565 = vmatprep.subr.mxu0 0.0
        %1566 = vmatpush1.msra.mxu0 0.0
        %1567 = vmatprep.subr.mxu0 0.0
        %1568 = vmatpush1.msra.mxu0 0.0
        %1569 = vmatprep.subr.mxu0 0.0
        %1570 = vmatpush1.msra.mxu0 0.0
        %1571 = vmatprep.subr.mxu0 0.0
        %1572 = vmatpush1.msra.mxu0 0.0
        %1573 = vmatprep.subr.mxu0 0.0
        %1574 = vmatpush1.msra.mxu0 0.0
        %1575 = vmatprep.mubr.f32.mxu0 0.0
        %1576 = vmatmul.mubr.f32.gmra.mrb[0].mxu0 %v393
        %v1577 = vpop.f32.mrb[0].mxu0
        %v1578 = vadd.f32 0.0, %v1577
        %v1579 = vpop.f32.mrb[0].mxu0
        %v1580 = vadd.f32 0.0, %v1579
        %1581 = vmatprep.mubr.f32.mxu0 0.0
        %1582 = vmatmul.mubr.f32.gmra.mrb[0].mxu0 %v396
        %v1583 = vpop.f32.mrb[0].mxu0
        %v1584 = vadd.f32 0.0, %v1583
        %v1585 = vpop.f32.mrb[0].mxu0
        %v1586 = vadd.f32 0.0, %v1585
        %1587 = vmatprep.mubr.f32.mxu0 0.0
        %1588 = vmatmul.mubr.f32.gmra.mrb[0].mxu0 %v399
        %v1589 = vpop.f32.mrb[0].mxu0
        %v1590 = vadd.f32 0.0, %v1589
        %v1591 = vpop.f32.mrb[0].mxu0
        %v1592 = vadd.f32 0.0, %v1591
        %1593 = vmatprep.mubr.f32.mxu0 0.0
        %1594 = vmatmul.mubr.f32.gmra.mrb[0].mxu0 %v402
        %v1595 = vpop.f32.mrb[0].mxu0
        %v1596 = vadd.f32 0.0, %v1595
        %v1597 = vpop.f32.mrb[0].mxu0
        %v1598 = vadd.f32 0.0, %v1597
        %1599 = vmatprep.mubr.f32.mxu0 0.0
        %1600 = vmatmul.mubr.f32.gmra.mrb[0].mxu0 %v405
        %v1601 = vpop.f32.mrb[0].mxu0
        %v1602 = vadd.f32 0.0, %v1601
        %v1603 = vpop.f32.mrb[0].mxu0
        %v1604 = vadd.f32 0.0, %v1603
        %1605 = vmatprep.mubr.f32.mxu0 0.0
        %1606 = vmatmul.mubr.f32.gmra.mrb[0].mxu0 %v408
        %v1607 = vpop.f32.mrb[0].mxu0
        %v1608 = vadd.f32 0.0, %v1607
        %v1609 = vpop.f32.mrb[0].mxu0
        %v1610 = vadd.f32 0.0, %v1609
        %1611 = vmatprep.mubr.f32.mxu0 0.0
        %1612 = vmatmul.mubr.f32.gmra.mrb[0].mxu0 %v411
        %v1613 = vpop.f32.mrb[0].mxu0
        %v1614 = vadd.f32 0.0, %v1613
        %v1615 = vpop.f32.mrb[0].mxu0
        %v1616 = vadd.f32 0.0, %v1615
        %1617 = vmatprep.mubr.f32.mxu0 0.0
        %1618 = vmatmul.mubr.f32.gmra.mrb[0].mxu0 %v414
        %v1619 = vpop.f32.mrb[0].mxu0
        %v1620 = vadd.f32 0.0, %v1619
        %v1621 = vpop.f32.mrb[0].mxu0
        %v1622 = vadd.f32 0.0, %v1621
        %1623 = vmatprep.mubr.f32.mxu0 0.0
        %1624 = vmatmul.mubr.f32.gmra.mrb[0].mxu0 %v417
        %v1625 = vpop.f32.mrb[0].mxu0
        %v1626 = vadd.f32 0.0, %v1625
        %v1627 = vpop.f32.mrb[0].mxu0
        %v1628 = vadd.f32 0.0, %v1627
        %1629 = vmatprep.mubr.f32.mxu0 0.0
        %1630 = vmatmul.mubr.f32.gmra.mrb[0].mxu0 %v420
        %v1631 = vpop.f32.mrb[0].mxu0
        %v1632 = vadd.f32 0.0, %v1631
        %v1633 = vpop.f32.mrb[0].mxu0
        %v1634 = vadd.f32 0.0, %v1633
        %1635 = vmatprep.mubr.f32.mxu0 0.0
        %1636 = vmatmul.mubr.f32.gmra.mrb[0].mxu0 %v423
        %v1637 = vpop.f32.mrb[0].mxu0
        %v1638 = vadd.f32 0.0, %v1637
        %v1639 = vpop.f32.mrb[0].mxu0
        %v1640 = vadd.f32 0.0, %v1639
        %1641 = vmatprep.mubr.f32.mxu0 0.0
        %1642 = vmatmul.mubr.f32.gmra.mrb[0].mxu0 %v426
        %v1643 = vpop.f32.mrb[0].mxu0
        %v1644 = vadd.f32 0.0, %v1643
        %v1645 = vpop.f32.mrb[0].mxu0
        %v1646 = vadd.f32 0.0, %v1645
        %1647 = vmatprep.mubr.f32.mxu0 0.0
        %1648 = vmatmul.mubr.f32.gmra.mrb[0].mxu0 %v429
        %v1649 = vpop.f32.mrb[0].mxu0
        %v1650 = vadd.f32 0.0, %v1649
        %v1651 = vpop.f32.mrb[0].mxu0
        %v1652 = vadd.f32 0.0, %v1651
        %1653 = vmatprep.mubr.f32.mxu0 0.0
        %1654 = vmatmul.mubr.f32.gmra.mrb[0].mxu0 %v432
        %v1655 = vpop.f32.mrb[0].mxu0
        %v1656 = vadd.f32 0.0, %v1655
        %v1657 = vpop.f32.mrb[0].mxu0
        %v1658 = vadd.f32 0.0, %v1657
        %1659 = vmatprep.mubr.f32.mxu0 0.0
        %1660 = vmatmul.mubr.f32.gmra.mrb[0].mxu0 %v435
        %v1661 = vpop.f32.mrb[0].mxu0
        %v1662 = vadd.f32 0.0, %v1661
        %v1663 = vpop.f32.mrb[0].mxu0
        %v1664 = vadd.f32 0.0, %v1663
        %1665 = vmatprep.mubr.f32.mxu0 0.0
        %1666 = vmatmul.mubr.f32.gmra.mrb[0].mxu0 %v438
        %v1667 = vpop.f32.mrb[0].mxu0
        %v1668 = vadd.f32 0.0, %v1667
        %v1669 = vpop.f32.mrb[0].mxu0
        %v1670 = vadd.f32 0.0, %v1669
        %1671 = vmatprep.mubr.f32.mxu0 0.0
        %1672 = vmatmul.mubr.f32.gmra.mrb[0].mxu0 %v441
        %v1673 = vpop.f32.mrb[0].mxu0
        %v1674 = vadd.f32 0.0, %v1673
        %v1675 = vpop.f32.mrb[0].mxu0
        %v1676 = vadd.f32 0.0, %v1675
        %1677 = vmatprep.mubr.f32.mxu0 0.0
        %1678 = vmatmul.mubr.f32.gmra.mrb[0].mxu0 %v444
        %v1679 = vpop.f32.mrb[0].mxu0
        %v1680 = vadd.f32 0.0, %v1679
        %v1681 = vpop.f32.mrb[0].mxu0
        %v1682 = vadd.f32 0.0, %v1681
        %1683 = vmatprep.mubr.f32.mxu0 0.0
        %1684 = vmatmul.mubr.f32.gmra.mrb[0].mxu0 %v447
        %v1685 = vpop.f32.mrb[0].mxu0
        %v1686 = vadd.f32 0.0, %v1685
        %v1687 = vpop.f32.mrb[0].mxu0
        %v1688 = vadd.f32 0.0, %v1687
        %1689 = vmatprep.mubr.f32.mxu0 0.0
        %1690 = vmatmul.mubr.f32.gmra.mrb[0].mxu0 %v450
        %v1691 = vpop.f32.mrb[0].mxu0
        %v1692 = vadd.f32 0.0, %v1691
        %v1693 = vpop.f32.mrb[0].mxu0
        %v1694 = vadd.f32 0.0, %v1693
        %1695 = vmatprep.mubr.f32.mxu0 0.0
        %1696 = vmatmul.mubr.f32.gmra.mrb[0].mxu0 %v678
        %v1697 = vpop.f32.mrb[0].mxu0
        %v1698 = vadd.f32 0.0, %v1697
        %v1699 = vpop.f32.mrb[0].mxu0
        %v1700 = vadd.f32 0.0, %v1699
        %1701 = vmatprep.mubr.f32.mxu0 0.0
        %1702 = vmatmul.mubr.f32.gmra.mrb[0].mxu0 %v953
        %v1703 = vpop.f32.mrb[0].mxu0
        %v1704 = vadd.f32 0.0, %v1703
        %v1705 = vpop.f32.mrb[0].mxu0
        %v1706 = vadd.f32 0.0, %v1705
        %1707 = vmatprep.mubr.f32.mxu0 0.0
        %1708 = vmatmul.mubr.f32.gmra.mrb[0].mxu0 %v1228
        %v1709 = vpop.f32.mrb[0].mxu0
        %v1710 = vadd.f32 0.0, %v1709
        %v1711 = vpop.f32.mrb[0].mxu0
        %v1712 = vadd.f32 0.0, %v1711
        %1713 = vmatprep.mubr.f32.mxu0 0.0
        %1714 = vmatmul.mubr.f32.gmra.mrb[0].mxu0 %v1503
        %v1715 = vpop.f32.mrb[0].mxu0
        %v1716 = vadd.f32 0.0, %v1715
        %v1717 = vpop.f32.mrb[0].mxu0
        %v1718 = vadd.f32 0.0, %v1717
        %1719 = vdwg.mxu0
        %v1720 = vadd.f32 %v1445, %v1578
        %v1721 = vadd.f32 %v1446, %v1580
        %v1722 = vadd.f32 %v1447, %v1584
        %v1723 = vadd.f32 %v1448, %v1586
        %v1724 = vadd.f32 %v1449, %v1590
        %v1725 = vadd.f32 %v1450, %v1592
        %v1726 = vadd.f32 %v1451, %v1596
        %v1727 = vadd.f32 %v1452, %v1598
        %v1728 = vadd.f32 %v1453, %v1602
        %v1729 = vadd.f32 %v1454, %v1604
        %v1730 = vadd.f32 %v1455, %v1608
        %v1731 = vadd.f32 %v1456, %v1610
        %v1732 = vadd.f32 %v1457, %v1614
        %v1733 = vadd.f32 %v1458, %v1616
        %v1734 = vadd.f32 %v1459, %v1620
        %v1735 = vadd.f32 %v1460, %v1622
        %v1736 = vadd.f32 %v1461, %v1626
        %v1737 = vadd.f32 %v1462, %v1628
        %v1738 = vadd.f32 %v1463, %v1632
        %v1739 = vadd.f32 %v1464, %v1634
        %v1740 = vadd.f32 %v1465, %v1638
        %v1741 = vadd.f32 %v1466, %v1640
        %v1742 = vadd.f32 %v1467, %v1644
        %v1743 = vadd.f32 %v1468, %v1646
        %v1744 = vadd.f32 %v1469, %v1650
        %v1745 = vadd.f32 %v1470, %v1652
        %v1746 = vadd.f32 %v1471, %v1656
        %v1747 = vadd.f32 %v1472, %v1658
        %v1748 = vadd.f32 %v1473, %v1662
        %v1749 = vadd.f32 %v1474, %v1664
        %v1750 = vadd.f32 %v1475, %v1668
        %v1751 = vadd.f32 %v1476, %v1670
        %v1752 = vadd.f32 %v1477, %v1674
        %v1753 = vadd.f32 %v1478, %v1676
        %v1754 = vadd.f32 %v1479, %v1680
        %v1755 = vadd.f32 %v1480, %v1682
        %v1756 = vadd.f32 %v1481, %v1686
        %v1757 = vadd.f32 %v1482, %v1688
        %v1758 = vadd.f32 %v1483, %v1692
        %v1759 = vadd.f32 %v1484, %v1694
        %v1760 = vadd.f32 %v1485, %v1698
        %v1761 = vadd.f32 %v1486, %v1700
        %v1762 = vadd.f32 %v1487, %v1704
        %v1763 = vadd.f32 %v1488, %v1706
        %v1764 = vadd.f32 %v1489, %v1710
        %v1765 = vadd.f32 %v1490, %v1712
        %v1766 = vadd.f32 %v1491, %v1716
        %v1767 = vadd.f32 %v1492, %v1718
        %v1768 = vmax.f32 %v1720, %v1722
        %v1769 = vmax.f32 %v1721, %v1723
        %v1770 = vmax.f32 %v1724, %v1726
        %v1771 = vmax.f32 %v1725, %v1727
        %v1772 = vmax.f32 %v1728, %v1730
        %v1773 = vmax.f32 %v1729, %v1731
        %v1774 = vmax.f32 %v1732, %v1734
        %v1775 = vmax.f32 %v1733, %v1735
        %v1776 = vmax.f32 %v1736, %v1738
        %v1777 = vmax.f32 %v1737, %v1739
        %v1778 = vmax.f32 %v1740, %v1742
        %v1779 = vmax.f32 %v1741, %v1743
        %v1780 = vmax.f32 %v1744, %v1746
        %v1781 = vmax.f32 %v1745, %v1747
        %v1782 = vmax.f32 %v1748, %v1750
        %v1783 = vmax.f32 %v1749, %v1751
        %v1784 = vmax.f32 %v1752, %v1754
        %v1785 = vmax.f32 %v1753, %v1755
        %v1786 = vmax.f32 %v1756, %v1758
        %v1787 = vmax.f32 %v1757, %v1759
        %v1788 = vmax.f32 %v1760, %v1762
        %v1789 = vmax.f32 %v1761, %v1763
        %v1790 = vmax.f32 %v1764, %v1766
        %v1791 = vmax.f32 %v1765, %v1767
        %v1792 = vld [vmem:[%s3] sm:$0xff]
        %v1793 = vld [vmem:[%s3 + $0x8] sm:$0xff]
        %v1794 = vld [vmem:[%s3 + $0x10] sm:$0xff]
        %v1795 = vld [vmem:[%s3 + $0x18] sm:$0xff]
        %v1796 = vld [vmem:[%s3 + $0x20] sm:$0xff]
        %v1797 = vld [vmem:[%s3 + $0x28] sm:$0xff]
        %v1798 = vld [vmem:[%s3 + $0x30] sm:$0xff]
        %v1799 = vld [vmem:[%s3 + $0x38] sm:$0xff]
        %v1800 = vld [vmem:[%s3 + $0x40] sm:$0xff]
        %v1801 = vld [vmem:[%s3 + $0x48] sm:$0xff]
        %v1802 = vld [vmem:[%s3 + $0x50] sm:$0xff]
        %v1803 = vld [vmem:[%s3 + $0x58] sm:$0xff]
        %v1804 = vld [vmem:[%s3 + $0x60] sm:$0xff]
        %v1805 = vld [vmem:[%s3 + $0x68] sm:$0xff]
        %v1806 = vld [vmem:[%s3 + $0x70] sm:$0xff]
        %v1807 = vld [vmem:[%s3 + $0x78] sm:$0xff]
        %v1808 = vld [vmem:[%s3 + $0x80] sm:$0xff]
        %v1809 = vld [vmem:[%s3 + $0x88] sm:$0xff]
        %v1810 = vld [vmem:[%s3 + $0x90] sm:$0xff]
        %v1811 = vld [vmem:[%s3 + $0x98] sm:$0xff]
        %v1812 = vld [vmem:[%s3 + $0xa0] sm:$0xff]
        %v1813 = vld [vmem:[%s3 + $0xa8] sm:$0xff]
        %v1814 = vld [vmem:[%s3 + $0xb0] sm:$0xff]
        %v1815 = vld [vmem:[%s3 + $0xb8] sm:$0xff]
        %v1816 = vld [vmem:[%s3 + $0xc0] sm:$0xff]
        %v1817 = vld [vmem:[%s3 + $0xc8] sm:$0xff]
        %v1818 = vld [vmem:[%s3 + $0xd0] sm:$0xff]
        %v1819 = vld [vmem:[%s3 + $0xd8] sm:$0xff]
        %v1820 = vld [vmem:[%s3 + $0xe0] sm:$0xff]
        %v1821 = vld [vmem:[%s3 + $0xe8] sm:$0xff]
        %v1822 = vld [vmem:[%s3 + $0xf0] sm:$0xff]
        %v1823 = vld [vmem:[%s3 + $0xf8] sm:$0xff]
        %v1824 = vld [vmem:[%s3 + $0x100] sm:$0xff]
        %v1825 = vld [vmem:[%s3 + $0x108] sm:$0xff]
        %v1826 = vld [vmem:[%s3 + $0x110] sm:$0xff]
        %v1827 = vld [vmem:[%s3 + $0x118] sm:$0xff]
        %v1828 = vld [vmem:[%s3 + $0x120] sm:$0xff]
        %v1829 = vld [vmem:[%s3 + $0x128] sm:$0xff]
        %v1830 = vld [vmem:[%s3 + $0x130] sm:$0xff]
        %v1831 = vld [vmem:[%s3 + $0x138] sm:$0xff]
        %v1832 = vld [vmem:[%s3 + $0x140] sm:$0xff]
        %v1833 = vld [vmem:[%s3 + $0x148] sm:$0xff]
        %v1834 = vld [vmem:[%s3 + $0x150] sm:$0xff]
        %v1835 = vld [vmem:[%s3 + $0x158] sm:$0xff]
        %v1836 = vld [vmem:[%s3 + $0x160] sm:$0xff]
        %v1837 = vld [vmem:[%s3 + $0x168] sm:$0xff]
        %v1838 = vld [vmem:[%s3 + $0x170] sm:$0xff]
        %v1839 = vld [vmem:[%s3 + $0x178] sm:$0xff]
        %v1840 = vld [vmem:[%s3 + $0x180] sm:$0xff]
        %v1841 = vld [vmem:[%s3 + $0x188] sm:$0xff]
        %v1842 = vld [vmem:[%s3 + $0x190] sm:$0xff]
        %v1843 = vld [vmem:[%s3 + $0x198] sm:$0xff]
        %v1844 = vld [vmem:[%s3 + $0x1a0] sm:$0xff]
        %v1845 = vld [vmem:[%s3 + $0x1a8] sm:$0xff]
        %v1846 = vld [vmem:[%s3 + $0x1b0] sm:$0xff]
        %v1847 = vld [vmem:[%s3 + $0x1b8] sm:$0xff]
        %v1848 = vld [vmem:[%s3 + $0x1c0] sm:$0xff]
        %v1849 = vld [vmem:[%s3 + $0x1c8] sm:$0xff]
        %v1850 = vld [vmem:[%s3 + $0x1d0] sm:$0xff]
        %v1851 = vld [vmem:[%s3 + $0x1d8] sm:$0xff]
        %vm1852 = vcmask 916480
        %v1854 = vsel %vm1852, %v1769, 0
        %v1857 = vsel %vm1852, %v1771, 0
        %v1860 = vsel %vm1852, %v1773, 0
        %v1863 = vsel %vm1852, %v1775, 0
        %v1866 = vsel %vm1852, %v1777, 0
        %v1869 = vsel %vm1852, %v1779, 0
        %v1872 = vsel %vm1852, %v1781, 0
        %v1875 = vsel %vm1852, %v1783, 0
        %v1878 = vsel %vm1852, %v1785, 0
        %v1881 = vsel %vm1852, %v1787, 0
        %v1884 = vsel %vm1852, %v1789, 0
        %v1887 = vsel %vm1852, %v1791, 0
        %1889 = vmatprep.subr.mxu0 %v1793
        %1890 = vmatpush1.msra.mxu0 %v1792
        %1891 = vmatprep.subr.mxu0 %v1795
        %1892 = vmatpush1.msra.mxu0 %v1794
        %1893 = vmatprep.subr.mxu0 %v1797
        %1894 = vmatpush1.msra.mxu0 %v1796
        %1895 = vmatprep.subr.mxu0 %v1799
        %1896 = vmatpush1.msra.mxu0 %v1798
        %1897 = vmatprep.subr.mxu0 %v1801
        %1898 = vmatpush1.msra.mxu0 %v1800
        %1899 = vmatprep.subr.mxu0 %v1803
        %1900 = vmatpush1.msra.mxu0 %v1802
        %1901 = vmatprep.subr.mxu0 %v1805
        %1902 = vmatpush1.msra.mxu0 %v1804
        %1903 = vmatprep.subr.mxu0 %v1807
        %1904 = vmatpush1.msra.mxu0 %v1806
        %1905 = vmatprep.subr.mxu0 %v1809
        %1906 = vmatpush1.msra.mxu0 %v1808
        %1907 = vmatprep.subr.mxu0 %v1811
        %1908 = vmatpush1.msra.mxu0 %v1810
        %1909 = vmatprep.subr.mxu0 %v1813
        %1910 = vmatpush1.msra.mxu0 %v1812
        %1911 = vmatprep.subr.mxu0 %v1815
        %1912 = vmatpush1.msra.mxu0 %v1814
        %1913 = vmatprep.subr.mxu0 %v1817
        %1914 = vmatpush1.msra.mxu0 %v1816
        %1915 = vmatprep.subr.mxu0 %v1819
        %1916 = vmatpush1.msra.mxu0 %v1818
        %1917 = vmatprep.subr.mxu0 %v1821
        %1918 = vmatpush1.msra.mxu0 %v1820
        %1919 = vmatprep.subr.mxu0 %v1823
        %1920 = vmatpush1.msra.mxu0 %v1822
        %1921 = vmatprep.subr.mxu0 %v1825
        %1922 = vmatpush1.msra.mxu0 %v1824
        %1923 = vmatprep.subr.mxu0 %v1827
        %1924 = vmatpush1.msra.mxu0 %v1826
        %1925 = vmatprep.subr.mxu0 %v1829
        %1926 = vmatpush1.msra.mxu0 %v1828
        %1927 = vmatprep.subr.mxu0 %v1831
        %1928 = vmatpush1.msra.mxu0 %v1830
        %1929 = vmatprep.subr.mxu0 %v1833
        %1930 = vmatpush1.msra.mxu0 %v1832
        %1931 = vmatprep.subr.mxu0 %v1835
        %1932 = vmatpush1.msra.mxu0 %v1834
        %1933 = vmatprep.subr.mxu0 %v1837
        %1934 = vmatpush1.msra.mxu0 %v1836
        %1935 = vmatprep.subr.mxu0 %v1839
        %1936 = vmatpush1.msra.mxu0 %v1838
        %1937 = vmatprep.subr.mxu0 %v1841
        %1938 = vmatpush1.msra.mxu0 %v1840
        %1939 = vmatprep.subr.mxu0 %v1843
        %1940 = vmatpush1.msra.mxu0 %v1842
        %1941 = vmatprep.subr.mxu0 %v1845
        %1942 = vmatpush1.msra.mxu0 %v1844
        %1943 = vmatprep.subr.mxu0 %v1847
        %1944 = vmatpush1.msra.mxu0 %v1846
        %1945 = vmatprep.subr.mxu0 %v1849
        %1946 = vmatpush1.msra.mxu0 %v1848
        %1947 = vmatprep.subr.mxu0 %v1851
        %1948 = vmatpush1.msra.mxu0 %v1850
        %1949 = vmatprep.subr.mxu0 0.0
        %1950 = vmatpush1.msra.mxu0 0.0
        %1951 = vmatprep.subr.mxu0 0.0
        %1952 = vmatpush1.msra.mxu0 0.0
        %1953 = vmatprep.mubr.f32.mxu0 %v1854
        %1954 = vmatmul.mubr.f32.gmra.mrb[0].mxu0 %v1768
        %v1955 = vpop.f32.mrb[0].mxu0
        %v1956 = vadd.f32 0.0, %v1955
        %v1957 = vpop.f32.mrb[0].mxu0
        %v1958 = vadd.f32 0.0, %v1957
        %1959 = vmatprep.mubr.f32.mxu0 %v1857
        %1960 = vmatmul.mubr.f32.gmra.mrb[0].mxu0 %v1770
        %v1961 = vpop.f32.mrb[0].mxu0
        %v1962 = vadd.f32 0.0, %v1961
        %v1963 = vpop.f32.mrb[0].mxu0
        %v1964 = vadd.f32 0.0, %v1963
        %1965 = vmatprep.mubr.f32.mxu0 %v1860
        %1966 = vmatmul.mubr.f32.gmra.mrb[0].mxu0 %v1772
        %v1967 = vpop.f32.mrb[0].mxu0
        %v1968 = vadd.f32 0.0, %v1967
        %v1969 = vpop.f32.mrb[0].mxu0
        %v1970 = vadd.f32 0.0, %v1969
        %1971 = vmatprep.mubr.f32.mxu0 %v1863
        %1972 = vmatmul.mubr.f32.gmra.mrb[0].mxu0 %v1774
        %v1973 = vpop.f32.mrb[0].mxu0
        %v1974 = vadd.f32 0.0, %v1973
        %v1975 = vpop.f32.mrb[0].mxu0
        %v1976 = vadd.f32 0.0, %v1975
        %1977 = vmatprep.mubr.f32.mxu0 %v1866
        %1978 = vmatmul.mubr.f32.gmra.mrb[0].mxu0 %v1776
        %v1979 = vpop.f32.mrb[0].mxu0
        %v1980 = vadd.f32 0.0, %v1979
        %v1981 = vpop.f32.mrb[0].mxu0
        %v1982 = vadd.f32 0.0, %v1981
        %1983 = vmatprep.mubr.f32.mxu0 %v1869
        %1984 = vmatmul.mubr.f32.gmra.mrb[0].mxu0 %v1778
        %v1985 = vpop.f32.mrb[0].mxu0
        %v1986 = vadd.f32 0.0, %v1985
        %v1987 = vpop.f32.mrb[0].mxu0
        %v1988 = vadd.f32 0.0, %v1987
        %1989 = vmatprep.mubr.f32.mxu0 %v1872
        %1990 = vmatmul.mubr.f32.gmra.mrb[0].mxu0 %v1780
        %v1991 = vpop.f32.mrb[0].mxu0
        %v1992 = vadd.f32 0.0, %v1991
        %v1993 = vpop.f32.mrb[0].mxu0
        %v1994 = vadd.f32 0.0, %v1993
        %1995 = vmatprep.mubr.f32.mxu0 %v1875
        %1996 = vmatmul.mubr.f32.gmra.mrb[0].mxu0 %v1782
        %v1997 = vpop.f32.mrb[0].mxu0
        %v1998 = vadd.f32 0.0, %v1997
        %v1999 = vpop.f32.mrb[0].mxu0
        %v2000 = vadd.f32 0.0, %v1999
        %2001 = vmatprep.mubr.f32.mxu0 %v1878
        %2002 = vmatmul.mubr.f32.gmra.mrb[0].mxu0 %v1784
        %v2003 = vpop.f32.mrb[0].mxu0
        %v2004 = vadd.f32 0.0, %v2003
        %v2005 = vpop.f32.mrb[0].mxu0
        %v2006 = vadd.f32 0.0, %v2005
        %2007 = vmatprep.mubr.f32.mxu0 %v1881
        %2008 = vmatmul.mubr.f32.gmra.mrb[0].mxu0 %v1786
        %v2009 = vpop.f32.mrb[0].mxu0
        %v2010 = vadd.f32 0.0, %v2009
        %v2011 = vpop.f32.mrb[0].mxu0
        %v2012 = vadd.f32 0.0, %v2011
        %2013 = vmatprep.mubr.f32.mxu0 %v1884
        %2014 = vmatmul.mubr.f32.gmra.mrb[0].mxu0 %v1788
        %v2015 = vpop.f32.mrb[0].mxu0
        %v2016 = vadd.f32 0.0, %v2015
        %v2017 = vpop.f32.mrb[0].mxu0
        %v2018 = vadd.f32 0.0, %v2017
        %2019 = vmatprep.mubr.f32.mxu0 %v1887
        %2020 = vmatmul.mubr.f32.gmra.mrb[0].mxu0 %v1790
        %v2021 = vpop.f32.mrb[0].mxu0
        %v2022 = vadd.f32 0.0, %v2021
        %v2023 = vpop.f32.mrb[0].mxu0
        %v2024 = vadd.f32 0.0, %v2023
        %2025 = vdwg.mxu0
        %v2026 = vmax.f32 %v1768, %v1956
        %v2027 = vmax.f32 %v1769, %v1958
        %v2028 = vmax.f32 %v1770, %v1962
        %v2029 = vmax.f32 %v1771, %v1964
        %v2030 = vmax.f32 %v1772, %v1968
        %v2031 = vmax.f32 %v1773, %v1970
        %v2032 = vmax.f32 %v1774, %v1974
        %v2033 = vmax.f32 %v1775, %v1976
        %v2034 = vmax.f32 %v1776, %v1980
        %v2035 = vmax.f32 %v1777, %v1982
        %v2036 = vmax.f32 %v1778, %v1986
        %v2037 = vmax.f32 %v1779, %v1988
        %v2038 = vmax.f32 %v1780, %v1992
        %v2039 = vmax.f32 %v1781, %v1994
        %v2040 = vmax.f32 %v1782, %v1998
        %v2041 = vmax.f32 %v1783, %v2000
        %v2042 = vmax.f32 %v1784, %v2004
        %v2043 = vmax.f32 %v1785, %v2006
        %v2044 = vmax.f32 %v1786, %v2010
        %v2045 = vmax.f32 %v1787, %v2012
        %v2046 = vmax.f32 %v1788, %v2016
        %v2047 = vmax.f32 %v1789, %v2018
        %v2048 = vmax.f32 %v1790, %v2022
        %v2049 = vmax.f32 %v1791, %v2024
        %v2050 = vmax.f32 %v2026, 0.0
        %v2051 = vmax.f32 %v2027, 0.0
        %v2052 = vmax.f32 %v2028, 0.0
        %v2053 = vmax.f32 %v2029, 0.0
        %v2054 = vmax.f32 %v2030, 0.0
        %v2055 = vmax.f32 %v2031, 0.0
        %v2056 = vmax.f32 %v2032, 0.0
        %v2057 = vmax.f32 %v2033, 0.0
        %v2058 = vmax.f32 %v2034, 0.0
        %v2059 = vmax.f32 %v2035, 0.0
        %v2060 = vmax.f32 %v2036, 0.0
        %v2061 = vmax.f32 %v2037, 0.0
        %v2062 = vmax.f32 %v2038, 0.0
        %v2063 = vmax.f32 %v2039, 0.0
        %v2064 = vmax.f32 %v2040, 0.0
        %v2065 = vmax.f32 %v2041, 0.0
        %v2066 = vmax.f32 %v2042, 0.0
        %v2067 = vmax.f32 %v2043, 0.0
        %v2068 = vmax.f32 %v2044, 0.0
        %v2069 = vmax.f32 %v2045, 0.0
        %v2070 = vmax.f32 %v2046, 0.0
        %v2071 = vmax.f32 %v2047, 0.0
        %v2072 = vmax.f32 %v2048, 0.0
        %v2073 = vmax.f32 %v2049, 0.0
        %v2074 = vld [vmem:[%s4] sm:$0xff]
        %v2075 = vld [vmem:[%s4 + $0x8] sm:$0xff]
        %v2076 = vld [vmem:[%s4 + $0x10] sm:$0xff]
        %v2077 = vld [vmem:[%s4 + $0x18] sm:$0xff]
        %v2078 = vld [vmem:[%s4 + $0x20] sm:$0xff]
        %v2079 = vld [vmem:[%s4 + $0x28] sm:$0xff]
        %v2080 = vld [vmem:[%s4 + $0x30] sm:$0xff]
        %v2081 = vld [vmem:[%s4 + $0x38] sm:$0xff]
        %v2082 = vld [vmem:[%s4 + $0x40] sm:$0xff]
        %v2083 = vld [vmem:[%s4 + $0x48] sm:$0xff]
        %v2084 = vld [vmem:[%s4 + $0x50] sm:$0xff]
        %v2085 = vld [vmem:[%s4 + $0x58] sm:$0xff]
        %v2086 = vld [vmem:[%s4 + $0x60] sm:$0xff]
        %v2087 = vld [vmem:[%s4 + $0x68] sm:$0xff]
        %v2088 = vld [vmem:[%s4 + $0x70] sm:$0xff]
        %v2089 = vld [vmem:[%s4 + $0x78] sm:$0xff]
        %v2090 = vld [vmem:[%s4 + $0x80] sm:$0xff]
        %v2091 = vld [vmem:[%s4 + $0x88] sm:$0xff]
        %v2092 = vld [vmem:[%s4 + $0x90] sm:$0xff]
        %v2093 = vld [vmem:[%s4 + $0x98] sm:$0xff]
        %v2094 = vld [vmem:[%s4 + $0xa0] sm:$0xff]
        %v2095 = vld [vmem:[%s4 + $0xa8] sm:$0xff]
        %v2096 = vld [vmem:[%s4 + $0xb0] sm:$0xff]
        %v2097 = vld [vmem:[%s4 + $0xb8] sm:$0xff]
        %v2098 = vld [vmem:[%s4 + $0xc0] sm:$0xff]
        %v2099 = vld [vmem:[%s4 + $0xc8] sm:$0xff]
        %v2100 = vld [vmem:[%s4 + $0xd0] sm:$0xff]
        %v2101 = vld [vmem:[%s4 + $0xd8] sm:$0xff]
        %v2102 = vld [vmem:[%s4 + $0xe0] sm:$0xff]
        %v2103 = vld [vmem:[%s4 + $0xe8] sm:$0xff]
        %v2104 = vld [vmem:[%s4 + $0xf0] sm:$0xff]
        %v2105 = vld [vmem:[%s4 + $0xf8] sm:$0xff]
        %v2106 = vld [vmem:[%s4 + $0x100] sm:$0xff]
        %v2107 = vld [vmem:[%s4 + $0x108] sm:$0xff]
        %v2108 = vld [vmem:[%s4 + $0x110] sm:$0xff]
        %v2109 = vld [vmem:[%s4 + $0x118] sm:$0xff]
        %v2110 = vld [vmem:[%s4 + $0x120] sm:$0xff]
        %v2111 = vld [vmem:[%s4 + $0x128] sm:$0xff]
        %v2112 = vld [vmem:[%s4 + $0x130] sm:$0xff]
        %v2113 = vld [vmem:[%s4 + $0x138] sm:$0xff]
        %v2114 = vld [vmem:[%s4 + $0x140] sm:$0xff]
        %v2115 = vld [vmem:[%s4 + $0x148] sm:$0xff]
        %v2116 = vld [vmem:[%s4 + $0x150] sm:$0xff]
        %v2117 = vld [vmem:[%s4 + $0x158] sm:$0xff]
        %v2118 = vld [vmem:[%s4 + $0x160] sm:$0xff]
        %v2119 = vld [vmem:[%s4 + $0x168] sm:$0xff]
        %v2120 = vld [vmem:[%s4 + $0x170] sm:$0xff]
        %v2121 = vld [vmem:[%s4 + $0x178] sm:$0xff]
        %v2122 = vld [vmem:[%s4 + $0x180] sm:$0xff]
        %v2123 = vld [vmem:[%s4 + $0x188] sm:$0xff]
        %v2124 = vld [vmem:[%s4 + $0x190] sm:$0xff]
        %v2125 = vld [vmem:[%s4 + $0x198] sm:$0xff]
        %v2126 = vld [vmem:[%s4 + $0x1a0] sm:$0xff]
        %v2127 = vld [vmem:[%s4 + $0x1a8] sm:$0xff]
        %v2128 = vld [vmem:[%s4 + $0x1b0] sm:$0xff]
        %v2129 = vld [vmem:[%s4 + $0x1b8] sm:$0xff]
        %v2130 = vld [vmem:[%s4 + $0x1c0] sm:$0xff]
        %v2131 = vld [vmem:[%s4 + $0x1c8] sm:$0xff]
        %v2132 = vld [vmem:[%s4 + $0x1d0] sm:$0xff]
        %v2133 = vld [vmem:[%s4 + $0x1d8] sm:$0xff]
        %v2134 = vld [vmem:[%s5] sm:$0x3]
        %v2136 = vlaneseq
        %v2137 = vshrl.u32 %v2136, 7
        %v2138 = vsub.s32 0, %v2137
        %v2139 = vrot.slane %v2134, %v2138
        %v2140 = vlaneseq
        %v2141 = vshrl.u32 %v2140, 7
        %v2142 = vsub.s32 1, %v2141
        %v2143 = vrot.slane %v2134, %v2142
        %v2147 = vsel %vm1852, %v2051, 0
        %v2150 = vsel %vm1852, %v2053, 0
        %v2153 = vsel %vm1852, %v2055, 0
        %v2156 = vsel %vm1852, %v2057, 0
        %v2159 = vsel %vm1852, %v2059, 0
        %v2162 = vsel %vm1852, %v2061, 0
        %v2165 = vsel %vm1852, %v2063, 0
        %v2168 = vsel %vm1852, %v2065, 0
        %2170 = vmatprep.subr.mxu0 %v2075
        %2171 = vmatpush1.msra.mxu0 %v2074
        %2172 = vmatprep.subr.mxu0 %v2077
        %2173 = vmatpush1.msra.mxu0 %v2076
        %2174 = vmatprep.subr.mxu0 %v2079
        %2175 = vmatpush1.msra.mxu0 %v2078
        %2176 = vmatprep.subr.mxu0 %v2081
        %2177 = vmatpush1.msra.mxu0 %v2080
        %2178 = vmatprep.subr.mxu0 %v2083
        %2179 = vmatpush1.msra.mxu0 %v2082
        %2180 = vmatprep.subr.mxu0 %v2085
        %2181 = vmatpush1.msra.mxu0 %v2084
        %2182 = vmatprep.subr.mxu0 %v2087
        %2183 = vmatpush1.msra.mxu0 %v2086
        %2184 = vmatprep.subr.mxu0 %v2089
        %2185 = vmatpush1.msra.mxu0 %v2088
        %2186 = vmatprep.subr.mxu0 %v2091
        %2187 = vmatpush1.msra.mxu0 %v2090
        %2188 = vmatprep.subr.mxu0 %v2093
        %2189 = vmatpush1.msra.mxu0 %v2092
        %2190 = vmatprep.subr.mxu0 %v2095
        %2191 = vmatpush1.msra.mxu0 %v2094
        %2192 = vmatprep.subr.mxu0 %v2097
        %2193 = vmatpush1.msra.mxu0 %v2096
        %2194 = vmatprep.subr.mxu0 %v2099
        %2195 = vmatpush1.msra.mxu0 %v2098
        %2196 = vmatprep.subr.mxu0 %v2101
        %2197 = vmatpush1.msra.mxu0 %v2100
        %2198 = vmatprep.subr.mxu0 %v2103
        %2199 = vmatpush1.msra.mxu0 %v2102
        %2200 = vmatprep.subr.mxu0 %v2105
        %2201 = vmatpush1.msra.mxu0 %v2104
        %2202 = vmatprep.subr.mxu0 %v2107
        %2203 = vmatpush1.msra.mxu0 %v2106
        %2204 = vmatprep.subr.mxu0 %v2109
        %2205 = vmatpush1.msra.mxu0 %v2108
        %2206 = vmatprep.subr.mxu0 %v2111
        %2207 = vmatpush1.msra.mxu0 %v2110
        %2208 = vmatprep.subr.mxu0 %v2113
        %2209 = vmatpush1.msra.mxu0 %v2112
        %2210 = vmatprep.subr.mxu0 %v2115
        %2211 = vmatpush1.msra.mxu0 %v2114
        %2212 = vmatprep.subr.mxu0 %v2117
        %2213 = vmatpush1.msra.mxu0 %v2116
        %2214 = vmatprep.subr.mxu0 %v2119
        %2215 = vmatpush1.msra.mxu0 %v2118
        %2216 = vmatprep.subr.mxu0 %v2121
        %2217 = vmatpush1.msra.mxu0 %v2120
        %2218 = vmatprep.subr.mxu0 %v2123
        %2219 = vmatpush1.msra.mxu0 %v2122
        %2220 = vmatprep.subr.mxu0 %v2125
        %2221 = vmatpush1.msra.mxu0 %v2124
        %2222 = vmatprep.subr.mxu0 %v2127
        %2223 = vmatpush1.msra.mxu0 %v2126
        %2224 = vmatprep.subr.mxu0 %v2129
        %2225 = vmatpush1.msra.mxu0 %v2128
        %2226 = vmatprep.subr.mxu0 %v2131
        %2227 = vmatpush1.msra.mxu0 %v2130
        %2228 = vmatprep.subr.mxu0 %v2133
        %2229 = vmatpush1.msra.mxu0 %v2132
        %2230 = vmatprep.subr.mxu0 0.0
        %2231 = vmatpush1.msra.mxu0 0.0
        %2232 = vmatprep.subr.mxu0 0.0
        %2233 = vmatpush1.msra.mxu0 0.0
        %2234 = vmatprep.mubr.f32.mxu0 %v2147
        %2235 = vmatmul.mubr.f32.gmra.mrb[0].mxu0 %v2050
        %v2236 = vpop.f32.mrb[0].mxu0
        %v2237 = vadd.f32 %v2139, %v2236
        %v2238 = vpop.f32.mrb[0].mxu0
        %v2239 = vadd.f32 %v2143, %v2238
        %2240 = vmatprep.mubr.f32.mxu0 %v2150
        %2241 = vmatmul.mubr.f32.gmra.mrb[0].mxu0 %v2052
        %v2242 = vpop.f32.mrb[0].mxu0
        %v2243 = vadd.f32 %v2139, %v2242
        %v2244 = vpop.f32.mrb[0].mxu0
        %v2245 = vadd.f32 %v2143, %v2244
        %2246 = vmatprep.mubr.f32.mxu0 %v2153
        %2247 = vmatmul.mubr.f32.gmra.mrb[0].mxu0 %v2054
        %v2248 = vpop.f32.mrb[0].mxu0
        %v2249 = vadd.f32 %v2139, %v2248
        %v2250 = vpop.f32.mrb[0].mxu0
        %v2251 = vadd.f32 %v2143, %v2250
        %2252 = vmatprep.mubr.f32.mxu0 %v2156
        %2253 = vmatmul.mubr.f32.gmra.mrb[0].mxu0 %v2056
        %v2254 = vpop.f32.mrb[0].mxu0
        %v2255 = vadd.f32 %v2139, %v2254
        %v2256 = vpop.f32.mrb[0].mxu0
        %v2257 = vadd.f32 %v2143, %v2256
        %2258 = vmatprep.mubr.f32.mxu0 %v2159
        %2259 = vmatmul.mubr.f32.gmra.mrb[0].mxu0 %v2058
        %v2260 = vpop.f32.mrb[0].mxu0
        %v2261 = vadd.f32 %v2139, %v2260
        %v2262 = vpop.f32.mrb[0].mxu0
        %v2263 = vadd.f32 %v2143, %v2262
        %2264 = vmatprep.mubr.f32.mxu0 %v2162
        %2265 = vmatmul.mubr.f32.gmra.mrb[0].mxu0 %v2060
        %v2266 = vpop.f32.mrb[0].mxu0
        %v2267 = vadd.f32 %v2139, %v2266
        %v2268 = vpop.f32.mrb[0].mxu0
        %v2269 = vadd.f32 %v2143, %v2268
        %2270 = vmatprep.mubr.f32.mxu0 %v2165
        %2271 = vmatmul.mubr.f32.gmra.mrb[0].mxu0 %v2062
        %v2272 = vpop.f32.mrb[0].mxu0
        %v2273 = vadd.f32 %v2139, %v2272
        %v2274 = vpop.f32.mrb[0].mxu0
        %v2275 = vadd.f32 %v2143, %v2274
        %2276 = vmatprep.mubr.f32.mxu0 %v2168
        %2277 = vmatmul.mubr.f32.gmra.mrb[0].mxu0 %v2064
        %v2278 = vpop.f32.mrb[0].mxu0
        %v2279 = vadd.f32 %v2139, %v2278
        %v2280 = vpop.f32.mrb[0].mxu0
        %v2281 = vadd.f32 %v2143, %v2280
        %2282 = vdwg.mxu0
        %s2283 = scalar_lea.vmem %s4, 480
        %v2284 = vld [vmem:[%s2283] sm:$0xff]
        %v2285 = vld [vmem:[%s2283 + $0x8] sm:$0xff]
        %v2286 = vld [vmem:[%s2283 + $0x10] sm:$0xff]
        %v2287 = vld [vmem:[%s2283 + $0x18] sm:$0xff]
        %v2288 = vld [vmem:[%s2283 + $0x20] sm:$0xff]
        %v2289 = vld [vmem:[%s2283 + $0x28] sm:$0xff]
        %v2290 = vld [vmem:[%s2283 + $0x30] sm:$0xff]
        %v2291 = vld [vmem:[%s2283 + $0x38] sm:$0xff]
        %v2292 = vld [vmem:[%s2283 + $0x40] sm:$0xff]
        %v2293 = vld [vmem:[%s2283 + $0x48] sm:$0xff]
        %v2294 = vld [vmem:[%s2283 + $0x50] sm:$0xff]
        %v2295 = vld [vmem:[%s2283 + $0x58] sm:$0xff]
        %v2296 = vld [vmem:[%s2283 + $0x60] sm:$0xff]
        %v2297 = vld [vmem:[%s2283 + $0x68] sm:$0xff]
        %v2298 = vld [vmem:[%s2283 + $0x70] sm:$0xff]
        %v2299 = vld [vmem:[%s2283 + $0x78] sm:$0xff]
        %v2300 = vld [vmem:[%s2283 + $0x80] sm:$0xff]
        %v2301 = vld [vmem:[%s2283 + $0x88] sm:$0xff]
        %v2302 = vld [vmem:[%s2283 + $0x90] sm:$0xff]
        %v2303 = vld [vmem:[%s2283 + $0x98] sm:$0xff]
        %v2304 = vld [vmem:[%s2283 + $0xa0] sm:$0xff]
        %v2305 = vld [vmem:[%s2283 + $0xa8] sm:$0xff]
        %v2306 = vld [vmem:[%s2283 + $0xb0] sm:$0xff]
        %v2307 = vld [vmem:[%s2283 + $0xb8] sm:$0xff]
        %v2308 = vld [vmem:[%s2283 + $0xc0] sm:$0xff]
        %v2309 = vld [vmem:[%s2283 + $0xc8] sm:$0xff]
        %v2310 = vld [vmem:[%s2283 + $0xd0] sm:$0xff]
        %v2311 = vld [vmem:[%s2283 + $0xd8] sm:$0xff]
        %v2312 = vld [vmem:[%s2283 + $0xe0] sm:$0xff]
        %v2313 = vld [vmem:[%s2283 + $0xe8] sm:$0xff]
        %v2314 = vld [vmem:[%s2283 + $0xf0] sm:$0xff]
        %v2315 = vld [vmem:[%s2283 + $0xf8] sm:$0xff]
        %v2316 = vld [vmem:[%s2283 + $0x100] sm:$0xff]
        %v2317 = vld [vmem:[%s2283 + $0x108] sm:$0xff]
        %v2318 = vld [vmem:[%s2283 + $0x110] sm:$0xff]
        %v2319 = vld [vmem:[%s2283 + $0x118] sm:$0xff]
        %v2320 = vld [vmem:[%s2283 + $0x120] sm:$0xff]
        %v2321 = vld [vmem:[%s2283 + $0x128] sm:$0xff]
        %v2322 = vld [vmem:[%s2283 + $0x130] sm:$0xff]
        %v2323 = vld [vmem:[%s2283 + $0x138] sm:$0xff]
        %v2324 = vld [vmem:[%s2283 + $0x140] sm:$0xff]
        %v2325 = vld [vmem:[%s2283 + $0x148] sm:$0xff]
        %v2326 = vld [vmem:[%s2283 + $0x150] sm:$0xff]
        %v2327 = vld [vmem:[%s2283 + $0x158] sm:$0xff]
        %v2328 = vld [vmem:[%s2283 + $0x160] sm:$0xff]
        %v2329 = vld [vmem:[%s2283 + $0x168] sm:$0xff]
        %v2330 = vld [vmem:[%s2283 + $0x170] sm:$0xff]
        %v2331 = vld [vmem:[%s2283 + $0x178] sm:$0xff]
        %v2332 = vld [vmem:[%s2283 + $0x180] sm:$0xff]
        %v2333 = vld [vmem:[%s2283 + $0x188] sm:$0xff]
        %v2334 = vld [vmem:[%s2283 + $0x190] sm:$0xff]
        %v2335 = vld [vmem:[%s2283 + $0x198] sm:$0xff]
        %v2336 = vld [vmem:[%s2283 + $0x1a0] sm:$0xff]
        %v2337 = vld [vmem:[%s2283 + $0x1a8] sm:$0xff]
        %v2338 = vld [vmem:[%s2283 + $0x1b0] sm:$0xff]
        %v2339 = vld [vmem:[%s2283 + $0x1b8] sm:$0xff]
        %v2340 = vld [vmem:[%s2283 + $0x1c0] sm:$0xff]
        %v2341 = vld [vmem:[%s2283 + $0x1c8] sm:$0xff]
        %v2342 = vld [vmem:[%s2283 + $0x1d0] sm:$0xff]
        %v2343 = vld [vmem:[%s2283 + $0x1d8] sm:$0xff]
        %v2345 = vsel %vm1852, %v2067, 0
        %2347 = vmatprep.subr.mxu0 %v2285
        %2348 = vmatpush1.msra.mxu0 %v2284
        %2349 = vmatprep.subr.mxu0 %v2287
        %2350 = vmatpush1.msra.mxu0 %v2286
        %2351 = vmatprep.subr.mxu0 %v2289
        %2352 = vmatpush1.msra.mxu0 %v2288
        %2353 = vmatprep.subr.mxu0 %v2291
        %2354 = vmatpush1.msra.mxu0 %v2290
        %2355 = vmatprep.subr.mxu0 %v2293
        %2356 = vmatpush1.msra.mxu0 %v2292
        %2357 = vmatprep.subr.mxu0 %v2295
        %2358 = vmatpush1.msra.mxu0 %v2294
        %2359 = vmatprep.subr.mxu0 %v2297
        %2360 = vmatpush1.msra.mxu0 %v2296
        %2361 = vmatprep.subr.mxu0 %v2299
        %2362 = vmatpush1.msra.mxu0 %v2298
        %2363 = vmatprep.subr.mxu0 %v2301
        %2364 = vmatpush1.msra.mxu0 %v2300
        %2365 = vmatprep.subr.mxu0 %v2303
        %2366 = vmatpush1.msra.mxu0 %v2302
        %2367 = vmatprep.subr.mxu0 %v2305
        %2368 = vmatpush1.msra.mxu0 %v2304
        %2369 = vmatprep.subr.mxu0 %v2307
        %2370 = vmatpush1.msra.mxu0 %v2306
        %2371 = vmatprep.subr.mxu0 %v2309
        %2372 = vmatpush1.msra.mxu0 %v2308
        %2373 = vmatprep.subr.mxu0 %v2311
        %2374 = vmatpush1.msra.mxu0 %v2310
        %2375 = vmatprep.subr.mxu0 %v2313
        %2376 = vmatpush1.msra.mxu0 %v2312
        %2377 = vmatprep.subr.mxu0 %v2315
        %2378 = vmatpush1.msra.mxu0 %v2314
        %2379 = vmatprep.subr.mxu0 %v2317
        %2380 = vmatpush1.msra.mxu0 %v2316
        %2381 = vmatprep.subr.mxu0 %v2319
        %2382 = vmatpush1.msra.mxu0 %v2318
        %2383 = vmatprep.subr.mxu0 %v2321
        %2384 = vmatpush1.msra.mxu0 %v2320
        %2385 = vmatprep.subr.mxu0 %v2323
        %2386 = vmatpush1.msra.mxu0 %v2322
        %2387 = vmatprep.subr.mxu0 %v2325
        %2388 = vmatpush1.msra.mxu0 %v2324
        %2389 = vmatprep.subr.mxu0 %v2327
        %2390 = vmatpush1.msra.mxu0 %v2326
        %2391 = vmatprep.subr.mxu0 %v2329
        %2392 = vmatpush1.msra.mxu0 %v2328
        %2393 = vmatprep.subr.mxu0 %v2331
        %2394 = vmatpush1.msra.mxu0 %v2330
        %2395 = vmatprep.subr.mxu0 %v2333
        %2396 = vmatpush1.msra.mxu0 %v2332
        %2397 = vmatprep.subr.mxu0 %v2335
        %2398 = vmatpush1.msra.mxu0 %v2334
        %2399 = vmatprep.subr.mxu0 %v2337
        %2400 = vmatpush1.msra.mxu0 %v2336
        %2401 = vmatprep.subr.mxu0 %v2339
        %2402 = vmatpush1.msra.mxu0 %v2338
        %2403 = vmatprep.subr.mxu0 %v2341
        %2404 = vmatpush1.msra.mxu0 %v2340
        %2405 = vmatprep.subr.mxu0 %v2343
        %2406 = vmatpush1.msra.mxu0 %v2342
        %2407 = vmatprep.subr.mxu0 0.0
        %2408 = vmatpush1.msra.mxu0 0.0
        %2409 = vmatprep.subr.mxu0 0.0
        %2410 = vmatpush1.msra.mxu0 0.0
        %2411 = vmatprep.mubr.f32.mxu0 %v2150
        %2412 = vmatmul.mubr.f32.gmra.mrb[0].mxu0 %v2052
        %v2413 = vpop.f32.mrb[0].mxu0
        %v2414 = vadd.f32 0.0, %v2413
        %v2415 = vpop.f32.mrb[0].mxu0
        %v2416 = vadd.f32 0.0, %v2415
        %2417 = vmatprep.mubr.f32.mxu0 %v2153
        %2418 = vmatmul.mubr.f32.gmra.mrb[0].mxu0 %v2054
        %v2419 = vpop.f32.mrb[0].mxu0
        %v2420 = vadd.f32 0.0, %v2419
        %v2421 = vpop.f32.mrb[0].mxu0
        %v2422 = vadd.f32 0.0, %v2421
        %2423 = vmatprep.mubr.f32.mxu0 %v2156
        %2424 = vmatmul.mubr.f32.gmra.mrb[0].mxu0 %v2056
        %v2425 = vpop.f32.mrb[0].mxu0
        %v2426 = vadd.f32 0.0, %v2425
        %v2427 = vpop.f32.mrb[0].mxu0
        %v2428 = vadd.f32 0.0, %v2427
        %2429 = vmatprep.mubr.f32.mxu0 %v2159
        %2430 = vmatmul.mubr.f32.gmra.mrb[0].mxu0 %v2058
        %v2431 = vpop.f32.mrb[0].mxu0
        %v2432 = vadd.f32 0.0, %v2431
        %v2433 = vpop.f32.mrb[0].mxu0
        %v2434 = vadd.f32 0.0, %v2433
        %2435 = vmatprep.mubr.f32.mxu0 %v2162
        %2436 = vmatmul.mubr.f32.gmra.mrb[0].mxu0 %v2060
        %v2437 = vpop.f32.mrb[0].mxu0
        %v2438 = vadd.f32 0.0, %v2437
        %v2439 = vpop.f32.mrb[0].mxu0
        %v2440 = vadd.f32 0.0, %v2439
        %2441 = vmatprep.mubr.f32.mxu0 %v2165
        %2442 = vmatmul.mubr.f32.gmra.mrb[0].mxu0 %v2062
        %v2443 = vpop.f32.mrb[0].mxu0
        %v2444 = vadd.f32 0.0, %v2443
        %v2445 = vpop.f32.mrb[0].mxu0
        %v2446 = vadd.f32 0.0, %v2445
        %2447 = vmatprep.mubr.f32.mxu0 %v2168
        %2448 = vmatmul.mubr.f32.gmra.mrb[0].mxu0 %v2064
        %v2449 = vpop.f32.mrb[0].mxu0
        %v2450 = vadd.f32 0.0, %v2449
        %v2451 = vpop.f32.mrb[0].mxu0
        %v2452 = vadd.f32 0.0, %v2451
        %2453 = vmatprep.mubr.f32.mxu0 %v2345
        %2454 = vmatmul.mubr.f32.gmra.mrb[0].mxu0 %v2066
        %v2455 = vpop.f32.mrb[0].mxu0
        %v2456 = vadd.f32 0.0, %v2455
        %v2457 = vpop.f32.mrb[0].mxu0
        %v2458 = vadd.f32 0.0, %v2457
        %2459 = vdwg.mxu0
        %v2460 = vadd.f32 %v2237, %v2414
        %v2461 = vadd.f32 %v2239, %v2416
        %v2462 = vadd.f32 %v2243, %v2420
        %v2463 = vadd.f32 %v2245, %v2422
        %v2464 = vadd.f32 %v2249, %v2426
        %v2465 = vadd.f32 %v2251, %v2428
        %v2466 = vadd.f32 %v2255, %v2432
        %v2467 = vadd.f32 %v2257, %v2434
        %v2468 = vadd.f32 %v2261, %v2438
        %v2469 = vadd.f32 %v2263, %v2440
        %v2470 = vadd.f32 %v2267, %v2444
        %v2471 = vadd.f32 %v2269, %v2446
        %v2472 = vadd.f32 %v2273, %v2450
        %v2473 = vadd.f32 %v2275, %v2452
        %v2474 = vadd.f32 %v2279, %v2456
        %v2475 = vadd.f32 %v2281, %v2458
        %s2476 = scalar_lea.vmem %s4, 960
        %v2477 = vld [vmem:[%s2476] sm:$0xff]
        %v2478 = vld [vmem:[%s2476 + $0x8] sm:$0xff]
        %v2479 = vld [vmem:[%s2476 + $0x10] sm:$0xff]
        %v2480 = vld [vmem:[%s2476 + $0x18] sm:$0xff]
        %v2481 = vld [vmem:[%s2476 + $0x20] sm:$0xff]
        %v2482 = vld [vmem:[%s2476 + $0x28] sm:$0xff]
        %v2483 = vld [vmem:[%s2476 + $0x30] sm:$0xff]
        %v2484 = vld [vmem:[%s2476 + $0x38] sm:$0xff]
        %v2485 = vld [vmem:[%s2476 + $0x40] sm:$0xff]
        %v2486 = vld [vmem:[%s2476 + $0x48] sm:$0xff]
        %v2487 = vld [vmem:[%s2476 + $0x50] sm:$0xff]
        %v2488 = vld [vmem:[%s2476 + $0x58] sm:$0xff]
        %v2489 = vld [vmem:[%s2476 + $0x60] sm:$0xff]
        %v2490 = vld [vmem:[%s2476 + $0x68] sm:$0xff]
        %v2491 = vld [vmem:[%s2476 + $0x70] sm:$0xff]
        %v2492 = vld [vmem:[%s2476 + $0x78] sm:$0xff]
        %v2493 = vld [vmem:[%s2476 + $0x80] sm:$0xff]
        %v2494 = vld [vmem:[%s2476 + $0x88] sm:$0xff]
        %v2495 = vld [vmem:[%s2476 + $0x90] sm:$0xff]
        %v2496 = vld [vmem:[%s2476 + $0x98] sm:$0xff]
        %v2497 = vld [vmem:[%s2476 + $0xa0] sm:$0xff]
        %v2498 = vld [vmem:[%s2476 + $0xa8] sm:$0xff]
        %v2499 = vld [vmem:[%s2476 + $0xb0] sm:$0xff]
        %v2500 = vld [vmem:[%s2476 + $0xb8] sm:$0xff]
        %v2501 = vld [vmem:[%s2476 + $0xc0] sm:$0xff]
        %v2502 = vld [vmem:[%s2476 + $0xc8] sm:$0xff]
        %v2503 = vld [vmem:[%s2476 + $0xd0] sm:$0xff]
        %v2504 = vld [vmem:[%s2476 + $0xd8] sm:$0xff]
        %v2505 = vld [vmem:[%s2476 + $0xe0] sm:$0xff]
        %v2506 = vld [vmem:[%s2476 + $0xe8] sm:$0xff]
        %v2507 = vld [vmem:[%s2476 + $0xf0] sm:$0xff]
        %v2508 = vld [vmem:[%s2476 + $0xf8] sm:$0xff]
        %v2509 = vld [vmem:[%s2476 + $0x100] sm:$0xff]
        %v2510 = vld [vmem:[%s2476 + $0x108] sm:$0xff]
        %v2511 = vld [vmem:[%s2476 + $0x110] sm:$0xff]
        %v2512 = vld [vmem:[%s2476 + $0x118] sm:$0xff]
        %v2513 = vld [vmem:[%s2476 + $0x120] sm:$0xff]
        %v2514 = vld [vmem:[%s2476 + $0x128] sm:$0xff]
        %v2515 = vld [vmem:[%s2476 + $0x130] sm:$0xff]
        %v2516 = vld [vmem:[%s2476 + $0x138] sm:$0xff]
        %v2517 = vld [vmem:[%s2476 + $0x140] sm:$0xff]
        %v2518 = vld [vmem:[%s2476 + $0x148] sm:$0xff]
        %v2519 = vld [vmem:[%s2476 + $0x150] sm:$0xff]
        %v2520 = vld [vmem:[%s2476 + $0x158] sm:$0xff]
        %v2521 = vld [vmem:[%s2476 + $0x160] sm:$0xff]
        %v2522 = vld [vmem:[%s2476 + $0x168] sm:$0xff]
        %v2523 = vld [vmem:[%s2476 + $0x170] sm:$0xff]
        %v2524 = vld [vmem:[%s2476 + $0x178] sm:$0xff]
        %v2525 = vld [vmem:[%s2476 + $0x180] sm:$0xff]
        %v2526 = vld [vmem:[%s2476 + $0x188] sm:$0xff]
        %v2527 = vld [vmem:[%s2476 + $0x190] sm:$0xff]
        %v2528 = vld [vmem:[%s2476 + $0x198] sm:$0xff]
        %v2529 = vld [vmem:[%s2476 + $0x1a0] sm:$0xff]
        %v2530 = vld [vmem:[%s2476 + $0x1a8] sm:$0xff]
        %v2531 = vld [vmem:[%s2476 + $0x1b0] sm:$0xff]
        %v2532 = vld [vmem:[%s2476 + $0x1b8] sm:$0xff]
        %v2533 = vld [vmem:[%s2476 + $0x1c0] sm:$0xff]
        %v2534 = vld [vmem:[%s2476 + $0x1c8] sm:$0xff]
        %v2535 = vld [vmem:[%s2476 + $0x1d0] sm:$0xff]
        %v2536 = vld [vmem:[%s2476 + $0x1d8] sm:$0xff]
        %v2538 = vsel %vm1852, %v2069, 0
        %2540 = vmatprep.subr.mxu0 %v2478
        %2541 = vmatpush1.msra.mxu0 %v2477
        %2542 = vmatprep.subr.mxu0 %v2480
        %2543 = vmatpush1.msra.mxu0 %v2479
        %2544 = vmatprep.subr.mxu0 %v2482
        %2545 = vmatpush1.msra.mxu0 %v2481
        %2546 = vmatprep.subr.mxu0 %v2484
        %2547 = vmatpush1.msra.mxu0 %v2483
        %2548 = vmatprep.subr.mxu0 %v2486
        %2549 = vmatpush1.msra.mxu0 %v2485
        %2550 = vmatprep.subr.mxu0 %v2488
        %2551 = vmatpush1.msra.mxu0 %v2487
        %2552 = vmatprep.subr.mxu0 %v2490
        %2553 = vmatpush1.msra.mxu0 %v2489
        %2554 = vmatprep.subr.mxu0 %v2492
        %2555 = vmatpush1.msra.mxu0 %v2491
        %2556 = vmatprep.subr.mxu0 %v2494
        %2557 = vmatpush1.msra.mxu0 %v2493
        %2558 = vmatprep.subr.mxu0 %v2496
        %2559 = vmatpush1.msra.mxu0 %v2495
        %2560 = vmatprep.subr.mxu0 %v2498
        %2561 = vmatpush1.msra.mxu0 %v2497
        %2562 = vmatprep.subr.mxu0 %v2500
        %2563 = vmatpush1.msra.mxu0 %v2499
        %2564 = vmatprep.subr.mxu0 %v2502
        %2565 = vmatpush1.msra.mxu0 %v2501
        %2566 = vmatprep.subr.mxu0 %v2504
        %2567 = vmatpush1.msra.mxu0 %v2503
        %2568 = vmatprep.subr.mxu0 %v2506
        %2569 = vmatpush1.msra.mxu0 %v2505
        %2570 = vmatprep.subr.mxu0 %v2508
        %2571 = vmatpush1.msra.mxu0 %v2507
        %2572 = vmatprep.subr.mxu0 %v2510
        %2573 = vmatpush1.msra.mxu0 %v2509
        %2574 = vmatprep.subr.mxu0 %v2512
        %2575 = vmatpush1.msra.mxu0 %v2511
        %2576 = vmatprep.subr.mxu0 %v2514
        %2577 = vmatpush1.msra.mxu0 %v2513
        %2578 = vmatprep.subr.mxu0 %v2516
        %2579 = vmatpush1.msra.mxu0 %v2515
        %2580 = vmatprep.subr.mxu0 %v2518
        %2581 = vmatpush1.msra.mxu0 %v2517
        %2582 = vmatprep.subr.mxu0 %v2520
        %2583 = vmatpush1.msra.mxu0 %v2519
        %2584 = vmatprep.subr.mxu0 %v2522
        %2585 = vmatpush1.msra.mxu0 %v2521
        %2586 = vmatprep.subr.mxu0 %v2524
        %2587 = vmatpush1.msra.mxu0 %v2523
        %2588 = vmatprep.subr.mxu0 %v2526
        %2589 = vmatpush1.msra.mxu0 %v2525
        %2590 = vmatprep.subr.mxu0 %v2528
        %2591 = vmatpush1.msra.mxu0 %v2527
        %2592 = vmatprep.subr.mxu0 %v2530
        %2593 = vmatpush1.msra.mxu0 %v2529
        %2594 = vmatprep.subr.mxu0 %v2532
        %2595 = vmatpush1.msra.mxu0 %v2531
        %2596 = vmatprep.subr.mxu0 %v2534
        %2597 = vmatpush1.msra.mxu0 %v2533
        %2598 = vmatprep.subr.mxu0 %v2536
        %2599 = vmatpush1.msra.mxu0 %v2535
        %2600 = vmatprep.subr.mxu0 0.0
        %2601 = vmatpush1.msra.mxu0 0.0
        %2602 = vmatprep.subr.mxu0 0.0
        %2603 = vmatpush1.msra.mxu0 0.0
        %2604 = vmatprep.mubr.f32.mxu0 %v2153
        %2605 = vmatmul.mubr.f32.gmra.mrb[0].mxu0 %v2054
        %v2606 = vpop.f32.mrb[0].mxu0
        %v2607 = vadd.f32 0.0, %v2606
        %v2608 = vpop.f32.mrb[0].mxu0
        %v2609 = vadd.f32 0.0, %v2608
        %2610 = vmatprep.mubr.f32.mxu0 %v2156
        %2611 = vmatmul.mubr.f32.gmra.mrb[0].mxu0 %v2056
        %v2612 = vpop.f32.mrb[0].mxu0
        %v2613 = vadd.f32 0.0, %v2612
        %v2614 = vpop.f32.mrb[0].mxu0
        %v2615 = vadd.f32 0.0, %v2614
        %2616 = vmatprep.mubr.f32.mxu0 %v2159
        %2617 = vmatmul.mubr.f32.gmra.mrb[0].mxu0 %v2058
        %v2618 = vpop.f32.mrb[0].mxu0
        %v2619 = vadd.f32 0.0, %v2618
        %v2620 = vpop.f32.mrb[0].mxu0
        %v2621 = vadd.f32 0.0, %v2620
        %2622 = vmatprep.mubr.f32.mxu0 %v2162
        %2623 = vmatmul.mubr.f32.gmra.mrb[0].mxu0 %v2060
        %v2624 = vpop.f32.mrb[0].mxu0
        %v2625 = vadd.f32 0.0, %v2624
        %v2626 = vpop.f32.mrb[0].mxu0
        %v2627 = vadd.f32 0.0, %v2626
        %2628 = vmatprep.mubr.f32.mxu0 %v2165
        %2629 = vmatmul.mubr.f32.gmra.mrb[0].mxu0 %v2062
        %v2630 = vpop.f32.mrb[0].mxu0
        %v2631 = vadd.f32 0.0, %v2630
        %v2632 = vpop.f32.mrb[0].mxu0
        %v2633 = vadd.f32 0.0, %v2632
        %2634 = vmatprep.mubr.f32.mxu0 %v2168
        %2635 = vmatmul.mubr.f32.gmra.mrb[0].mxu0 %v2064
        %v2636 = vpop.f32.mrb[0].mxu0
        %v2637 = vadd.f32 0.0, %v2636
        %v2638 = vpop.f32.mrb[0].mxu0
        %v2639 = vadd.f32 0.0, %v2638
        %2640 = vmatprep.mubr.f32.mxu0 %v2345
        %2641 = vmatmul.mubr.f32.gmra.mrb[0].mxu0 %v2066
        %v2642 = vpop.f32.mrb[0].mxu0
        %v2643 = vadd.f32 0.0, %v2642
        %v2644 = vpop.f32.mrb[0].mxu0
        %v2645 = vadd.f32 0.0, %v2644
        %2646 = vmatprep.mubr.f32.mxu0 %v2538
        %2647 = vmatmul.mubr.f32.gmra.mrb[0].mxu0 %v2068
        %v2648 = vpop.f32.mrb[0].mxu0
        %v2649 = vadd.f32 0.0, %v2648
        %v2650 = vpop.f32.mrb[0].mxu0
        %v2651 = vadd.f32 0.0, %v2650
        %2652 = vdwg.mxu0
        %v2653 = vadd.f32 %v2460, %v2607
        %v2654 = vadd.f32 %v2461, %v2609
        %v2655 = vadd.f32 %v2462, %v2613
        %v2656 = vadd.f32 %v2463, %v2615
        %v2657 = vadd.f32 %v2464, %v2619
        %v2658 = vadd.f32 %v2465, %v2621
        %v2659 = vadd.f32 %v2466, %v2625
        %v2660 = vadd.f32 %v2467, %v2627
        %v2661 = vadd.f32 %v2468, %v2631
        %v2662 = vadd.f32 %v2469, %v2633
        %v2663 = vadd.f32 %v2470, %v2637
        %v2664 = vadd.f32 %v2471, %v2639
        %v2665 = vadd.f32 %v2472, %v2643
        %v2666 = vadd.f32 %v2473, %v2645
        %v2667 = vadd.f32 %v2474, %v2649
        %v2668 = vadd.f32 %v2475, %v2651
        %s2669 = scalar_lea.vmem %s4, 1440
        %v2670 = vld [vmem:[%s2669] sm:$0xff]
        %v2671 = vld [vmem:[%s2669 + $0x8] sm:$0xff]
        %v2672 = vld [vmem:[%s2669 + $0x10] sm:$0xff]
        %v2673 = vld [vmem:[%s2669 + $0x18] sm:$0xff]
        %v2674 = vld [vmem:[%s2669 + $0x20] sm:$0xff]
        %v2675 = vld [vmem:[%s2669 + $0x28] sm:$0xff]
        %v2676 = vld [vmem:[%s2669 + $0x30] sm:$0xff]
        %v2677 = vld [vmem:[%s2669 + $0x38] sm:$0xff]
        %v2678 = vld [vmem:[%s2669 + $0x40] sm:$0xff]
        %v2679 = vld [vmem:[%s2669 + $0x48] sm:$0xff]
        %v2680 = vld [vmem:[%s2669 + $0x50] sm:$0xff]
        %v2681 = vld [vmem:[%s2669 + $0x58] sm:$0xff]
        %v2682 = vld [vmem:[%s2669 + $0x60] sm:$0xff]
        %v2683 = vld [vmem:[%s2669 + $0x68] sm:$0xff]
        %v2684 = vld [vmem:[%s2669 + $0x70] sm:$0xff]
        %v2685 = vld [vmem:[%s2669 + $0x78] sm:$0xff]
        %v2686 = vld [vmem:[%s2669 + $0x80] sm:$0xff]
        %v2687 = vld [vmem:[%s2669 + $0x88] sm:$0xff]
        %v2688 = vld [vmem:[%s2669 + $0x90] sm:$0xff]
        %v2689 = vld [vmem:[%s2669 + $0x98] sm:$0xff]
        %v2690 = vld [vmem:[%s2669 + $0xa0] sm:$0xff]
        %v2691 = vld [vmem:[%s2669 + $0xa8] sm:$0xff]
        %v2692 = vld [vmem:[%s2669 + $0xb0] sm:$0xff]
        %v2693 = vld [vmem:[%s2669 + $0xb8] sm:$0xff]
        %v2694 = vld [vmem:[%s2669 + $0xc0] sm:$0xff]
        %v2695 = vld [vmem:[%s2669 + $0xc8] sm:$0xff]
        %v2696 = vld [vmem:[%s2669 + $0xd0] sm:$0xff]
        %v2697 = vld [vmem:[%s2669 + $0xd8] sm:$0xff]
        %v2698 = vld [vmem:[%s2669 + $0xe0] sm:$0xff]
        %v2699 = vld [vmem:[%s2669 + $0xe8] sm:$0xff]
        %v2700 = vld [vmem:[%s2669 + $0xf0] sm:$0xff]
        %v2701 = vld [vmem:[%s2669 + $0xf8] sm:$0xff]
        %v2702 = vld [vmem:[%s2669 + $0x100] sm:$0xff]
        %v2703 = vld [vmem:[%s2669 + $0x108] sm:$0xff]
        %v2704 = vld [vmem:[%s2669 + $0x110] sm:$0xff]
        %v2705 = vld [vmem:[%s2669 + $0x118] sm:$0xff]
        %v2706 = vld [vmem:[%s2669 + $0x120] sm:$0xff]
        %v2707 = vld [vmem:[%s2669 + $0x128] sm:$0xff]
        %v2708 = vld [vmem:[%s2669 + $0x130] sm:$0xff]
        %v2709 = vld [vmem:[%s2669 + $0x138] sm:$0xff]
        %v2710 = vld [vmem:[%s2669 + $0x140] sm:$0xff]
        %v2711 = vld [vmem:[%s2669 + $0x148] sm:$0xff]
        %v2712 = vld [vmem:[%s2669 + $0x150] sm:$0xff]
        %v2713 = vld [vmem:[%s2669 + $0x158] sm:$0xff]
        %v2714 = vld [vmem:[%s2669 + $0x160] sm:$0xff]
        %v2715 = vld [vmem:[%s2669 + $0x168] sm:$0xff]
        %v2716 = vld [vmem:[%s2669 + $0x170] sm:$0xff]
        %v2717 = vld [vmem:[%s2669 + $0x178] sm:$0xff]
        %v2718 = vld [vmem:[%s2669 + $0x180] sm:$0xff]
        %v2719 = vld [vmem:[%s2669 + $0x188] sm:$0xff]
        %v2720 = vld [vmem:[%s2669 + $0x190] sm:$0xff]
        %v2721 = vld [vmem:[%s2669 + $0x198] sm:$0xff]
        %v2722 = vld [vmem:[%s2669 + $0x1a0] sm:$0xff]
        %v2723 = vld [vmem:[%s2669 + $0x1a8] sm:$0xff]
        %v2724 = vld [vmem:[%s2669 + $0x1b0] sm:$0xff]
        %v2725 = vld [vmem:[%s2669 + $0x1b8] sm:$0xff]
        %v2726 = vld [vmem:[%s2669 + $0x1c0] sm:$0xff]
        %v2727 = vld [vmem:[%s2669 + $0x1c8] sm:$0xff]
        %v2728 = vld [vmem:[%s2669 + $0x1d0] sm:$0xff]
        %v2729 = vld [vmem:[%s2669 + $0x1d8] sm:$0xff]
        %v2731 = vsel %vm1852, %v2071, 0
        %2733 = vmatprep.subr.mxu0 %v2671
        %2734 = vmatpush1.msra.mxu0 %v2670
        %2735 = vmatprep.subr.mxu0 %v2673
        %2736 = vmatpush1.msra.mxu0 %v2672
        %2737 = vmatprep.subr.mxu0 %v2675
        %2738 = vmatpush1.msra.mxu0 %v2674
        %2739 = vmatprep.subr.mxu0 %v2677
        %2740 = vmatpush1.msra.mxu0 %v2676
        %2741 = vmatprep.subr.mxu0 %v2679
        %2742 = vmatpush1.msra.mxu0 %v2678
        %2743 = vmatprep.subr.mxu0 %v2681
        %2744 = vmatpush1.msra.mxu0 %v2680
        %2745 = vmatprep.subr.mxu0 %v2683
        %2746 = vmatpush1.msra.mxu0 %v2682
        %2747 = vmatprep.subr.mxu0 %v2685
        %2748 = vmatpush1.msra.mxu0 %v2684
        %2749 = vmatprep.subr.mxu0 %v2687
        %2750 = vmatpush1.msra.mxu0 %v2686
        %2751 = vmatprep.subr.mxu0 %v2689
        %2752 = vmatpush1.msra.mxu0 %v2688
        %2753 = vmatprep.subr.mxu0 %v2691
        %2754 = vmatpush1.msra.mxu0 %v2690
        %2755 = vmatprep.subr.mxu0 %v2693
        %2756 = vmatpush1.msra.mxu0 %v2692
        %2757 = vmatprep.subr.mxu0 %v2695
        %2758 = vmatpush1.msra.mxu0 %v2694
        %2759 = vmatprep.subr.mxu0 %v2697
        %2760 = vmatpush1.msra.mxu0 %v2696
        %2761 = vmatprep.subr.mxu0 %v2699
        %2762 = vmatpush1.msra.mxu0 %v2698
        %2763 = vmatprep.subr.mxu0 %v2701
        %2764 = vmatpush1.msra.mxu0 %v2700
        %2765 = vmatprep.subr.mxu0 %v2703
        %2766 = vmatpush1.msra.mxu0 %v2702
        %2767 = vmatprep.subr.mxu0 %v2705
        %2768 = vmatpush1.msra.mxu0 %v2704
        %2769 = vmatprep.subr.mxu0 %v2707
        %2770 = vmatpush1.msra.mxu0 %v2706
        %2771 = vmatprep.subr.mxu0 %v2709
        %2772 = vmatpush1.msra.mxu0 %v2708
        %2773 = vmatprep.subr.mxu0 %v2711
        %2774 = vmatpush1.msra.mxu0 %v2710
        %2775 = vmatprep.subr.mxu0 %v2713
        %2776 = vmatpush1.msra.mxu0 %v2712
        %2777 = vmatprep.subr.mxu0 %v2715
        %2778 = vmatpush1.msra.mxu0 %v2714
        %2779 = vmatprep.subr.mxu0 %v2717
        %2780 = vmatpush1.msra.mxu0 %v2716
        %2781 = vmatprep.subr.mxu0 %v2719
        %2782 = vmatpush1.msra.mxu0 %v2718
        %2783 = vmatprep.subr.mxu0 %v2721
        %2784 = vmatpush1.msra.mxu0 %v2720
        %2785 = vmatprep.subr.mxu0 %v2723
        %2786 = vmatpush1.msra.mxu0 %v2722
        %2787 = vmatprep.subr.mxu0 %v2725
        %2788 = vmatpush1.msra.mxu0 %v2724
        %2789 = vmatprep.subr.mxu0 %v2727
        %2790 = vmatpush1.msra.mxu0 %v2726
        %2791 = vmatprep.subr.mxu0 %v2729
        %2792 = vmatpush1.msra.mxu0 %v2728
        %2793 = vmatprep.subr.mxu0 0.0
        %2794 = vmatpush1.msra.mxu0 0.0
        %2795 = vmatprep.subr.mxu0 0.0
        %2796 = vmatpush1.msra.mxu0 0.0
        %2797 = vmatprep.mubr.f32.mxu0 %v2156
        %2798 = vmatmul.mubr.f32.gmra.mrb[0].mxu0 %v2056
        %v2799 = vpop.f32.mrb[0].mxu0
        %v2800 = vadd.f32 0.0, %v2799
        %v2801 = vpop.f32.mrb[0].mxu0
        %v2802 = vadd.f32 0.0, %v2801
        %2803 = vmatprep.mubr.f32.mxu0 %v2159
        %2804 = vmatmul.mubr.f32.gmra.mrb[0].mxu0 %v2058
        %v2805 = vpop.f32.mrb[0].mxu0
        %v2806 = vadd.f32 0.0, %v2805
        %v2807 = vpop.f32.mrb[0].mxu0
        %v2808 = vadd.f32 0.0, %v2807
        %2809 = vmatprep.mubr.f32.mxu0 %v2162
        %2810 = vmatmul.mubr.f32.gmra.mrb[0].mxu0 %v2060
        %v2811 = vpop.f32.mrb[0].mxu0
        %v2812 = vadd.f32 0.0, %v2811
        %v2813 = vpop.f32.mrb[0].mxu0
        %v2814 = vadd.f32 0.0, %v2813
        %2815 = vmatprep.mubr.f32.mxu0 %v2165
        %2816 = vmatmul.mubr.f32.gmra.mrb[0].mxu0 %v2062
        %v2817 = vpop.f32.mrb[0].mxu0
        %v2818 = vadd.f32 0.0, %v2817
        %v2819 = vpop.f32.mrb[0].mxu0
        %v2820 = vadd.f32 0.0, %v2819
        %2821 = vmatprep.mubr.f32.mxu0 %v2168
        %2822 = vmatmul.mubr.f32.gmra.mrb[0].mxu0 %v2064
        %v2823 = vpop.f32.mrb[0].mxu0
        %v2824 = vadd.f32 0.0, %v2823
        %v2825 = vpop.f32.mrb[0].mxu0
        %v2826 = vadd.f32 0.0, %v2825
        %2827 = vmatprep.mubr.f32.mxu0 %v2345
        %2828 = vmatmul.mubr.f32.gmra.mrb[0].mxu0 %v2066
        %v2829 = vpop.f32.mrb[0].mxu0
        %v2830 = vadd.f32 0.0, %v2829
        %v2831 = vpop.f32.mrb[0].mxu0
        %v2832 = vadd.f32 0.0, %v2831
        %2833 = vmatprep.mubr.f32.mxu0 %v2538
        %2834 = vmatmul.mubr.f32.gmra.mrb[0].mxu0 %v2068
        %v2835 = vpop.f32.mrb[0].mxu0
        %v2836 = vadd.f32 0.0, %v2835
        %v2837 = vpop.f32.mrb[0].mxu0
        %v2838 = vadd.f32 0.0, %v2837
        %2839 = vmatprep.mubr.f32.mxu0 %v2731
        %2840 = vmatmul.mubr.f32.gmra.mrb[0].mxu0 %v2070
        %v2841 = vpop.f32.mrb[0].mxu0
        %v2842 = vadd.f32 0.0, %v2841
        %v2843 = vpop.f32.mrb[0].mxu0
        %v2844 = vadd.f32 0.0, %v2843
        %2845 = vdwg.mxu0
        %v2846 = vadd.f32 %v2653, %v2800
        %v2847 = vadd.f32 %v2654, %v2802
        %v2848 = vadd.f32 %v2655, %v2806
        %v2849 = vadd.f32 %v2656, %v2808
        %v2850 = vadd.f32 %v2657, %v2812
        %v2851 = vadd.f32 %v2658, %v2814
        %v2852 = vadd.f32 %v2659, %v2818
        %v2853 = vadd.f32 %v2660, %v2820
        %v2854 = vadd.f32 %v2661, %v2824
        %v2855 = vadd.f32 %v2662, %v2826
        %v2856 = vadd.f32 %v2663, %v2830
        %v2857 = vadd.f32 %v2664, %v2832
        %v2858 = vadd.f32 %v2665, %v2836
        %v2859 = vadd.f32 %v2666, %v2838
        %v2860 = vadd.f32 %v2667, %v2842
        %v2861 = vadd.f32 %v2668, %v2844
        %s2862 = scalar_lea.vmem %s4, 1920
        %v2863 = vld [vmem:[%s2862] sm:$0xff]
        %v2864 = vld [vmem:[%s2862 + $0x8] sm:$0xff]
        %v2865 = vld [vmem:[%s2862 + $0x10] sm:$0xff]
        %v2866 = vld [vmem:[%s2862 + $0x18] sm:$0xff]
        %v2867 = vld [vmem:[%s2862 + $0x20] sm:$0xff]
        %v2868 = vld [vmem:[%s2862 + $0x28] sm:$0xff]
        %v2869 = vld [vmem:[%s2862 + $0x30] sm:$0xff]
        %v2870 = vld [vmem:[%s2862 + $0x38] sm:$0xff]
        %v2871 = vld [vmem:[%s2862 + $0x40] sm:$0xff]
        %v2872 = vld [vmem:[%s2862 + $0x48] sm:$0xff]
        %v2873 = vld [vmem:[%s2862 + $0x50] sm:$0xff]
        %v2874 = vld [vmem:[%s2862 + $0x58] sm:$0xff]
        %v2875 = vld [vmem:[%s2862 + $0x60] sm:$0xff]
        %v2876 = vld [vmem:[%s2862 + $0x68] sm:$0xff]
        %v2877 = vld [vmem:[%s2862 + $0x70] sm:$0xff]
        %v2878 = vld [vmem:[%s2862 + $0x78] sm:$0xff]
        %v2879 = vld [vmem:[%s2862 + $0x80] sm:$0xff]
        %v2880 = vld [vmem:[%s2862 + $0x88] sm:$0xff]
        %v2881 = vld [vmem:[%s2862 + $0x90] sm:$0xff]
        %v2882 = vld [vmem:[%s2862 + $0x98] sm:$0xff]
        %v2883 = vld [vmem:[%s2862 + $0xa0] sm:$0xff]
        %v2884 = vld [vmem:[%s2862 + $0xa8] sm:$0xff]
        %v2885 = vld [vmem:[%s2862 + $0xb0] sm:$0xff]
        %v2886 = vld [vmem:[%s2862 + $0xb8] sm:$0xff]
        %v2887 = vld [vmem:[%s2862 + $0xc0] sm:$0xff]
        %v2888 = vld [vmem:[%s2862 + $0xc8] sm:$0xff]
        %v2889 = vld [vmem:[%s2862 + $0xd0] sm:$0xff]
        %v2890 = vld [vmem:[%s2862 + $0xd8] sm:$0xff]
        %v2891 = vld [vmem:[%s2862 + $0xe0] sm:$0xff]
        %v2892 = vld [vmem:[%s2862 + $0xe8] sm:$0xff]
        %v2893 = vld [vmem:[%s2862 + $0xf0] sm:$0xff]
        %v2894 = vld [vmem:[%s2862 + $0xf8] sm:$0xff]
        %v2895 = vld [vmem:[%s2862 + $0x100] sm:$0xff]
        %v2896 = vld [vmem:[%s2862 + $0x108] sm:$0xff]
        %v2897 = vld [vmem:[%s2862 + $0x110] sm:$0xff]
        %v2898 = vld [vmem:[%s2862 + $0x118] sm:$0xff]
        %v2899 = vld [vmem:[%s2862 + $0x120] sm:$0xff]
        %v2900 = vld [vmem:[%s2862 + $0x128] sm:$0xff]
        %v2901 = vld [vmem:[%s2862 + $0x130] sm:$0xff]
        %v2902 = vld [vmem:[%s2862 + $0x138] sm:$0xff]
        %v2903 = vld [vmem:[%s2862 + $0x140] sm:$0xff]
        %v2904 = vld [vmem:[%s2862 + $0x148] sm:$0xff]
        %v2905 = vld [vmem:[%s2862 + $0x150] sm:$0xff]
        %v2906 = vld [vmem:[%s2862 + $0x158] sm:$0xff]
        %v2907 = vld [vmem:[%s2862 + $0x160] sm:$0xff]
        %v2908 = vld [vmem:[%s2862 + $0x168] sm:$0xff]
        %v2909 = vld [vmem:[%s2862 + $0x170] sm:$0xff]
        %v2910 = vld [vmem:[%s2862 + $0x178] sm:$0xff]
        %v2911 = vld [vmem:[%s2862 + $0x180] sm:$0xff]
        %v2912 = vld [vmem:[%s2862 + $0x188] sm:$0xff]
        %v2913 = vld [vmem:[%s2862 + $0x190] sm:$0xff]
        %v2914 = vld [vmem:[%s2862 + $0x198] sm:$0xff]
        %v2915 = vld [vmem:[%s2862 + $0x1a0] sm:$0xff]
        %v2916 = vld [vmem:[%s2862 + $0x1a8] sm:$0xff]
        %v2917 = vld [vmem:[%s2862 + $0x1b0] sm:$0xff]
        %v2918 = vld [vmem:[%s2862 + $0x1b8] sm:$0xff]
        %v2919 = vld [vmem:[%s2862 + $0x1c0] sm:$0xff]
        %v2920 = vld [vmem:[%s2862 + $0x1c8] sm:$0xff]
        %v2921 = vld [vmem:[%s2862 + $0x1d0] sm:$0xff]
        %v2922 = vld [vmem:[%s2862 + $0x1d8] sm:$0xff]
        %v2924 = vsel %vm1852, %v2073, 0
        %2926 = vmatprep.subr.mxu0 %v2864
        %2927 = vmatpush1.msra.mxu0 %v2863
        %2928 = vmatprep.subr.mxu0 %v2866
        %2929 = vmatpush1.msra.mxu0 %v2865
        %2930 = vmatprep.subr.mxu0 %v2868
        %2931 = vmatpush1.msra.mxu0 %v2867
        %2932 = vmatprep.subr.mxu0 %v2870
        %2933 = vmatpush1.msra.mxu0 %v2869
        %2934 = vmatprep.subr.mxu0 %v2872
        %2935 = vmatpush1.msra.mxu0 %v2871
        %2936 = vmatprep.subr.mxu0 %v2874
        %2937 = vmatpush1.msra.mxu0 %v2873
        %2938 = vmatprep.subr.mxu0 %v2876
        %2939 = vmatpush1.msra.mxu0 %v2875
        %2940 = vmatprep.subr.mxu0 %v2878
        %2941 = vmatpush1.msra.mxu0 %v2877
        %2942 = vmatprep.subr.mxu0 %v2880
        %2943 = vmatpush1.msra.mxu0 %v2879
        %2944 = vmatprep.subr.mxu0 %v2882
        %2945 = vmatpush1.msra.mxu0 %v2881
        %2946 = vmatprep.subr.mxu0 %v2884
        %2947 = vmatpush1.msra.mxu0 %v2883
        %2948 = vmatprep.subr.mxu0 %v2886
        %2949 = vmatpush1.msra.mxu0 %v2885
        %2950 = vmatprep.subr.mxu0 %v2888
        %2951 = vmatpush1.msra.mxu0 %v2887
        %2952 = vmatprep.subr.mxu0 %v2890
        %2953 = vmatpush1.msra.mxu0 %v2889
        %2954 = vmatprep.subr.mxu0 %v2892
        %2955 = vmatpush1.msra.mxu0 %v2891
        %2956 = vmatprep.subr.mxu0 %v2894
        %2957 = vmatpush1.msra.mxu0 %v2893
        %2958 = vmatprep.subr.mxu0 %v2896
        %2959 = vmatpush1.msra.mxu0 %v2895
        %2960 = vmatprep.subr.mxu0 %v2898
        %2961 = vmatpush1.msra.mxu0 %v2897
        %2962 = vmatprep.subr.mxu0 %v2900
        %2963 = vmatpush1.msra.mxu0 %v2899
        %2964 = vmatprep.subr.mxu0 %v2902
        %2965 = vmatpush1.msra.mxu0 %v2901
        %2966 = vmatprep.subr.mxu0 %v2904
        %2967 = vmatpush1.msra.mxu0 %v2903
        %2968 = vmatprep.subr.mxu0 %v2906
        %2969 = vmatpush1.msra.mxu0 %v2905
        %2970 = vmatprep.subr.mxu0 %v2908
        %2971 = vmatpush1.msra.mxu0 %v2907
        %2972 = vmatprep.subr.mxu0 %v2910
        %2973 = vmatpush1.msra.mxu0 %v2909
        %2974 = vmatprep.subr.mxu0 %v2912
        %2975 = vmatpush1.msra.mxu0 %v2911
        %2976 = vmatprep.subr.mxu0 %v2914
        %2977 = vmatpush1.msra.mxu0 %v2913
        %2978 = vmatprep.subr.mxu0 %v2916
        %2979 = vmatpush1.msra.mxu0 %v2915
        %2980 = vmatprep.subr.mxu0 %v2918
        %2981 = vmatpush1.msra.mxu0 %v2917
        %2982 = vmatprep.subr.mxu0 %v2920
        %2983 = vmatpush1.msra.mxu0 %v2919
        %2984 = vmatprep.subr.mxu0 %v2922
        %2985 = vmatpush1.msra.mxu0 %v2921
        %2986 = vmatprep.subr.mxu0 0.0
        %2987 = vmatpush1.msra.mxu0 0.0
        %2988 = vmatprep.subr.mxu0 0.0
        %2989 = vmatpush1.msra.mxu0 0.0
        %2990 = vmatprep.mubr.f32.mxu0 %v2159
        %2991 = vmatmul.mubr.f32.gmra.mrb[0].mxu0 %v2058
        %v2992 = vpop.f32.mrb[0].mxu0
        %v2993 = vadd.f32 0.0, %v2992
        %v2994 = vpop.f32.mrb[0].mxu0
        %v2995 = vadd.f32 0.0, %v2994
        %2996 = vmatprep.mubr.f32.mxu0 %v2162
        %2997 = vmatmul.mubr.f32.gmra.mrb[0].mxu0 %v2060
        %v2998 = vpop.f32.mrb[0].mxu0
        %v2999 = vadd.f32 0.0, %v2998
        %v3000 = vpop.f32.mrb[0].mxu0
        %v3001 = vadd.f32 0.0, %v3000
        %3002 = vmatprep.mubr.f32.mxu0 %v2165
        %3003 = vmatmul.mubr.f32.gmra.mrb[0].mxu0 %v2062
        %v3004 = vpop.f32.mrb[0].mxu0
        %v3005 = vadd.f32 0.0, %v3004
        %v3006 = vpop.f32.mrb[0].mxu0
        %v3007 = vadd.f32 0.0, %v3006
        %3008 = vmatprep.mubr.f32.mxu0 %v2168
        %3009 = vmatmul.mubr.f32.gmra.mrb[0].mxu0 %v2064
        %v3010 = vpop.f32.mrb[0].mxu0
        %v3011 = vadd.f32 0.0, %v3010
        %v3012 = vpop.f32.mrb[0].mxu0
        %v3013 = vadd.f32 0.0, %v3012
        %3014 = vmatprep.mubr.f32.mxu0 %v2345
        %3015 = vmatmul.mubr.f32.gmra.mrb[0].mxu0 %v2066
        %v3016 = vpop.f32.mrb[0].mxu0
        %v3017 = vadd.f32 0.0, %v3016
        %v3018 = vpop.f32.mrb[0].mxu0
        %v3019 = vadd.f32 0.0, %v3018
        %3020 = vmatprep.mubr.f32.mxu0 %v2538
        %3021 = vmatmul.mubr.f32.gmra.mrb[0].mxu0 %v2068
        %v3022 = vpop.f32.mrb[0].mxu0
        %v3023 = vadd.f32 0.0, %v3022
        %v3024 = vpop.f32.mrb[0].mxu0
        %v3025 = vadd.f32 0.0, %v3024
        %3026 = vmatprep.mubr.f32.mxu0 %v2731
        %3027 = vmatmul.mubr.f32.gmra.mrb[0].mxu0 %v2070
        %v3028 = vpop.f32.mrb[0].mxu0
        %v3029 = vadd.f32 0.0, %v3028
        %v3030 = vpop.f32.mrb[0].mxu0
        %v3031 = vadd.f32 0.0, %v3030
        %3032 = vmatprep.mubr.f32.mxu0 %v2924
        %3033 = vmatmul.mubr.f32.gmra.mrb[0].mxu0 %v2072
        %v3034 = vpop.f32.mrb[0].mxu0
        %v3035 = vadd.f32 0.0, %v3034
        %v3036 = vpop.f32.mrb[0].mxu0
        %v3037 = vadd.f32 0.0, %v3036
        %3038 = vdwg.mxu0
        %v3039 = vadd.f32 %v2846, %v2993
        %v3040 = vadd.f32 %v2847, %v2995
        %v3041 = vadd.f32 %v2848, %v2999
        %v3042 = vadd.f32 %v2849, %v3001
        %v3043 = vadd.f32 %v2850, %v3005
        %v3044 = vadd.f32 %v2851, %v3007
        %v3045 = vadd.f32 %v2852, %v3011
        %v3046 = vadd.f32 %v2853, %v3013
        %v3047 = vadd.f32 %v2854, %v3017
        %v3048 = vadd.f32 %v2855, %v3019
        %v3049 = vadd.f32 %v2856, %v3023
        %v3050 = vadd.f32 %v2857, %v3025
        %v3051 = vadd.f32 %v2858, %v3029
        %v3052 = vadd.f32 %v2859, %v3031
        %v3053 = vadd.f32 %v2860, %v3035
        %v3054 = vadd.f32 %v2861, %v3037
        %v3055 = vmax.f32 %v3039, %v3041
        %v3056 = vmax.f32 %v3040, %v3042
        %v3057 = vmax.f32 %v3043, %v3045
        %v3058 = vmax.f32 %v3044, %v3046
        %v3059 = vmax.f32 %v3047, %v3049
        %v3060 = vmax.f32 %v3048, %v3050
        %v3061 = vmax.f32 %v3051, %v3053
        %v3062 = vmax.f32 %v3052, %v3054
        %v3063 = vld [vmem:[%s6] sm:$0xff]
        %v3064 = vld [vmem:[%s6 + $0x8] sm:$0xff]
        %v3065 = vld [vmem:[%s6 + $0x10] sm:$0xff]
        %v3066 = vld [vmem:[%s6 + $0x18] sm:$0xff]
        %v3067 = vld [vmem:[%s6 + $0x20] sm:$0xff]
        %v3068 = vld [vmem:[%s6 + $0x28] sm:$0xff]
        %v3069 = vld [vmem:[%s6 + $0x30] sm:$0xff]
        %v3070 = vld [vmem:[%s6 + $0x38] sm:$0xff]
        %v3071 = vld [vmem:[%s6 + $0x40] sm:$0xff]
        %v3072 = vld [vmem:[%s6 + $0x48] sm:$0xff]
        %v3073 = vld [vmem:[%s6 + $0x50] sm:$0xff]
        %v3074 = vld [vmem:[%s6 + $0x58] sm:$0xff]
        %v3075 = vld [vmem:[%s6 + $0x60] sm:$0xff]
        %v3076 = vld [vmem:[%s6 + $0x68] sm:$0xff]
        %v3077 = vld [vmem:[%s6 + $0x70] sm:$0xff]
        %v3078 = vld [vmem:[%s6 + $0x78] sm:$0xff]
        %v3079 = vld [vmem:[%s6 + $0x80] sm:$0xff]
        %v3080 = vld [vmem:[%s6 + $0x88] sm:$0xff]
        %v3081 = vld [vmem:[%s6 + $0x90] sm:$0xff]
        %v3082 = vld [vmem:[%s6 + $0x98] sm:$0xff]
        %v3083 = vld [vmem:[%s6 + $0xa0] sm:$0xff]
        %v3084 = vld [vmem:[%s6 + $0xa8] sm:$0xff]
        %v3085 = vld [vmem:[%s6 + $0xb0] sm:$0xff]
        %v3086 = vld [vmem:[%s6 + $0xb8] sm:$0xff]
        %v3087 = vld [vmem:[%s6 + $0xc0] sm:$0xff]
        %v3088 = vld [vmem:[%s6 + $0xc8] sm:$0xff]
        %v3089 = vld [vmem:[%s6 + $0xd0] sm:$0xff]
        %v3090 = vld [vmem:[%s6 + $0xd8] sm:$0xff]
        %v3091 = vld [vmem:[%s6 + $0xe0] sm:$0xff]
        %v3092 = vld [vmem:[%s6 + $0xe8] sm:$0xff]
        %v3093 = vld [vmem:[%s6 + $0xf0] sm:$0xff]
        %v3094 = vld [vmem:[%s6 + $0xf8] sm:$0xff]
        %v3095 = vld [vmem:[%s6 + $0x100] sm:$0xff]
        %v3096 = vld [vmem:[%s6 + $0x108] sm:$0xff]
        %v3097 = vld [vmem:[%s6 + $0x110] sm:$0xff]
        %v3098 = vld [vmem:[%s6 + $0x118] sm:$0xff]
        %v3099 = vld [vmem:[%s6 + $0x120] sm:$0xff]
        %v3100 = vld [vmem:[%s6 + $0x128] sm:$0xff]
        %v3101 = vld [vmem:[%s6 + $0x130] sm:$0xff]
        %v3102 = vld [vmem:[%s6 + $0x138] sm:$0xff]
        %vm3103 = vcmask 261120
        %v3105 = vsel %vm3103, %v3056, 0
        %v3108 = vsel %vm3103, %v3058, 0
        %v3111 = vsel %vm3103, %v3060, 0
        %v3114 = vsel %vm3103, %v3062, 0
        %3116 = vmatprep.subr.mxu0 %v3064
        %3117 = vmatpush1.msra.mxu0 %v3063
        %3118 = vmatprep.subr.mxu0 %v3066
        %3119 = vmatpush1.msra.mxu0 %v3065
        %3120 = vmatprep.subr.mxu0 %v3068
        %3121 = vmatpush1.msra.mxu0 %v3067
        %3122 = vmatprep.subr.mxu0 %v3070
        %3123 = vmatpush1.msra.mxu0 %v3069
        %3124 = vmatprep.subr.mxu0 %v3072
        %3125 = vmatpush1.msra.mxu0 %v3071
        %3126 = vmatprep.subr.mxu0 %v3074
        %3127 = vmatpush1.msra.mxu0 %v3073
        %3128 = vmatprep.subr.mxu0 %v3076
        %3129 = vmatpush1.msra.mxu0 %v3075
        %3130 = vmatprep.subr.mxu0 %v3078
        %3131 = vmatpush1.msra.mxu0 %v3077
        %3132 = vmatprep.subr.mxu0 %v3080
        %3133 = vmatpush1.msra.mxu0 %v3079
        %3134 = vmatprep.subr.mxu0 %v3082
        %3135 = vmatpush1.msra.mxu0 %v3081
        %3136 = vmatprep.subr.mxu0 %v3084
        %3137 = vmatpush1.msra.mxu0 %v3083
        %3138 = vmatprep.subr.mxu0 %v3086
        %3139 = vmatpush1.msra.mxu0 %v3085
        %3140 = vmatprep.subr.mxu0 %v3088
        %3141 = vmatpush1.msra.mxu0 %v3087
        %3142 = vmatprep.subr.mxu0 %v3090
        %3143 = vmatpush1.msra.mxu0 %v3089
        %3144 = vmatprep.subr.mxu0 %v3092
        %3145 = vmatpush1.msra.mxu0 %v3091
        %3146 = vmatprep.subr.mxu0 %v3094
        %3147 = vmatpush1.msra.mxu0 %v3093
        %3148 = vmatprep.subr.mxu0 %v3096
        %3149 = vmatpush1.msra.mxu0 %v3095
        %3150 = vmatprep.subr.mxu0 %v3098
        %3151 = vmatpush1.msra.mxu0 %v3097
        %3152 = vmatprep.subr.mxu0 %v3100
        %3153 = vmatpush1.msra.mxu0 %v3099
        %3154 = vmatprep.subr.mxu0 %v3102
        %3155 = vmatpush1.msra.mxu0 %v3101
        %3156 = vmatprep.subr.mxu0 0.0
        %3157 = vmatpush1.msra.mxu0 0.0
        %3158 = vmatprep.subr.mxu0 0.0
        %3159 = vmatpush1.msra.mxu0 0.0
        %3160 = vmatprep.subr.mxu0 0.0
        %3161 = vmatpush1.msra.mxu0 0.0
        %3162 = vmatprep.subr.mxu0 0.0
        %3163 = vmatpush1.msra.mxu0 0.0
        %3164 = vmatprep.subr.mxu0 0.0
        %3165 = vmatpush1.msra.mxu0 0.0
        %3166 = vmatprep.subr.mxu0 0.0
        %3167 = vmatpush1.msra.mxu0 0.0
        %3168 = vmatprep.subr.mxu0 0.0
        %3169 = vmatpush1.msra.mxu0 0.0
        %3170 = vmatprep.subr.mxu0 0.0
        %3171 = vmatpush1.msra.mxu0 0.0
        %3172 = vmatprep.subr.mxu0 0.0
        %3173 = vmatpush1.msra.mxu0 0.0
        %3174 = vmatprep.subr.mxu0 0.0
        %3175 = vmatpush1.msra.mxu0 0.0
        %3176 = vmatprep.subr.mxu0 0.0
        %3177 = vmatpush1.msra.mxu0 0.0
        %3178 = vmatprep.subr.mxu0 0.0
        %3179 = vmatpush1.msra.mxu0 0.0
        %3180 = vmatprep.mubr.f32.mxu0 %v3105
        %3181 = vmatmul.mubr.f32.gmra.mrb[0].mxu0 %v3055
        %v3182 = vpop.f32.mrb[0].mxu0
        %v3183 = vadd.f32 0.0, %v3182
        %v3184 = vpop.f32.mrb[0].mxu0
        %v3185 = vadd.f32 0.0, %v3184
        %3186 = vmatprep.mubr.f32.mxu0 %v3108
        %3187 = vmatmul.mubr.f32.gmra.mrb[0].mxu0 %v3057
        %v3188 = vpop.f32.mrb[0].mxu0
        %v3189 = vadd.f32 0.0, %v3188
        %v3190 = vpop.f32.mrb[0].mxu0
        %v3191 = vadd.f32 0.0, %v3190
        %3192 = vmatprep.mubr.f32.mxu0 %v3111
        %3193 = vmatmul.mubr.f32.gmra.mrb[0].mxu0 %v3059
        %v3194 = vpop.f32.mrb[0].mxu0
        %v3195 = vadd.f32 0.0, %v3194
        %v3196 = vpop.f32.mrb[0].mxu0
        %v3197 = vadd.f32 0.0, %v3196
        %3198 = vmatprep.mubr.f32.mxu0 %v3114
        %3199 = vmatmul.mubr.f32.gmra.mrb[0].mxu0 %v3061
        %v3200 = vpop.f32.mrb[0].mxu0
        %v3201 = vadd.f32 0.0, %v3200
        %v3202 = vpop.f32.mrb[0].mxu0
        %v3203 = vadd.f32 0.0, %v3202
        %3204 = vdwg.mxu0
        %v3205 = vmax.f32 %v3055, %v3183
        %v3206 = vmax.f32 %v3056, %v3185
        %v3207 = vmax.f32 %v3057, %v3189
        %v3208 = vmax.f32 %v3058, %v3191
        %v3209 = vmax.f32 %v3059, %v3195
        %v3210 = vmax.f32 %v3060, %v3197
        %v3211 = vmax.f32 %v3061, %v3201
        %v3212 = vmax.f32 %v3062, %v3203
        %v3213 = vmax.f32 %v3205, 0.0
        %v3214 = vmax.f32 %v3206, 0.0
        %v3215 = vmax.f32 %v3207, 0.0
        %v3216 = vmax.f32 %v3208, 0.0
        %v3217 = vmax.f32 %v3209, 0.0
        %v3218 = vmax.f32 %v3210, 0.0
        %v3219 = vmax.f32 %v3211, 0.0
        %v3220 = vmax.f32 %v3212, 0.0
        %v3221 = vld [vmem:[%s7] sm:$0xff]
        %v3222 = vld [vmem:[%s7 + $0x8] sm:$0xff]
        %v3223 = vld [vmem:[%s7 + $0x10] sm:$0xff]
        %v3224 = vld [vmem:[%s7 + $0x18] sm:$0xff]
        %v3225 = vld [vmem:[%s7 + $0x20] sm:$0xff]
        %v3226 = vld [vmem:[%s7 + $0x28] sm:$0xff]
        %v3227 = vld [vmem:[%s7 + $0x30] sm:$0xff]
        %v3228 = vld [vmem:[%s7 + $0x38] sm:$0xff]
        %v3229 = vld [vmem:[%s7 + $0x40] sm:$0xff]
        %v3230 = vld [vmem:[%s7 + $0x48] sm:$0xff]
        %v3231 = vld [vmem:[%s7 + $0x50] sm:$0xff]
        %v3232 = vld [vmem:[%s7 + $0x58] sm:$0xff]
        %v3233 = vld [vmem:[%s7 + $0x60] sm:$0xff]
        %v3234 = vld [vmem:[%s7 + $0x68] sm:$0xff]
        %v3235 = vld [vmem:[%s7 + $0x70] sm:$0xff]
        %v3236 = vld [vmem:[%s7 + $0x78] sm:$0xff]
        %v3237 = vld [vmem:[%s7 + $0x80] sm:$0xff]
        %v3238 = vld [vmem:[%s7 + $0x88] sm:$0xff]
        %v3239 = vld [vmem:[%s7 + $0x90] sm:$0xff]
        %v3240 = vld [vmem:[%s7 + $0x98] sm:$0xff]
        %v3241 = vld [vmem:[%s8] sm:$0x1]
        %v3243 = vlaneseq
        %v3244 = vshrl.u32 %v3243, 7
        %v3245 = vsub.s32 0, %v3244
        %v3246 = vrot.slane %v3241, %v3245
        %v3249 = vsel %vm3103, %v3214, 0
        %3251 = vmatprep.subr.mxu0 0.0
        %3252 = vmatpush1.msra.mxu0 %v3221
        %3253 = vmatprep.subr.mxu0 0.0
        %3254 = vmatpush1.msra.mxu0 %v3222
        %3255 = vmatprep.subr.mxu0 0.0
        %3256 = vmatpush1.msra.mxu0 %v3223
        %3257 = vmatprep.subr.mxu0 0.0
        %3258 = vmatpush1.msra.mxu0 %v3224
        %3259 = vmatprep.subr.mxu0 0.0
        %3260 = vmatpush1.msra.mxu0 %v3225
        %3261 = vmatprep.subr.mxu0 0.0
        %3262 = vmatpush1.msra.mxu0 %v3226
        %3263 = vmatprep.subr.mxu0 0.0
        %3264 = vmatpush1.msra.mxu0 %v3227
        %3265 = vmatprep.subr.mxu0 0.0
        %3266 = vmatpush1.msra.mxu0 %v3228
        %3267 = vmatprep.subr.mxu0 0.0
        %3268 = vmatpush1.msra.mxu0 %v3229
        %3269 = vmatprep.subr.mxu0 0.0
        %3270 = vmatpush1.msra.mxu0 %v3230
        %3271 = vmatprep.subr.mxu0 0.0
        %3272 = vmatpush1.msra.mxu0 %v3231
        %3273 = vmatprep.subr.mxu0 0.0
        %3274 = vmatpush1.msra.mxu0 %v3232
        %3275 = vmatprep.subr.mxu0 0.0
        %3276 = vmatpush1.msra.mxu0 %v3233
        %3277 = vmatprep.subr.mxu0 0.0
        %3278 = vmatpush1.msra.mxu0 %v3234
        %3279 = vmatprep.subr.mxu0 0.0
        %3280 = vmatpush1.msra.mxu0 %v3235
        %3281 = vmatprep.subr.mxu0 0.0
        %3282 = vmatpush1.msra.mxu0 %v3236
        %3283 = vmatprep.subr.mxu0 0.0
        %3284 = vmatpush1.msra.mxu0 %v3237
        %3285 = vmatprep.subr.mxu0 0.0
        %3286 = vmatpush1.msra.mxu0 %v3238
        %3287 = vmatprep.subr.mxu0 0.0
        %3288 = vmatpush1.msra.mxu0 %v3239
        %3289 = vmatprep.subr.mxu0 0.0
        %3290 = vmatpush1.msra.mxu0 %v3240
        %3291 = vmatprep.subr.mxu0 0.0
        %3292 = vmatpush1.msra.mxu0 0.0
        %3293 = vmatprep.subr.mxu0 0.0
        %3294 = vmatpush1.msra.mxu0 0.0
        %3295 = vmatprep.subr.mxu0 0.0
        %3296 = vmatpush1.msra.mxu0 0.0
        %3297 = vmatprep.subr.mxu0 0.0
        %3298 = vmatpush1.msra.mxu0 0.0
        %3299 = vmatprep.subr.mxu0 0.0
        %3300 = vmatpush1.msra.mxu0 0.0
        %3301 = vmatprep.subr.mxu0 0.0
        %3302 = vmatpush1.msra.mxu0 0.0
        %3303 = vmatprep.subr.mxu0 0.0
        %3304 = vmatpush1.msra.mxu0 0.0
        %3305 = vmatprep.subr.mxu0 0.0
        %3306 = vmatpush1.msra.mxu0 0.0
        %3307 = vmatprep.subr.mxu0 0.0
        %3308 = vmatpush1.msra.mxu0 0.0
        %3309 = vmatprep.subr.mxu0 0.0
        %3310 = vmatpush1.msra.mxu0 0.0
        %3311 = vmatprep.subr.mxu0 0.0
        %3312 = vmatpush1.msra.mxu0 0.0
        %3313 = vmatprep.subr.mxu0 0.0
        %3314 = vmatpush1.msra.mxu0 0.0
        %3315 = vmatprep.mubr.f32.mxu0 %v3249
        %3316 = vmatmul.mubr.f32.gmra.mrb[0].mxu0 %v3213
        %v3317 = vpop.f32.mrb[0].mxu0
        %v3318 = vadd.f32 %v3246, %v3317
        %v3319 = vpop.f32.mrb[0].mxu0
        %3320 = vdwg.mxu0
        %s3321 = scalar_lea.vmem %s7, 160
        %v3322 = vld [vmem:[%s3321] sm:$0xff]
        %v3323 = vld [vmem:[%s3321 + $0x8] sm:$0xff]
        %v3324 = vld [vmem:[%s3321 + $0x10] sm:$0xff]
        %v3325 = vld [vmem:[%s3321 + $0x18] sm:$0xff]
        %v3326 = vld [vmem:[%s3321 + $0x20] sm:$0xff]
        %v3327 = vld [vmem:[%s3321 + $0x28] sm:$0xff]
        %v3328 = vld [vmem:[%s3321 + $0x30] sm:$0xff]
        %v3329 = vld [vmem:[%s3321 + $0x38] sm:$0xff]
        %v3330 = vld [vmem:[%s3321 + $0x40] sm:$0xff]
        %v3331 = vld [vmem:[%s3321 + $0x48] sm:$0xff]
        %v3332 = vld [vmem:[%s3321 + $0x50] sm:$0xff]
        %v3333 = vld [vmem:[%s3321 + $0x58] sm:$0xff]
        %v3334 = vld [vmem:[%s3321 + $0x60] sm:$0xff]
        %v3335 = vld [vmem:[%s3321 + $0x68] sm:$0xff]
        %v3336 = vld [vmem:[%s3321 + $0x70] sm:$0xff]
        %v3337 = vld [vmem:[%s3321 + $0x78] sm:$0xff]
        %v3338 = vld [vmem:[%s3321 + $0x80] sm:$0xff]
        %v3339 = vld [vmem:[%s3321 + $0x88] sm:$0xff]
        %v3340 = vld [vmem:[%s3321 + $0x90] sm:$0xff]
        %v3341 = vld [vmem:[%s3321 + $0x98] sm:$0xff]
        %v3343 = vsel %vm3103, %v3216, 0
        %3345 = vmatprep.subr.mxu0 0.0
        %3346 = vmatpush1.msra.mxu0 %v3322
        %3347 = vmatprep.subr.mxu0 0.0
        %3348 = vmatpush1.msra.mxu0 %v3323
        %3349 = vmatprep.subr.mxu0 0.0
        %3350 = vmatpush1.msra.mxu0 %v3324
        %3351 = vmatprep.subr.mxu0 0.0
        %3352 = vmatpush1.msra.mxu0 %v3325
        %3353 = vmatprep.subr.mxu0 0.0
        %3354 = vmatpush1.msra.mxu0 %v3326
        %3355 = vmatprep.subr.mxu0 0.0
        %3356 = vmatpush1.msra.mxu0 %v3327
        %3357 = vmatprep.subr.mxu0 0.0
        %3358 = vmatpush1.msra.mxu0 %v3328
        %3359 = vmatprep.subr.mxu0 0.0
        %3360 = vmatpush1.msra.mxu0 %v3329
        %3361 = vmatprep.subr.mxu0 0.0
        %3362 = vmatpush1.msra.mxu0 %v3330
        %3363 = vmatprep.subr.mxu0 0.0
        %3364 = vmatpush1.msra.mxu0 %v3331
        %3365 = vmatprep.subr.mxu0 0.0
        %3366 = vmatpush1.msra.mxu0 %v3332
        %3367 = vmatprep.subr.mxu0 0.0
        %3368 = vmatpush1.msra.mxu0 %v3333
        %3369 = vmatprep.subr.mxu0 0.0
        %3370 = vmatpush1.msra.mxu0 %v3334
        %3371 = vmatprep.subr.mxu0 0.0
        %3372 = vmatpush1.msra.mxu0 %v3335
        %3373 = vmatprep.subr.mxu0 0.0
        %3374 = vmatpush1.msra.mxu0 %v3336
        %3375 = vmatprep.subr.mxu0 0.0
        %3376 = vmatpush1.msra.mxu0 %v3337
        %3377 = vmatprep.subr.mxu0 0.0
        %3378 = vmatpush1.msra.mxu0 %v3338
        %3379 = vmatprep.subr.mxu0 0.0
        %3380 = vmatpush1.msra.mxu0 %v3339
        %3381 = vmatprep.subr.mxu0 0.0
        %3382 = vmatpush1.msra.mxu0 %v3340
        %3383 = vmatprep.subr.mxu0 0.0
        %3384 = vmatpush1.msra.mxu0 %v3341
        %3385 = vmatprep.subr.mxu0 0.0
        %3386 = vmatpush1.msra.mxu0 0.0
        %3387 = vmatprep.subr.mxu0 0.0
        %3388 = vmatpush1.msra.mxu0 0.0
        %3389 = vmatprep.subr.mxu0 0.0
        %3390 = vmatpush1.msra.mxu0 0.0
        %3391 = vmatprep.subr.mxu0 0.0
        %3392 = vmatpush1.msra.mxu0 0.0
        %3393 = vmatprep.subr.mxu0 0.0
        %3394 = vmatpush1.msra.mxu0 0.0
        %3395 = vmatprep.subr.mxu0 0.0
        %3396 = vmatpush1.msra.mxu0 0.0
        %3397 = vmatprep.subr.mxu0 0.0
        %3398 = vmatpush1.msra.mxu0 0.0
        %3399 = vmatprep.subr.mxu0 0.0
        %3400 = vmatpush1.msra.mxu0 0.0
        %3401 = vmatprep.subr.mxu0 0.0
        %3402 = vmatpush1.msra.mxu0 0.0
        %3403 = vmatprep.subr.mxu0 0.0
        %3404 = vmatpush1.msra.mxu0 0.0
        %3405 = vmatprep.subr.mxu0 0.0
        %3406 = vmatpush1.msra.mxu0 0.0
        %3407 = vmatprep.subr.mxu0 0.0
        %3408 = vmatpush1.msra.mxu0 0.0
        %3409 = vmatprep.mubr.f32.mxu0 %v3343
        %3410 = vmatmul.mubr.f32.gmra.mrb[0].mxu0 %v3215
        %v3411 = vpop.f32.mrb[0].mxu0
        %v3412 = vadd.f32 0.0, %v3411
        %v3413 = vpop.f32.mrb[0].mxu0
        %3414 = vdwg.mxu0
        %v3415 = vadd.f32 %v3318, %v3412
        %s3416 = scalar_lea.vmem %s7, 320
        %v3417 = vld [vmem:[%s3416] sm:$0xff]
        %v3418 = vld [vmem:[%s3416 + $0x8] sm:$0xff]
        %v3419 = vld [vmem:[%s3416 + $0x10] sm:$0xff]
        %v3420 = vld [vmem:[%s3416 + $0x18] sm:$0xff]
        %v3421 = vld [vmem:[%s3416 + $0x20] sm:$0xff]
        %v3422 = vld [vmem:[%s3416 + $0x28] sm:$0xff]
        %v3423 = vld [vmem:[%s3416 + $0x30] sm:$0xff]
        %v3424 = vld [vmem:[%s3416 + $0x38] sm:$0xff]
        %v3425 = vld [vmem:[%s3416 + $0x40] sm:$0xff]
        %v3426 = vld [vmem:[%s3416 + $0x48] sm:$0xff]
        %v3427 = vld [vmem:[%s3416 + $0x50] sm:$0xff]
        %v3428 = vld [vmem:[%s3416 + $0x58] sm:$0xff]
        %v3429 = vld [vmem:[%s3416 + $0x60] sm:$0xff]
        %v3430 = vld [vmem:[%s3416 + $0x68] sm:$0xff]
        %v3431 = vld [vmem:[%s3416 + $0x70] sm:$0xff]
        %v3432 = vld [vmem:[%s3416 + $0x78] sm:$0xff]
        %v3433 = vld [vmem:[%s3416 + $0x80] sm:$0xff]
        %v3434 = vld [vmem:[%s3416 + $0x88] sm:$0xff]
        %v3435 = vld [vmem:[%s3416 + $0x90] sm:$0xff]
        %v3436 = vld [vmem:[%s3416 + $0x98] sm:$0xff]
        %v3438 = vsel %vm3103, %v3218, 0
        %3440 = vmatprep.subr.mxu0 0.0
        %3441 = vmatpush1.msra.mxu0 %v3417
        %3442 = vmatprep.subr.mxu0 0.0
        %3443 = vmatpush1.msra.mxu0 %v3418
        %3444 = vmatprep.subr.mxu0 0.0
        %3445 = vmatpush1.msra.mxu0 %v3419
        %3446 = vmatprep.subr.mxu0 0.0
        %3447 = vmatpush1.msra.mxu0 %v3420
        %3448 = vmatprep.subr.mxu0 0.0
        %3449 = vmatpush1.msra.mxu0 %v3421
        %3450 = vmatprep.subr.mxu0 0.0
        %3451 = vmatpush1.msra.mxu0 %v3422
        %3452 = vmatprep.subr.mxu0 0.0
        %3453 = vmatpush1.msra.mxu0 %v3423
        %3454 = vmatprep.subr.mxu0 0.0
        %3455 = vmatpush1.msra.mxu0 %v3424
        %3456 = vmatprep.subr.mxu0 0.0
        %3457 = vmatpush1.msra.mxu0 %v3425
        %3458 = vmatprep.subr.mxu0 0.0
        %3459 = vmatpush1.msra.mxu0 %v3426
        %3460 = vmatprep.subr.mxu0 0.0
        %3461 = vmatpush1.msra.mxu0 %v3427
        %3462 = vmatprep.subr.mxu0 0.0
        %3463 = vmatpush1.msra.mxu0 %v3428
        %3464 = vmatprep.subr.mxu0 0.0
        %3465 = vmatpush1.msra.mxu0 %v3429
        %3466 = vmatprep.subr.mxu0 0.0
        %3467 = vmatpush1.msra.mxu0 %v3430
        %3468 = vmatprep.subr.mxu0 0.0
        %3469 = vmatpush1.msra.mxu0 %v3431
        %3470 = vmatprep.subr.mxu0 0.0
        %3471 = vmatpush1.msra.mxu0 %v3432
        %3472 = vmatprep.subr.mxu0 0.0
        %3473 = vmatpush1.msra.mxu0 %v3433
        %3474 = vmatprep.subr.mxu0 0.0
        %3475 = vmatpush1.msra.mxu0 %v3434
        %3476 = vmatprep.subr.mxu0 0.0
        %3477 = vmatpush1.msra.mxu0 %v3435
        %3478 = vmatprep.subr.mxu0 0.0
        %3479 = vmatpush1.msra.mxu0 %v3436
        %3480 = vmatprep.subr.mxu0 0.0
        %3481 = vmatpush1.msra.mxu0 0.0
        %3482 = vmatprep.subr.mxu0 0.0
        %3483 = vmatpush1.msra.mxu0 0.0
        %3484 = vmatprep.subr.mxu0 0.0
        %3485 = vmatpush1.msra.mxu0 0.0
        %3486 = vmatprep.subr.mxu0 0.0
        %3487 = vmatpush1.msra.mxu0 0.0
        %3488 = vmatprep.subr.mxu0 0.0
        %3489 = vmatpush1.msra.mxu0 0.0
        %3490 = vmatprep.subr.mxu0 0.0
        %3491 = vmatpush1.msra.mxu0 0.0
        %3492 = vmatprep.subr.mxu0 0.0
        %3493 = vmatpush1.msra.mxu0 0.0
        %3494 = vmatprep.subr.mxu0 0.0
        %3495 = vmatpush1.msra.mxu0 0.0
        %3496 = vmatprep.subr.mxu0 0.0
        %3497 = vmatpush1.msra.mxu0 0.0
        %3498 = vmatprep.subr.mxu0 0.0
        %3499 = vmatpush1.msra.mxu0 0.0
        %3500 = vmatprep.subr.mxu0 0.0
        %3501 = vmatpush1.msra.mxu0 0.0
        %3502 = vmatprep.subr.mxu0 0.0
        %3503 = vmatpush1.msra.mxu0 0.0
        %3504 = vmatprep.mubr.f32.mxu0 %v3438
        %3505 = vmatmul.mubr.f32.gmra.mrb[0].mxu0 %v3217
        %v3506 = vpop.f32.mrb[0].mxu0
        %v3507 = vadd.f32 0.0, %v3506
        %v3508 = vpop.f32.mrb[0].mxu0
        %3509 = vdwg.mxu0
        %v3510 = vadd.f32 %v3415, %v3507
        %s3511 = scalar_lea.vmem %s7, 480
        %v3512 = vld [vmem:[%s3511] sm:$0xff]
        %v3513 = vld [vmem:[%s3511 + $0x8] sm:$0xff]
        %v3514 = vld [vmem:[%s3511 + $0x10] sm:$0xff]
        %v3515 = vld [vmem:[%s3511 + $0x18] sm:$0xff]
        %v3516 = vld [vmem:[%s3511 + $0x20] sm:$0xff]
        %v3517 = vld [vmem:[%s3511 + $0x28] sm:$0xff]
        %v3518 = vld [vmem:[%s3511 + $0x30] sm:$0xff]
        %v3519 = vld [vmem:[%s3511 + $0x38] sm:$0xff]
        %v3520 = vld [vmem:[%s3511 + $0x40] sm:$0xff]
        %v3521 = vld [vmem:[%s3511 + $0x48] sm:$0xff]
        %v3522 = vld [vmem:[%s3511 + $0x50] sm:$0xff]
        %v3523 = vld [vmem:[%s3511 + $0x58] sm:$0xff]
        %v3524 = vld [vmem:[%s3511 + $0x60] sm:$0xff]
        %v3525 = vld [vmem:[%s3511 + $0x68] sm:$0xff]
        %v3526 = vld [vmem:[%s3511 + $0x70] sm:$0xff]
        %v3527 = vld [vmem:[%s3511 + $0x78] sm:$0xff]
        %v3528 = vld [vmem:[%s3511 + $0x80] sm:$0xff]
        %v3529 = vld [vmem:[%s3511 + $0x88] sm:$0xff]
        %v3530 = vld [vmem:[%s3511 + $0x90] sm:$0xff]
        %v3531 = vld [vmem:[%s3511 + $0x98] sm:$0xff]
        %v3533 = vsel %vm3103, %v3220, 0
        %3535 = vmatprep.subr.mxu0 0.0
        %3536 = vmatpush1.msra.mxu0 %v3512
        %3537 = vmatprep.subr.mxu0 0.0
        %3538 = vmatpush1.msra.mxu0 %v3513
        %3539 = vmatprep.subr.mxu0 0.0
        %3540 = vmatpush1.msra.mxu0 %v3514
        %3541 = vmatprep.subr.mxu0 0.0
        %3542 = vmatpush1.msra.mxu0 %v3515
        %3543 = vmatprep.subr.mxu0 0.0
        %3544 = vmatpush1.msra.mxu0 %v3516
        %3545 = vmatprep.subr.mxu0 0.0
        %3546 = vmatpush1.msra.mxu0 %v3517
        %3547 = vmatprep.subr.mxu0 0.0
        %3548 = vmatpush1.msra.mxu0 %v3518
        %3549 = vmatprep.subr.mxu0 0.0
        %3550 = vmatpush1.msra.mxu0 %v3519
        %3551 = vmatprep.subr.mxu0 0.0
        %3552 = vmatpush1.msra.mxu0 %v3520
        %3553 = vmatprep.subr.mxu0 0.0
        %3554 = vmatpush1.msra.mxu0 %v3521
        %3555 = vmatprep.subr.mxu0 0.0
        %3556 = vmatpush1.msra.mxu0 %v3522
        %3557 = vmatprep.subr.mxu0 0.0
        %3558 = vmatpush1.msra.mxu0 %v3523
        %3559 = vmatprep.subr.mxu0 0.0
        %3560 = vmatpush1.msra.mxu0 %v3524
        %3561 = vmatprep.subr.mxu0 0.0
        %3562 = vmatpush1.msra.mxu0 %v3525
        %3563 = vmatprep.subr.mxu0 0.0
        %3564 = vmatpush1.msra.mxu0 %v3526
        %3565 = vmatprep.subr.mxu0 0.0
        %3566 = vmatpush1.msra.mxu0 %v3527
        %3567 = vmatprep.subr.mxu0 0.0
        %3568 = vmatpush1.msra.mxu0 %v3528
        %3569 = vmatprep.subr.mxu0 0.0
        %3570 = vmatpush1.msra.mxu0 %v3529
        %3571 = vmatprep.subr.mxu0 0.0
        %3572 = vmatpush1.msra.mxu0 %v3530
        %3573 = vmatprep.subr.mxu0 0.0
        %3574 = vmatpush1.msra.mxu0 %v3531
        %3575 = vmatprep.subr.mxu0 0.0
        %3576 = vmatpush1.msra.mxu0 0.0
        %3577 = vmatprep.subr.mxu0 0.0
        %3578 = vmatpush1.msra.mxu0 0.0
        %3579 = vmatprep.subr.mxu0 0.0
        %3580 = vmatpush1.msra.mxu0 0.0
        %3581 = vmatprep.subr.mxu0 0.0
        %3582 = vmatpush1.msra.mxu0 0.0
        %3583 = vmatprep.subr.mxu0 0.0
        %3584 = vmatpush1.msra.mxu0 0.0
        %3585 = vmatprep.subr.mxu0 0.0
        %3586 = vmatpush1.msra.mxu0 0.0
        %3587 = vmatprep.subr.mxu0 0.0
        %3588 = vmatpush1.msra.mxu0 0.0
        %3589 = vmatprep.subr.mxu0 0.0
        %3590 = vmatpush1.msra.mxu0 0.0
        %3591 = vmatprep.subr.mxu0 0.0
        %3592 = vmatpush1.msra.mxu0 0.0
        %3593 = vmatprep.subr.mxu0 0.0
        %3594 = vmatpush1.msra.mxu0 0.0
        %3595 = vmatprep.subr.mxu0 0.0
        %3596 = vmatpush1.msra.mxu0 0.0
        %3597 = vmatprep.subr.mxu0 0.0
        %3598 = vmatpush1.msra.mxu0 0.0
        %3599 = vmatprep.mubr.f32.mxu0 %v3533
        %3600 = vmatmul.mubr.f32.gmra.mrb[0].mxu0 %v3219
        %v3601 = vpop.f32.mrb[0].mxu0
        %v3602 = vadd.f32 0.0, %v3601
        %v3603 = vpop.f32.mrb[0].mxu0
        %3604 = vdwg.mxu0
        %v3605 = vadd.f32 %v3510, %v3602
        %vm3606 = vcmask 80896
        %3607 = vst.msk [vmem:[%s325] sm:$0xff] %vm3606, %v3605
        %s3608 = sand.u32 %s225, 1
        %s3609 = scalar_lea.sflag [#allocation3], %s3608
        %s3610 = sand.u32 %s225, 1
        %s3611 = smul.addr %s3610, 8
        %s3612 = scalar_lea.vmem [#allocation2], %s3611
        // Predicated region
        $region57: #{cnn_forward.1} parent=55 // pred_check
          %p3613 = pneg %p235
        $region58: #{cnn_forward.1} parent=55 // pred_check_branch
          %3615 = sbr.rel (%p3613) target = $region60
        $region59: #{cnn_forward.1} parent=55 // pred_region
          %s3617 = ssub.s32 128, 128
          %3618 = vsyncadd %s3609, %s3617
          %s3619 = smul.addr %s23, 128
          %s3620 = scalar_lea.hbm %s9, %s3619
          %s3622 = sshll.u32 %s3612, 4
          %s3623 = int_to_ptr.vmem [resolvable:$true] %s3622
          %3625 = dma.vmem_to_hbm [thread:$0]  %s3623, 128, %s3620, %s3609
        $region60: #{cnn_forward.1} parent=55 // pred_fallthru
          _
      $region56: #{cnn_forward.1} parent=5 // pred_fallthru
        _
      %p3626 = scmp.le.s32.totalorder 2, %s18
      // Predicated region
      $region61: #{cnn_forward.1} parent=5 // pred_check
        %p3627 = pneg %p3626
      $region62: #{cnn_forward.1} parent=5 // pred_check_branch
        %3629 = sbr.rel (%p3627) target = $region64
      $region63: #{cnn_forward.1} parent=5 // pred_region
        %s3630 = ssub.s32 %s18, 2
        // Predicated region
        $region65: #{cnn_forward.1} parent=63 // pred_check
          %p3631 = pneg %p241
        $region66: #{cnn_forward.1} parent=63 // pred_check_branch
          %3633 = sbr.rel (%p3631) target = $region68
        $region67: #{cnn_forward.1} parent=63 // pred_region
          %s3634 = sand.u32 %s226, 1
          %s3635 = scalar_lea.sflag [#allocation3], %s3634
          %s3636 = sand.u32 %s226, 1
          %s3637 = smul.addr %s3636, 8
          %s3638 = scalar_lea.vmem [#allocation2], %s3637
          %3639 = dma.done %s3635, 128
        $region68: #{cnn_forward.1} parent=63 // pred_fallthru
          _
      $region64: #{cnn_forward.1} parent=5 // pred_fallthru
        _
    $region6: #{cnn_forward.1} parent=1 // loop_footer
      %s22 = sadd.s32 1, %s18
    $region7: #{cnn_forward.1} parent=1 // loop_footer_branch
      %17 = sbr.rel target = $region3
    $region8: #{cnn_forward.1} parent=1 // loop_exit
      _
    %3640 = vsyncpa [#allocation3], 1
    %s3641 = scalar_lea.sflag [#allocation3], 1
    %3642 = vsyncpa %s3641, 1

</llo_original>
